<compile_context>
chip_gen: v5e
topology: v5e:2x2
jax: 0.10.0
libtpu: 0.0.40
codegen_flags: <defaults>
</compile_context>

<pallas_src>
import numpy as np

import jax
import jax.numpy as jnp
from jax.experimental import pallas as pl
from jax.experimental.pallas import tpu as pltpu


# ----------------------------------------------------------------------------
# Model dimensions
# ----------------------------------------------------------------------------
B_DEF, C_IN, H_IN, W_IN, LATENT = 2, 4, 16, 16, 32
C1, C2, C3, C4 = 8, 16, 8, 4          # channel widths of the four convs
FLAT = 4 * 4 * C2                      # 256 bottleneck features
# By construction every per-row lane chunk (cin * width) below is exactly 64 lanes:
#   conv1: 4*16, conv2: 8*8, conv3: 16*4 (coarse), conv4: 8*8 (coarse).


# ----------------------------------------------------------------------------
# Host-side lowering of 3x3 convs to per-row-window matmul ("Toeplitz") weights
# ----------------------------------------------------------------------------
def _lower_conv(w, cin, cout, w_in, w_out, stride, in_lane, out_lane):
    """Lower a 3x3 conv (pad=1, stride=s) to a (3*cin*w_in, w_out*cout) matrix.

    In the kernel, output row i is computed from a patch vector consisting of the
    3 input rows s*i+di (di=0..2; zero row for H padding), each laid out as
    in_lane(ci, w) within a 64-lane chunk.  Multiplying by this matrix gives the
    full output row laid out as out_lane(j, co).  W padding is folded in by
    omission (pad columns simply never appear in the patch).
    """
    wl = np.zeros((3 * cin * w_in, w_out * cout), np.float32)
    for di in range(3):
        for ci in range(cin):
            for w_ in range(w_in):
                row = di * cin * w_in + in_lane(ci, w_)
                for j in range(w_out):
                    dj = w_ + 1 - stride * j          # padded column = w_ + 1
                    if 0 <= dj <= 2:
                        for co in range(cout):
                            wl[row, out_lane(j, co)] += w[di, dj, ci, co]
    return wl


def _lower_conv_up2(w, cin, cout, w_coarse, w_out, in_lane, out_lane):
    """Same, but the conv input is the 2x nearest-neighbour W-upsampling of a
    w_coarse-wide row (H upsampling is handled by the in-kernel row gather)."""
    wl = np.zeros((3 * cin * w_coarse, w_out * cout), np.float32)
    for di in range(3):
        for ci in range(cin):
            for wc in range(w_coarse):
                row = di * cin * w_coarse + in_lane(ci, wc)
                for u in (2 * wc + 1, 2 * wc + 2):    # padded upsampled cols fed by wc
                    for j in range(w_out):
                        dj = u - j
                        if 0 <= dj <= 2:
                            for co in range(cout):
                                wl[row, out_lane(j, co)] += w[di, dj, ci, co]
    return wl


def _lower_bias(b, w_out, cout, out_lane):
    br = np.zeros((1, w_out * cout), np.float32)
    for j in range(w_out):
        for co in range(cout):
            br[0, out_lane(j, co)] = b[co]
    return br


def init_params(key):
    """Deterministic synthetic parameters, pre-lowered (host-side, once) to the
    matmul layouts the fused kernel consumes."""
    ks = jax.random.split(key, 7)

    def conv_w(k, cin, cout):
        kw, kb = jax.random.split(k)
        s = 1.0 / np.sqrt(9.0 * cin)
        w = np.asarray(jax.random.normal(kw, (3, 3, cin, cout), jnp.float32)) * s
        b = np.asarray(jax.random.normal(kb, (cout,), jnp.float32)) * 0.01
        return w, b

    def dense_w(k, fin, fout):
        kw, kb = jax.random.split(k)
        s = 1.0 / np.sqrt(float(fin))
        w = np.asarray(jax.random.normal(kw, (fin, fout), jnp.float32)) * s
        b = np.asarray(jax.random.normal(kb, (fout,), jnp.float32)) * 0.01
        return w, b

    w1, b1 = conv_w(ks[0], C_IN, C1)
    w2, b2 = conv_w(ks[1], C1, C2)
    wm, bm = dense_w(ks[2], FLAT, LATENT)
    wv, bv = dense_w(ks[3], FLAT, LATENT)
    wd, bd = dense_w(ks[4], LATENT, FLAT)
    w3, b3 = conv_w(ks[5], C2, C3)
    w4, b4 = conv_w(ks[6], C3, C4)

    # Lane-order conventions used inside the kernel:
    in1 = lambda ci, w: ci * 16 + w        # conv1 input rows are filled per NCHW channel
    out1 = lambda j, co: j * C1 + co       # (w, c)
    in2 = lambda ci, w: w * C1 + ci        # == out1 layout
    out2 = lambda j, co: j * C2 + co       # (w, c)  -> NHWC flatten i*64 + j*16 + co
    in3 = lambda ci, w: w * C2 + ci        # decode-FC rows interpreted NHWC
    out3 = lambda j, co: j * C3 + co
    in4 = lambda ci, w: w * C3 + ci        # == out3 layout
    out4 = lambda j, co: co * 16 + j       # (c, w)  -> direct NCHW store

    lp = dict(
        wl1=_lower_conv(w1, C_IN, C1, 16, 8, 2, in1, out1),
        b1=_lower_bias(b1, 8, C1, out1),
        wl2=_lower_conv(w2, C1, C2, 8, 4, 2, in2, out2),
        b2=_lower_bias(b2, 4, C2, out2),
        wmv=np.concatenate([wm, wv], axis=1),          # (256, 64): mean | logvar
        bmv=np.concatenate([bm, bv])[None, :],         # (1, 64)
        wd=wd,                                         # (32, 256)
        bd=bd[None, :],                                # (1, 256)
        wl3=_lower_conv_up2(w3, C2, C3, 4, 8, in3, out3),
        b3=_lower_bias(b3, 8, C3, out3),
        wl4=_lower_conv_up2(w4, C3, C4, 8, 16, in4, out4),
        b4=_lower_bias(b4, 16, C4, out4),
    )
    return {k: jnp.asarray(v, jnp.float32) for k, v in lp.items()}


# ----------------------------------------------------------------------------
# Row-gather index helpers (evaluated at trace time with Python ints)
# ----------------------------------------------------------------------------
def _src_enc(r, h_in):
    # encoder scratch: row 0 = zero padding row, rows 1..h_in = real rows
    return r if 1 <= r <= h_in else 0


def _src_dec(r, h_coarse):
    # decoder scratch: row 0 = zero padding, rows 1..h_coarse = coarse rows;
    # padded 2x-upsampled row r maps to coarse row (r-1)//2 (nearest neighbour).
    return 0 if (r <= 0 or r >= 2 * h_coarse + 1) else 1 + (r - 1) // 2


# ----------------------------------------------------------------------------
# The fused kernel (one grid step = one batch element)
# ----------------------------------------------------------------------------
def _vae_kernel(x_ref, eps_ref,
                wl1_ref, b1_ref, wl2_ref, b2_ref,
                wmv_ref, bmv_ref, wd_ref, bd_ref,
                wl3_ref, b3_ref, wl4_ref, b4_ref,
                mean_ref, logvar_ref, out_ref,
                a0, a1, a2, a3, pbuf):
    zrow = jnp.zeros((1, 64), jnp.float32)

    def conv(src_ref, n_out_rows, src_row, wl_ref, b_ref, act):
        # Gather the 3-row windows (im2col) into pbuf: one pbuf row per output row,
        # three 64-lane chunks per row.  Everything stays in VMEM.
        for i in range(n_out_rows):
            for di in range(3):
                pbuf[pl.ds(i, 1), pl.ds(di * 64, 64)] = (
                    src_ref[pl.ds(src_row(i, di), 1), :])
        acc = jnp.dot(pbuf[pl.ds(0, n_out_rows), :], wl_ref[...],
                      preferred_element_type=jnp.float32)
        acc = acc + b_ref[...]
        if act == "relu":
            return jnp.maximum(acc, 0.0)
        # sigmoid(x) == 0.5*(1 + tanh(x/2)): numerically stable, single EUP op
        return 0.5 * (jnp.tanh(0.5 * acc) + 1.0)

    # ---------------- AEEncoder ----------------
    # conv1 input: NCHW tile -> a0 rows 1..16, lane order (c, w)
    a0[pl.ds(0, 1), :] = zrow
    for c in range(C_IN):
        a0[pl.ds(1, H_IN), pl.ds(c * W_IN, W_IN)] = x_ref[0, c, :, :]
    r1 = conv(a0, 8, lambda i, di: _src_enc(2 * i + di, H_IN),
              wl1_ref, b1_ref, "relu")                       # (8, 64)  8x8 x C1

    a1[pl.ds(0, 1), :] = zrow
    a1[pl.ds(1, 8), :] = r1
    r2 = conv(a1, 4, lambda i, di: _src_enc(2 * i + di, 8),
              wl2_ref, b2_ref, "relu")                       # (4, 64)  4x4 x C2

    # ---------------- VAEBottleNeck ----------------
    flat = jnp.concatenate([r2[i:i + 1, :] for i in range(4)], axis=1)   # (1, 256)
    mv = jnp.dot(flat, wmv_ref[...], preferred_element_type=jnp.float32) + bmv_ref[...]
    mean = mv[:, :LATENT]
    logvar = mv[:, LATENT:2 * LATENT]
    z = mean + jnp.exp(0.5 * logvar) * eps_ref[0]                        # (1, 32)
    d = jnp.dot(z, wd_ref[...], preferred_element_type=jnp.float32) + bd_ref[...]
    d = jnp.maximum(d, 0.0)                                              # (1, 256)
    mean_ref[0] = mean
    logvar_ref[0] = logvar
    # (the PyTorch forward's print(out.shape) is intentionally omitted)

    # ---------------- AEDecoder ----------------
    a2[pl.ds(0, 1), :] = zrow
    for h in range(4):
        a2[pl.ds(1 + h, 1), :] = d[:, h * 64:(h + 1) * 64]   # coarse 4x4 x C2 rows
    r3 = conv(a2, 8, lambda i, di: _src_dec(i + di, 4),
              wl3_ref, b3_ref, "relu")                       # (8, 64)  8x8 x C3

    a3[pl.ds(0, 1), :] = zrow
    a3[pl.ds(1, 8), :] = r3
    r4 = conv(a3, 16, lambda i, di: _src_dec(i + di, 8),
              wl4_ref, b4_ref, "sigmoid")                    # (16, 64) 16x16 x C4

    # fold NHWC->NCHW: r4 rows are output rows, lanes are (c, w)
    for co in range(C4):
        out_ref[0, co, :, :] = r4[:, co * 16:(co + 1) * 16]


# ----------------------------------------------------------------------------
# Wrapper
# ----------------------------------------------------------------------------
def vae_forward(params, x, eps):
    """params: dict of pre-lowered weights; x: (B,4,16,16) NCHW f32; eps: (B,32) f32."""
    B = x.shape[0]
    eps3 = eps.reshape(B, 1, LATENT)

    def full(a):
        return pl.BlockSpec(a.shape, lambda b: (0,) * a.ndim)

    w_order = ("wl1", "b1", "wl2", "b2", "wmv", "bmv", "wd", "bd",
               "wl3", "b3", "wl4", "b4")
    w_args = [params[k] for k in w_order]

    grid_spec = pltpu.PrefetchScalarGridSpec(
        num_scalar_prefetch=0,
        grid=(B,),
        in_specs=[
            pl.BlockSpec((1, C_IN, H_IN, W_IN), lambda b: (b, 0, 0, 0)),
            pl.BlockSpec((1, 1, LATENT), lambda b: (b, 0, 0)),
            *[full(a) for a in w_args],
        ],
        out_specs=[
            pl.BlockSpec((1, 1, LATENT), lambda b: (b, 0, 0)),
            pl.BlockSpec((1, 1, LATENT), lambda b: (b, 0, 0)),
            pl.BlockSpec((1, C4, H_IN, W_IN), lambda b: (b, 0, 0, 0)),
        ],
        scratch_shapes=[
            pltpu.VMEM((17, 64), jnp.float32),   # conv1 input rows (+ zero pad row)
            pltpu.VMEM((9, 64), jnp.float32),    # conv2 input rows
            pltpu.VMEM((5, 64), jnp.float32),    # conv3 coarse input rows
            pltpu.VMEM((9, 64), jnp.float32),    # conv4 coarse input rows
            pltpu.VMEM((16, 192), jnp.float32),  # shared in-VMEM im2col patch buffer
        ],
    )
    mean3, logvar3, out = pl.pallas_call(
        _vae_kernel,
        out_shape=(
            jax.ShapeDtypeStruct((B, 1, LATENT), jnp.float32),
            jax.ShapeDtypeStruct((B, 1, LATENT), jnp.float32),
            jax.ShapeDtypeStruct((B, C4, H_IN, W_IN), jnp.float32),
        ),
        grid_spec=grid_spec,
        compiler_params=pltpu.CompilerParams(
            dimension_semantics=("parallel",),   # batch across TensorCores on v7x
        ),
    )(x, eps3, *w_args)
    return mean3.reshape(B, LATENT), logvar3.reshape(B, LATENT), out


if __name__ == "__main__":
    key = jax.random.PRNGKey(0)
    k_x, k_p, k_eps = jax.random.split(key, 3)

    x = jax.random.normal(k_x, (B_DEF, C_IN, H_IN, W_IN), jnp.float32)
    eps = jax.random.normal(k_eps, (B_DEF, LATENT), jnp.float32)
    params = init_params(k_p)

    fwd = jax.jit(vae_forward)
    mean, logvar, out = fwd(params, x, eps)
    jax.block_until_ready((mean, logvar, out))

    assert mean.shape == (B_DEF, LATENT)
    assert logvar.shape == (B_DEF, LATENT)
    assert out.shape == (B_DEF, C_IN, H_IN, W_IN)
    assert bool(jnp.all(jnp.isfinite(out)))
    assert bool(jnp.all((out >= 0.0) & (out <= 1.0)))   # sigmoid output range
    print("KERNEL_OK")
</pallas_src>

<mosaic_0001>
module attributes {stable_mosaic.version = 11 : i64} {
  func.func @_vae_kernel(%arg0: i32, %arg1: memref<1x4x16x16xf32, #tpu.memory_space<vmem>>, %arg2: memref<1x1x32xf32, #tpu.memory_space<vmem>>, %arg3: memref<192x64xf32, #tpu.memory_space<vmem>>, %arg4: memref<1x64xf32, #tpu.memory_space<vmem>>, %arg5: memref<192x64xf32, #tpu.memory_space<vmem>>, %arg6: memref<1x64xf32, #tpu.memory_space<vmem>>, %arg7: memref<256x64xf32, #tpu.memory_space<vmem>>, %arg8: memref<1x64xf32, #tpu.memory_space<vmem>>, %arg9: memref<32x256xf32, #tpu.memory_space<vmem>>, %arg10: memref<1x256xf32, #tpu.memory_space<vmem>>, %arg11: memref<192x64xf32, #tpu.memory_space<vmem>>, %arg12: memref<1x64xf32, #tpu.memory_space<vmem>>, %arg13: memref<192x64xf32, #tpu.memory_space<vmem>>, %arg14: memref<1x64xf32, #tpu.memory_space<vmem>>, %arg15: memref<1x1x32xf32, #tpu.memory_space<vmem>>, %arg16: memref<1x1x32xf32, #tpu.memory_space<vmem>>, %arg17: memref<1x4x16x16xf32, #tpu.memory_space<vmem>>, %arg18: memref<17x64xf32, #tpu.memory_space<vmem>>, %arg19: memref<9x64xf32, #tpu.memory_space<vmem>>, %arg20: memref<5x64xf32, #tpu.memory_space<vmem>>, %arg21: memref<9x64xf32, #tpu.memory_space<vmem>>, %arg22: memref<16x192xf32, #tpu.memory_space<vmem>>) attributes {dimension_semantics = [#tpu.dimension_semantics<parallel>], iteration_bounds = array<i64: 2>, scalar_prefetch = 0 : i64, scratch_operands = 5 : i64, tpu.core_type = #tpu.core_type<tc>, window_params = [{transform_indices = @transform_0, window_bounds = array<i64: 1, 4, 16, 16>}, {transform_indices = @transform_1, window_bounds = array<i64: 1, 1, 32>}, {pipeline_mode = #tpu.pipeline_mode<synchronous>, transform_indices = @transform_2, window_bounds = array<i64: 192, 64>}, {pipeline_mode = #tpu.pipeline_mode<synchronous>, transform_indices = @transform_3, window_bounds = array<i64: 1, 64>}, {pipeline_mode = #tpu.pipeline_mode<synchronous>, transform_indices = @transform_4, window_bounds = array<i64: 192, 64>}, {pipeline_mode = #tpu.pipeline_mode<synchronous>, transform_indices = @transform_5, window_bounds = array<i64: 1, 64>}, {pipeline_mode = #tpu.pipeline_mode<synchronous>, transform_indices = @transform_6, window_bounds = array<i64: 256, 64>}, {pipeline_mode = #tpu.pipeline_mode<synchronous>, transform_indices = @transform_7, window_bounds = array<i64: 1, 64>}, {pipeline_mode = #tpu.pipeline_mode<synchronous>, transform_indices = @transform_8, window_bounds = array<i64: 32, 256>}, {pipeline_mode = #tpu.pipeline_mode<synchronous>, transform_indices = @transform_9, window_bounds = array<i64: 1, 256>}, {pipeline_mode = #tpu.pipeline_mode<synchronous>, transform_indices = @transform_10, window_bounds = array<i64: 192, 64>}, {pipeline_mode = #tpu.pipeline_mode<synchronous>, transform_indices = @transform_11, window_bounds = array<i64: 1, 64>}, {pipeline_mode = #tpu.pipeline_mode<synchronous>, transform_indices = @transform_12, window_bounds = array<i64: 192, 64>}, {pipeline_mode = #tpu.pipeline_mode<synchronous>, transform_indices = @transform_13, window_bounds = array<i64: 1, 64>}, {transform_indices = @transform_14, window_bounds = array<i64: 1, 1, 32>}, {transform_indices = @transform_15, window_bounds = array<i64: 1, 1, 32>}, {transform_indices = @transform_16, window_bounds = array<i64: 1, 4, 16, 16>}]} {
    %cst = arith.constant 0.000000e+00 : f32
    %0 = vector.broadcast %cst : f32 to vector<1x64xf32>
    %c0 = arith.constant 0 : index
    %c0_0 = arith.constant 0 : index
    %1 = vector.load %arg18[%c0, %c0_0] : memref<17x64xf32, #tpu.memory_space<vmem>>, vector<1x64xf32>
    tpu.vector_store %arg18[%c0, %c0_0], %0 {strides = array<i32>} : memref<17x64xf32, #tpu.memory_space<vmem>>, vector<1x64xf32>,
    %c0_1 = arith.constant 0 : index
    %c0_2 = arith.constant 0 : index
    %c0_3 = arith.constant 0 : index
    %c0_4 = arith.constant 0 : index
    %2 = vector.load %arg1[%c0_1, %c0_2, %c0_3, %c0_4] : memref<1x4x16x16xf32, #tpu.memory_space<vmem>>, vector<1x1x16x16xf32>
    %3 = vector.shape_cast %2 : vector<1x1x16x16xf32> to vector<16x16xf32>
    %c1 = arith.constant 1 : index
    %c0_5 = arith.constant 0 : index
    %4 = vector.load %arg18[%c1, %c0_5] : memref<17x64xf32, #tpu.memory_space<vmem>>, vector<16x16xf32>
    tpu.vector_store %arg18[%c1, %c0_5], %3 {strides = array<i32>} : memref<17x64xf32, #tpu.memory_space<vmem>>, vector<16x16xf32>,
    %c0_6 = arith.constant 0 : index
    %c1_7 = arith.constant 1 : index
    %c0_8 = arith.constant 0 : index
    %c0_9 = arith.constant 0 : index
    %5 = vector.load %arg1[%c0_6, %c1_7, %c0_8, %c0_9] : memref<1x4x16x16xf32, #tpu.memory_space<vmem>>, vector<1x1x16x16xf32>
    %6 = vector.shape_cast %5 : vector<1x1x16x16xf32> to vector<16x16xf32>
    %c1_10 = arith.constant 1 : index
    %c16 = arith.constant 16 : index
    %7 = vector.load %arg18[%c1_10, %c16] : memref<17x64xf32, #tpu.memory_space<vmem>>, vector<16x16xf32>
    tpu.vector_store %arg18[%c1_10, %c16], %6 {strides = array<i32>} : memref<17x64xf32, #tpu.memory_space<vmem>>, vector<16x16xf32>,
    %c0_11 = arith.constant 0 : index
    %c2 = arith.constant 2 : index
    %c0_12 = arith.constant 0 : index
    %c0_13 = arith.constant 0 : index
    %8 = vector.load %arg1[%c0_11, %c2, %c0_12, %c0_13] : memref<1x4x16x16xf32, #tpu.memory_space<vmem>>, vector<1x1x16x16xf32>
    %9 = vector.shape_cast %8 : vector<1x1x16x16xf32> to vector<16x16xf32>
    %c1_14 = arith.constant 1 : index
    %c32 = arith.constant 32 : index
    %10 = vector.load %arg18[%c1_14, %c32] : memref<17x64xf32, #tpu.memory_space<vmem>>, vector<16x16xf32>
    tpu.vector_store %arg18[%c1_14, %c32], %9 {strides = array<i32>} : memref<17x64xf32, #tpu.memory_space<vmem>>, vector<16x16xf32>,
    %c0_15 = arith.constant 0 : index
    %c3 = arith.constant 3 : index
    %c0_16 = arith.constant 0 : index
    %c0_17 = arith.constant 0 : index
    %11 = vector.load %arg1[%c0_15, %c3, %c0_16, %c0_17] : memref<1x4x16x16xf32, #tpu.memory_space<vmem>>, vector<1x1x16x16xf32>
    %12 = vector.shape_cast %11 : vector<1x1x16x16xf32> to vector<16x16xf32>
    %c1_18 = arith.constant 1 : index
    %c48 = arith.constant 48 : index
    %13 = vector.load %arg18[%c1_18, %c48] : memref<17x64xf32, #tpu.memory_space<vmem>>, vector<16x16xf32>
    tpu.vector_store %arg18[%c1_18, %c48], %12 {strides = array<i32>} : memref<17x64xf32, #tpu.memory_space<vmem>>, vector<16x16xf32>,
    %c0_19 = arith.constant 0 : index
    %c0_20 = arith.constant 0 : index
    %14 = vector.load %arg18[%c0_19, %c0_20] : memref<17x64xf32, #tpu.memory_space<vmem>>, vector<1x64xf32>
    %c0_21 = arith.constant 0 : index
    %c0_22 = arith.constant 0 : index
    %15 = vector.load %arg22[%c0_21, %c0_22] : memref<16x192xf32, #tpu.memory_space<vmem>>, vector<1x64xf32>
    tpu.vector_store %arg22[%c0_21, %c0_22], %14 {strides = array<i32>} : memref<16x192xf32, #tpu.memory_space<vmem>>, vector<1x64xf32>,
    %c1_23 = arith.constant 1 : index
    %c0_24 = arith.constant 0 : index
    %16 = vector.load %arg18[%c1_23, %c0_24] : memref<17x64xf32, #tpu.memory_space<vmem>>, vector<1x64xf32>
    %c0_25 = arith.constant 0 : index
    %c64 = arith.constant 64 : index
    %17 = vector.load %arg22[%c0_25, %c64] : memref<16x192xf32, #tpu.memory_space<vmem>>, vector<1x64xf32>
    tpu.vector_store %arg22[%c0_25, %c64], %16 {strides = array<i32>} : memref<16x192xf32, #tpu.memory_space<vmem>>, vector<1x64xf32>,
    %c2_26 = arith.constant 2 : index
    %c0_27 = arith.constant 0 : index
    %18 = vector.load %arg18[%c2_26, %c0_27] : memref<17x64xf32, #tpu.memory_space<vmem>>, vector<1x64xf32>
    %c0_28 = arith.constant 0 : index
    %c128 = arith.constant 128 : index
    %19 = vector.load %arg22[%c0_28, %c128] : memref<16x192xf32, #tpu.memory_space<vmem>>, vector<1x64xf32>
    tpu.vector_store %arg22[%c0_28, %c128], %18 {strides = array<i32>} : memref<16x192xf32, #tpu.memory_space<vmem>>, vector<1x64xf32>,
    %c2_29 = arith.constant 2 : index
    %c0_30 = arith.constant 0 : index
    %20 = vector.load %arg18[%c2_29, %c0_30] : memref<17x64xf32, #tpu.memory_space<vmem>>, vector<1x64xf32>
    %c1_31 = arith.constant 1 : index
    %c0_32 = arith.constant 0 : index
    %21 = vector.load %arg22[%c1_31, %c0_32] : memref<16x192xf32, #tpu.memory_space<vmem>>, vector<1x64xf32>
    tpu.vector_store %arg22[%c1_31, %c0_32], %20 {strides = array<i32>} : memref<16x192xf32, #tpu.memory_space<vmem>>, vector<1x64xf32>,
    %c3_33 = arith.constant 3 : index
    %c0_34 = arith.constant 0 : index
    %22 = vector.load %arg18[%c3_33, %c0_34] : memref<17x64xf32, #tpu.memory_space<vmem>>, vector<1x64xf32>
    %c1_35 = arith.constant 1 : index
    %c64_36 = arith.constant 64 : index
    %23 = vector.load %arg22[%c1_35, %c64_36] : memref<16x192xf32, #tpu.memory_space<vmem>>, vector<1x64xf32>
    tpu.vector_store %arg22[%c1_35, %c64_36], %22 {strides = array<i32>} : memref<16x192xf32, #tpu.memory_space<vmem>>, vector<1x64xf32>,
    %c4 = arith.constant 4 : index
    %c0_37 = arith.constant 0 : index
    %24 = vector.load %arg18[%c4, %c0_37] : memref<17x64xf32, #tpu.memory_space<vmem>>, vector<1x64xf32>
    %c1_38 = arith.constant 1 : index
    %c128_39 = arith.constant 128 : index
    %25 = vector.load %arg22[%c1_38, %c128_39] : memref<16x192xf32, #tpu.memory_space<vmem>>, vector<1x64xf32>
    tpu.vector_store %arg22[%c1_38, %c128_39], %24 {strides = array<i32>} : memref<16x192xf32, #tpu.memory_space<vmem>>, vector<1x64xf32>,
    %c4_40 = arith.constant 4 : index
    %c0_41 = arith.constant 0 : index
    %26 = vector.load %arg18[%c4_40, %c0_41] : memref<17x64xf32, #tpu.memory_space<vmem>>, vector<1x64xf32>
    %c2_42 = arith.constant 2 : index
    %c0_43 = arith.constant 0 : index
    %27 = vector.load %arg22[%c2_42, %c0_43] : memref<16x192xf32, #tpu.memory_space<vmem>>, vector<1x64xf32>
    tpu.vector_store %arg22[%c2_42, %c0_43], %26 {strides = array<i32>} : memref<16x192xf32, #tpu.memory_space<vmem>>, vector<1x64xf32>,
    %c5 = arith.constant 5 : index
    %c0_44 = arith.constant 0 : index
    %28 = vector.load %arg18[%c5, %c0_44] : memref<17x64xf32, #tpu.memory_space<vmem>>, vector<1x64xf32>
    %c2_45 = arith.constant 2 : index
    %c64_46 = arith.constant 64 : index
    %29 = vector.load %arg22[%c2_45, %c64_46] : memref<16x192xf32, #tpu.memory_space<vmem>>, vector<1x64xf32>
    tpu.vector_store %arg22[%c2_45, %c64_46], %28 {strides = array<i32>} : memref<16x192xf32, #tpu.memory_space<vmem>>, vector<1x64xf32>,
    %c6 = arith.constant 6 : index
    %c0_47 = arith.constant 0 : index
    %30 = vector.load %arg18[%c6, %c0_47] : memref<17x64xf32, #tpu.memory_space<vmem>>, vector<1x64xf32>
    %c2_48 = arith.constant 2 : index
    %c128_49 = arith.constant 128 : index
    %31 = vector.load %arg22[%c2_48, %c128_49] : memref<16x192xf32, #tpu.memory_space<vmem>>, vector<1x64xf32>
    tpu.vector_store %arg22[%c2_48, %c128_49], %30 {strides = array<i32>} : memref<16x192xf32, #tpu.memory_space<vmem>>, vector<1x64xf32>,
    %c6_50 = arith.constant 6 : index
    %c0_51 = arith.constant 0 : index
    %32 = vector.load %arg18[%c6_50, %c0_51] : memref<17x64xf32, #tpu.memory_space<vmem>>, vector<1x64xf32>
    %c3_52 = arith.constant 3 : index
    %c0_53 = arith.constant 0 : index
    %33 = vector.load %arg22[%c3_52, %c0_53] : memref<16x192xf32, #tpu.memory_space<vmem>>, vector<1x64xf32>
    tpu.vector_store %arg22[%c3_52, %c0_53], %32 {strides = array<i32>} : memref<16x192xf32, #tpu.memory_space<vmem>>, vector<1x64xf32>,
    %c7 = arith.constant 7 : index
    %c0_54 = arith.constant 0 : index
    %34 = vector.load %arg18[%c7, %c0_54] : memref<17x64xf32, #tpu.memory_space<vmem>>, vector<1x64xf32>
    %c3_55 = arith.constant 3 : index
    %c64_56 = arith.constant 64 : index
    %35 = vector.load %arg22[%c3_55, %c64_56] : memref<16x192xf32, #tpu.memory_space<vmem>>, vector<1x64xf32>
    tpu.vector_store %arg22[%c3_55, %c64_56], %34 {strides = array<i32>} : memref<16x192xf32, #tpu.memory_space<vmem>>, vector<1x64xf32>,
    %c8 = arith.constant 8 : index
    %c0_57 = arith.constant 0 : index
    %36 = vector.load %arg18[%c8, %c0_57] : memref<17x64xf32, #tpu.memory_space<vmem>>, vector<1x64xf32>
    %c3_58 = arith.constant 3 : index
    %c128_59 = arith.constant 128 : index
    %37 = vector.load %arg22[%c3_58, %c128_59] : memref<16x192xf32, #tpu.memory_space<vmem>>, vector<1x64xf32>
    tpu.vector_store %arg22[%c3_58, %c128_59], %36 {strides = array<i32>} : memref<16x192xf32, #tpu.memory_space<vmem>>, vector<1x64xf32>,
    %c8_60 = arith.constant 8 : index
    %c0_61 = arith.constant 0 : index
    %38 = vector.load %arg18[%c8_60, %c0_61] : memref<17x64xf32, #tpu.memory_space<vmem>>, vector<1x64xf32>
    %c4_62 = arith.constant 4 : index
    %c0_63 = arith.constant 0 : index
    %39 = vector.load %arg22[%c4_62, %c0_63] : memref<16x192xf32, #tpu.memory_space<vmem>>, vector<1x64xf32>
    tpu.vector_store %arg22[%c4_62, %c0_63], %38 {strides = array<i32>} : memref<16x192xf32, #tpu.memory_space<vmem>>, vector<1x64xf32>,
    %c9 = arith.constant 9 : index
    %c0_64 = arith.constant 0 : index
    %40 = vector.load %arg18[%c9, %c0_64] : memref<17x64xf32, #tpu.memory_space<vmem>>, vector<1x64xf32>
    %c4_65 = arith.constant 4 : index
    %c64_66 = arith.constant 64 : index
    %41 = vector.load %arg22[%c4_65, %c64_66] : memref<16x192xf32, #tpu.memory_space<vmem>>, vector<1x64xf32>
    tpu.vector_store %arg22[%c4_65, %c64_66], %40 {strides = array<i32>} : memref<16x192xf32, #tpu.memory_space<vmem>>, vector<1x64xf32>,
    %c10 = arith.constant 10 : index
    %c0_67 = arith.constant 0 : index
    %42 = vector.load %arg18[%c10, %c0_67] : memref<17x64xf32, #tpu.memory_space<vmem>>, vector<1x64xf32>
    %c4_68 = arith.constant 4 : index
    %c128_69 = arith.constant 128 : index
    %43 = vector.load %arg22[%c4_68, %c128_69] : memref<16x192xf32, #tpu.memory_space<vmem>>, vector<1x64xf32>
    tpu.vector_store %arg22[%c4_68, %c128_69], %42 {strides = array<i32>} : memref<16x192xf32, #tpu.memory_space<vmem>>, vector<1x64xf32>,
    %c10_70 = arith.constant 10 : index
    %c0_71 = arith.constant 0 : index
    %44 = vector.load %arg18[%c10_70, %c0_71] : memref<17x64xf32, #tpu.memory_space<vmem>>, vector<1x64xf32>
    %c5_72 = arith.constant 5 : index
    %c0_73 = arith.constant 0 : index
    %45 = vector.load %arg22[%c5_72, %c0_73] : memref<16x192xf32, #tpu.memory_space<vmem>>, vector<1x64xf32>
    tpu.vector_store %arg22[%c5_72, %c0_73], %44 {strides = array<i32>} : memref<16x192xf32, #tpu.memory_space<vmem>>, vector<1x64xf32>,
    %c11 = arith.constant 11 : index
    %c0_74 = arith.constant 0 : index
    %46 = vector.load %arg18[%c11, %c0_74] : memref<17x64xf32, #tpu.memory_space<vmem>>, vector<1x64xf32>
    %c5_75 = arith.constant 5 : index
    %c64_76 = arith.constant 64 : index
    %47 = vector.load %arg22[%c5_75, %c64_76] : memref<16x192xf32, #tpu.memory_space<vmem>>, vector<1x64xf32>
    tpu.vector_store %arg22[%c5_75, %c64_76], %46 {strides = array<i32>} : memref<16x192xf32, #tpu.memory_space<vmem>>, vector<1x64xf32>,
    %c12 = arith.constant 12 : index
    %c0_77 = arith.constant 0 : index
    %48 = vector.load %arg18[%c12, %c0_77] : memref<17x64xf32, #tpu.memory_space<vmem>>, vector<1x64xf32>
    %c5_78 = arith.constant 5 : index
    %c128_79 = arith.constant 128 : index
    %49 = vector.load %arg22[%c5_78, %c128_79] : memref<16x192xf32, #tpu.memory_space<vmem>>, vector<1x64xf32>
    tpu.vector_store %arg22[%c5_78, %c128_79], %48 {strides = array<i32>} : memref<16x192xf32, #tpu.memory_space<vmem>>, vector<1x64xf32>,
    %c12_80 = arith.constant 12 : index
    %c0_81 = arith.constant 0 : index
    %50 = vector.load %arg18[%c12_80, %c0_81] : memref<17x64xf32, #tpu.memory_space<vmem>>, vector<1x64xf32>
    %c6_82 = arith.constant 6 : index
    %c0_83 = arith.constant 0 : index
    %51 = vector.load %arg22[%c6_82, %c0_83] : memref<16x192xf32, #tpu.memory_space<vmem>>, vector<1x64xf32>
    tpu.vector_store %arg22[%c6_82, %c0_83], %50 {strides = array<i32>} : memref<16x192xf32, #tpu.memory_space<vmem>>, vector<1x64xf32>,
    %c13 = arith.constant 13 : index
    %c0_84 = arith.constant 0 : index
    %52 = vector.load %arg18[%c13, %c0_84] : memref<17x64xf32, #tpu.memory_space<vmem>>, vector<1x64xf32>
    %c6_85 = arith.constant 6 : index
    %c64_86 = arith.constant 64 : index
    %53 = vector.load %arg22[%c6_85, %c64_86] : memref<16x192xf32, #tpu.memory_space<vmem>>, vector<1x64xf32>
    tpu.vector_store %arg22[%c6_85, %c64_86], %52 {strides = array<i32>} : memref<16x192xf32, #tpu.memory_space<vmem>>, vector<1x64xf32>,
    %c14 = arith.constant 14 : index
    %c0_87 = arith.constant 0 : index
    %54 = vector.load %arg18[%c14, %c0_87] : memref<17x64xf32, #tpu.memory_space<vmem>>, vector<1x64xf32>
    %c6_88 = arith.constant 6 : index
    %c128_89 = arith.constant 128 : index
    %55 = vector.load %arg22[%c6_88, %c128_89] : memref<16x192xf32, #tpu.memory_space<vmem>>, vector<1x64xf32>
    tpu.vector_store %arg22[%c6_88, %c128_89], %54 {strides = array<i32>} : memref<16x192xf32, #tpu.memory_space<vmem>>, vector<1x64xf32>,
    %c14_90 = arith.constant 14 : index
    %c0_91 = arith.constant 0 : index
    %56 = vector.load %arg18[%c14_90, %c0_91] : memref<17x64xf32, #tpu.memory_space<vmem>>, vector<1x64xf32>
    %c7_92 = arith.constant 7 : index
    %c0_93 = arith.constant 0 : index
    %57 = vector.load %arg22[%c7_92, %c0_93] : memref<16x192xf32, #tpu.memory_space<vmem>>, vector<1x64xf32>
    tpu.vector_store %arg22[%c7_92, %c0_93], %56 {strides = array<i32>} : memref<16x192xf32, #tpu.memory_space<vmem>>, vector<1x64xf32>,
    %c15 = arith.constant 15 : index
    %c0_94 = arith.constant 0 : index
    %58 = vector.load %arg18[%c15, %c0_94] : memref<17x64xf32, #tpu.memory_space<vmem>>, vector<1x64xf32>
    %c7_95 = arith.constant 7 : index
    %c64_96 = arith.constant 64 : index
    %59 = vector.load %arg22[%c7_95, %c64_96] : memref<16x192xf32, #tpu.memory_space<vmem>>, vector<1x64xf32>
    tpu.vector_store %arg22[%c7_95, %c64_96], %58 {strides = array<i32>} : memref<16x192xf32, #tpu.memory_space<vmem>>, vector<1x64xf32>,
    %c16_97 = arith.constant 16 : index
    %c0_98 = arith.constant 0 : index
    %60 = vector.load %arg18[%c16_97, %c0_98] : memref<17x64xf32, #tpu.memory_space<vmem>>, vector<1x64xf32>
    %c7_99 = arith.constant 7 : index
    %c128_100 = arith.constant 128 : index
    %61 = vector.load %arg22[%c7_99, %c128_100] : memref<16x192xf32, #tpu.memory_space<vmem>>, vector<1x64xf32>
    tpu.vector_store %arg22[%c7_99, %c128_100], %60 {strides = array<i32>} : memref<16x192xf32, #tpu.memory_space<vmem>>, vector<1x64xf32>,
    %c0_101 = arith.constant 0 : index
    %c0_102 = arith.constant 0 : index
    %62 = vector.load %arg22[%c0_101, %c0_102] : memref<16x192xf32, #tpu.memory_space<vmem>>, vector<8x192xf32>
    %c0_103 = arith.constant 0 : index
    %c0_104 = arith.constant 0 : index
    %63 = vector.load %arg3[%c0_103, %c0_104] : memref<192x64xf32, #tpu.memory_space<vmem>>, vector<192x64xf32>
    %cst_105 = arith.constant dense<0.000000e+00> : vector<8x64xf32>
    %64 = tpu.matmul %62, %63, %cst_105 {dimension_numbers = #tpu.dot_dimension_numbers<[1], [0], [0], [1], [0, 0, 1, 1], [], []>} : vector<8x192xf32>, vector<192x64xf32>, vector<8x64xf32> -> vector<8x64xf32>
    %c0_106 = arith.constant 0 : index
    %c0_107 = arith.constant 0 : index
    %65 = vector.load %arg4[%c0_106, %c0_107] : memref<1x64xf32, #tpu.memory_space<vmem>>, vector<1x64xf32>
    %66 = vector.broadcast %65 : vector<1x64xf32> to vector<8x64xf32>
    %67 = arith.addf %64, %66 : vector<8x64xf32>
    %cst_108 = arith.constant 0.000000e+00 : f32
    %68 = vector.broadcast %cst_108 : f32 to vector<8x64xf32>
    %69 = arith.maximumf %67, %68 : vector<8x64xf32>
    %c0_109 = arith.constant 0 : index
    %c0_110 = arith.constant 0 : index
    %70 = vector.load %arg19[%c0_109, %c0_110] : memref<9x64xf32, #tpu.memory_space<vmem>>, vector<1x64xf32>
    tpu.vector_store %arg19[%c0_109, %c0_110], %0 {strides = array<i32>} : memref<9x64xf32, #tpu.memory_space<vmem>>, vector<1x64xf32>,
    %c1_111 = arith.constant 1 : index
    %c0_112 = arith.constant 0 : index
    %71 = vector.load %arg19[%c1_111, %c0_112] : memref<9x64xf32, #tpu.memory_space<vmem>>, vector<8x64xf32>
    tpu.vector_store %arg19[%c1_111, %c0_112], %69 {strides = array<i32>} : memref<9x64xf32, #tpu.memory_space<vmem>>, vector<8x64xf32>,
    %c0_113 = arith.constant 0 : index
    %c0_114 = arith.constant 0 : index
    %72 = vector.load %arg19[%c0_113, %c0_114] : memref<9x64xf32, #tpu.memory_space<vmem>>, vector<1x64xf32>
    %c0_115 = arith.constant 0 : index
    %c0_116 = arith.constant 0 : index
    %73 = vector.load %arg22[%c0_115, %c0_116] : memref<16x192xf32, #tpu.memory_space<vmem>>, vector<1x64xf32>
    tpu.vector_store %arg22[%c0_115, %c0_116], %72 {strides = array<i32>} : memref<16x192xf32, #tpu.memory_space<vmem>>, vector<1x64xf32>,
    %c1_117 = arith.constant 1 : index
    %c0_118 = arith.constant 0 : index
    %74 = vector.load %arg19[%c1_117, %c0_118] : memref<9x64xf32, #tpu.memory_space<vmem>>, vector<1x64xf32>
    %c0_119 = arith.constant 0 : index
    %c64_120 = arith.constant 64 : index
    %75 = vector.load %arg22[%c0_119, %c64_120] : memref<16x192xf32, #tpu.memory_space<vmem>>, vector<1x64xf32>
    tpu.vector_store %arg22[%c0_119, %c64_120], %74 {strides = array<i32>} : memref<16x192xf32, #tpu.memory_space<vmem>>, vector<1x64xf32>,
    %c2_121 = arith.constant 2 : index
    %c0_122 = arith.constant 0 : index
    %76 = vector.load %arg19[%c2_121, %c0_122] : memref<9x64xf32, #tpu.memory_space<vmem>>, vector<1x64xf32>
    %c0_123 = arith.constant 0 : index
    %c128_124 = arith.constant 128 : index
    %77 = vector.load %arg22[%c0_123, %c128_124] : memref<16x192xf32, #tpu.memory_space<vmem>>, vector<1x64xf32>
    tpu.vector_store %arg22[%c0_123, %c128_124], %76 {strides = array<i32>} : memref<16x192xf32, #tpu.memory_space<vmem>>, vector<1x64xf32>,
    %c2_125 = arith.constant 2 : index
    %c0_126 = arith.constant 0 : index
    %78 = vector.load %arg19[%c2_125, %c0_126] : memref<9x64xf32, #tpu.memory_space<vmem>>, vector<1x64xf32>
    %c1_127 = arith.constant 1 : index
    %c0_128 = arith.constant 0 : index
    %79 = vector.load %arg22[%c1_127, %c0_128] : memref<16x192xf32, #tpu.memory_space<vmem>>, vector<1x64xf32>
    tpu.vector_store %arg22[%c1_127, %c0_128], %78 {strides = array<i32>} : memref<16x192xf32, #tpu.memory_space<vmem>>, vector<1x64xf32>,
    %c3_129 = arith.constant 3 : index
    %c0_130 = arith.constant 0 : index
    %80 = vector.load %arg19[%c3_129, %c0_130] : memref<9x64xf32, #tpu.memory_space<vmem>>, vector<1x64xf32>
    %c1_131 = arith.constant 1 : index
    %c64_132 = arith.constant 64 : index
    %81 = vector.load %arg22[%c1_131, %c64_132] : memref<16x192xf32, #tpu.memory_space<vmem>>, vector<1x64xf32>
    tpu.vector_store %arg22[%c1_131, %c64_132], %80 {strides = array<i32>} : memref<16x192xf32, #tpu.memory_space<vmem>>, vector<1x64xf32>,
    %c4_133 = arith.constant 4 : index
    %c0_134 = arith.constant 0 : index
    %82 = vector.load %arg19[%c4_133, %c0_134] : memref<9x64xf32, #tpu.memory_space<vmem>>, vector<1x64xf32>
    %c1_135 = arith.constant 1 : index
    %c128_136 = arith.constant 128 : index
    %83 = vector.load %arg22[%c1_135, %c128_136] : memref<16x192xf32, #tpu.memory_space<vmem>>, vector<1x64xf32>
    tpu.vector_store %arg22[%c1_135, %c128_136], %82 {strides = array<i32>} : memref<16x192xf32, #tpu.memory_space<vmem>>, vector<1x64xf32>,
    %c4_137 = arith.constant 4 : index
    %c0_138 = arith.constant 0 : index
    %84 = vector.load %arg19[%c4_137, %c0_138] : memref<9x64xf32, #tpu.memory_space<vmem>>, vector<1x64xf32>
    %c2_139 = arith.constant 2 : index
    %c0_140 = arith.constant 0 : index
    %85 = vector.load %arg22[%c2_139, %c0_140] : memref<16x192xf32, #tpu.memory_space<vmem>>, vector<1x64xf32>
    tpu.vector_store %arg22[%c2_139, %c0_140], %84 {strides = array<i32>} : memref<16x192xf32, #tpu.memory_space<vmem>>, vector<1x64xf32>,
    %c5_141 = arith.constant 5 : index
    %c0_142 = arith.constant 0 : index
    %86 = vector.load %arg19[%c5_141, %c0_142] : memref<9x64xf32, #tpu.memory_space<vmem>>, vector<1x64xf32>
    %c2_143 = arith.constant 2 : index
    %c64_144 = arith.constant 64 : index
    %87 = vector.load %arg22[%c2_143, %c64_144] : memref<16x192xf32, #tpu.memory_space<vmem>>, vector<1x64xf32>
    tpu.vector_store %arg22[%c2_143, %c64_144], %86 {strides = array<i32>} : memref<16x192xf32, #tpu.memory_space<vmem>>, vector<1x64xf32>,
    %c6_145 = arith.constant 6 : index
    %c0_146 = arith.constant 0 : index
    %88 = vector.load %arg19[%c6_145, %c0_146] : memref<9x64xf32, #tpu.memory_space<vmem>>, vector<1x64xf32>
    %c2_147 = arith.constant 2 : index
    %c128_148 = arith.constant 128 : index
    %89 = vector.load %arg22[%c2_147, %c128_148] : memref<16x192xf32, #tpu.memory_space<vmem>>, vector<1x64xf32>
    tpu.vector_store %arg22[%c2_147, %c128_148], %88 {strides = array<i32>} : memref<16x192xf32, #tpu.memory_space<vmem>>, vector<1x64xf32>,
    %c6_149 = arith.constant 6 : index
    %c0_150 = arith.constant 0 : index
    %90 = vector.load %arg19[%c6_149, %c0_150] : memref<9x64xf32, #tpu.memory_space<vmem>>, vector<1x64xf32>
    %c3_151 = arith.constant 3 : index
    %c0_152 = arith.constant 0 : index
    %91 = vector.load %arg22[%c3_151, %c0_152] : memref<16x192xf32, #tpu.memory_space<vmem>>, vector<1x64xf32>
    tpu.vector_store %arg22[%c3_151, %c0_152], %90 {strides = array<i32>} : memref<16x192xf32, #tpu.memory_space<vmem>>, vector<1x64xf32>,
    %c7_153 = arith.constant 7 : index
    %c0_154 = arith.constant 0 : index
    %92 = vector.load %arg19[%c7_153, %c0_154] : memref<9x64xf32, #tpu.memory_space<vmem>>, vector<1x64xf32>
    %c3_155 = arith.constant 3 : index
    %c64_156 = arith.constant 64 : index
    %93 = vector.load %arg22[%c3_155, %c64_156] : memref<16x192xf32, #tpu.memory_space<vmem>>, vector<1x64xf32>
    tpu.vector_store %arg22[%c3_155, %c64_156], %92 {strides = array<i32>} : memref<16x192xf32, #tpu.memory_space<vmem>>, vector<1x64xf32>,
    %c8_157 = arith.constant 8 : index
    %c0_158 = arith.constant 0 : index
    %94 = vector.load %arg19[%c8_157, %c0_158] : memref<9x64xf32, #tpu.memory_space<vmem>>, vector<1x64xf32>
    %c3_159 = arith.constant 3 : index
    %c128_160 = arith.constant 128 : index
    %95 = vector.load %arg22[%c3_159, %c128_160] : memref<16x192xf32, #tpu.memory_space<vmem>>, vector<1x64xf32>
    tpu.vector_store %arg22[%c3_159, %c128_160], %94 {strides = array<i32>} : memref<16x192xf32, #tpu.memory_space<vmem>>, vector<1x64xf32>,
    %c0_161 = arith.constant 0 : index
    %c0_162 = arith.constant 0 : index
    %96 = vector.load %arg22[%c0_161, %c0_162] : memref<16x192xf32, #tpu.memory_space<vmem>>, vector<4x192xf32>
    %c0_163 = arith.constant 0 : index
    %c0_164 = arith.constant 0 : index
    %97 = vector.load %arg5[%c0_163, %c0_164] : memref<192x64xf32, #tpu.memory_space<vmem>>, vector<192x64xf32>
    %cst_165 = arith.constant dense<0.000000e+00> : vector<4x64xf32>
    %98 = tpu.matmul %96, %97, %cst_165 {dimension_numbers = #tpu.dot_dimension_numbers<[1], [0], [0], [1], [0, 0, 1, 1], [], []>} : vector<4x192xf32>, vector<192x64xf32>, vector<4x64xf32> -> vector<4x64xf32>
    %c0_166 = arith.constant 0 : index
    %c0_167 = arith.constant 0 : index
    %99 = vector.load %arg6[%c0_166, %c0_167] : memref<1x64xf32, #tpu.memory_space<vmem>>, vector<1x64xf32>
    %100 = vector.broadcast %99 : vector<1x64xf32> to vector<4x64xf32>
    %101 = arith.addf %98, %100 : vector<4x64xf32>
    %cst_168 = arith.constant 0.000000e+00 : f32
    %102 = vector.broadcast %cst_168 : f32 to vector<4x64xf32>
    %103 = arith.maximumf %101, %102 : vector<4x64xf32>
    %104 = vector.extract_strided_slice %103 {offsets = [0, 0], sizes = [1, 64], strides = [1, 1]} : vector<4x64xf32> to vector<1x64xf32>
    %105 = vector.extract_strided_slice %103 {offsets = [1, 0], sizes = [1, 64], strides = [1, 1]} : vector<4x64xf32> to vector<1x64xf32>
    %106 = vector.extract_strided_slice %103 {offsets = [2, 0], sizes = [1, 64], strides = [1, 1]} : vector<4x64xf32> to vector<1x64xf32>
    %107 = vector.extract_strided_slice %103 {offsets = [3, 0], sizes = [1, 64], strides = [1, 1]} : vector<4x64xf32> to vector<1x64xf32>
    %108 = tpu.concatenate %104, %105, %106, %107 in 1 : vector<1x64xf32>, vector<1x64xf32>, vector<1x64xf32>, vector<1x64xf32> -> vector<1x256xf32>
    %c0_169 = arith.constant 0 : index
    %c0_170 = arith.constant 0 : index
    %109 = vector.load %arg7[%c0_169, %c0_170] : memref<256x64xf32, #tpu.memory_space<vmem>>, vector<256x64xf32>
    %cst_171 = arith.constant dense<0.000000e+00> : vector<1x64xf32>
    %110 = tpu.matmul %108, %109, %cst_171 {dimension_numbers = #tpu.dot_dimension_numbers<[1], [0], [0], [1], [0, 0, 1, 1], [], []>} : vector<1x256xf32>, vector<256x64xf32>, vector<1x64xf32> -> vector<1x64xf32>
    %c0_172 = arith.constant 0 : index
    %c0_173 = arith.constant 0 : index
    %111 = vector.load %arg8[%c0_172, %c0_173] : memref<1x64xf32, #tpu.memory_space<vmem>>, vector<1x64xf32>
    %112 = arith.addf %110, %111 : vector<1x64xf32>
    %113 = vector.extract_strided_slice %112 {offsets = [0, 0], sizes = [1, 32], strides = [1, 1]} : vector<1x64xf32> to vector<1x32xf32>
    %114 = vector.extract_strided_slice %112 {offsets = [0, 32], sizes = [1, 32], strides = [1, 1]} : vector<1x64xf32> to vector<1x32xf32>
    %cst_174 = arith.constant 5.000000e-01 : f32
    %115 = vector.broadcast %cst_174 : f32 to vector<1x32xf32>
    %116 = arith.mulf %115, %114 : vector<1x32xf32>
    %117 = math.exp %116 : vector<1x32xf32>
    %c0_175 = arith.constant 0 : index
    %c0_176 = arith.constant 0 : index
    %c0_177 = arith.constant 0 : index
    %118 = vector.load %arg2[%c0_175, %c0_176, %c0_177] : memref<1x1x32xf32, #tpu.memory_space<vmem>>, vector<1x1x32xf32>
    %119 = vector.shape_cast %118 : vector<1x1x32xf32> to vector<1x32xf32>
    %120 = arith.mulf %117, %119 : vector<1x32xf32>
    %121 = arith.addf %113, %120 : vector<1x32xf32>
    %c0_178 = arith.constant 0 : index
    %c0_179 = arith.constant 0 : index
    %122 = vector.load %arg9[%c0_178, %c0_179] : memref<32x256xf32, #tpu.memory_space<vmem>>, vector<32x256xf32>
    %cst_180 = arith.constant dense<0.000000e+00> : vector<1x256xf32>
    %123 = tpu.matmul %121, %122, %cst_180 {dimension_numbers = #tpu.dot_dimension_numbers<[1], [0], [0], [1], [0, 0, 1, 1], [], []>} : vector<1x32xf32>, vector<32x256xf32>, vector<1x256xf32> -> vector<1x256xf32>
    %c0_181 = arith.constant 0 : index
    %c0_182 = arith.constant 0 : index
    %124 = vector.load %arg10[%c0_181, %c0_182] : memref<1x256xf32, #tpu.memory_space<vmem>>, vector<1x256xf32>
    %125 = arith.addf %123, %124 : vector<1x256xf32>
    %cst_183 = arith.constant 0.000000e+00 : f32
    %126 = vector.broadcast %cst_183 : f32 to vector<1x256xf32>
    %127 = arith.maximumf %125, %126 : vector<1x256xf32>
    %c0_184 = arith.constant 0 : index
    %c0_185 = arith.constant 0 : index
    %c0_186 = arith.constant 0 : index
    %128 = vector.load %arg15[%c0_184, %c0_185, %c0_186] : memref<1x1x32xf32, #tpu.memory_space<vmem>>, vector<1x1x32xf32>
    %129 = vector.shape_cast %128 : vector<1x1x32xf32> to vector<1x32xf32>
    %130 = vector.shape_cast %113 : vector<1x32xf32> to vector<1x1x32xf32>
    tpu.vector_store %arg15[%c0_184, %c0_185, %c0_186], %130 {strides = array<i32>} : memref<1x1x32xf32, #tpu.memory_space<vmem>>, vector<1x1x32xf32>,
    %c0_187 = arith.constant 0 : index
    %c0_188 = arith.constant 0 : index
    %c0_189 = arith.constant 0 : index
    %131 = vector.load %arg16[%c0_187, %c0_188, %c0_189] : memref<1x1x32xf32, #tpu.memory_space<vmem>>, vector<1x1x32xf32>
    %132 = vector.shape_cast %131 : vector<1x1x32xf32> to vector<1x32xf32>
    %133 = vector.shape_cast %114 : vector<1x32xf32> to vector<1x1x32xf32>
    tpu.vector_store %arg16[%c0_187, %c0_188, %c0_189], %133 {strides = array<i32>} : memref<1x1x32xf32, #tpu.memory_space<vmem>>, vector<1x1x32xf32>,
    %c0_190 = arith.constant 0 : index
    %c0_191 = arith.constant 0 : index
    %134 = vector.load %arg20[%c0_190, %c0_191] : memref<5x64xf32, #tpu.memory_space<vmem>>, vector<1x64xf32>
    tpu.vector_store %arg20[%c0_190, %c0_191], %0 {strides = array<i32>} : memref<5x64xf32, #tpu.memory_space<vmem>>, vector<1x64xf32>,
    %135 = vector.extract_strided_slice %127 {offsets = [0, 0], sizes = [1, 64], strides = [1, 1]} : vector<1x256xf32> to vector<1x64xf32>
    %c1_192 = arith.constant 1 : index
    %c0_193 = arith.constant 0 : index
    %136 = vector.load %arg20[%c1_192, %c0_193] : memref<5x64xf32, #tpu.memory_space<vmem>>, vector<1x64xf32>
    tpu.vector_store %arg20[%c1_192, %c0_193], %135 {strides = array<i32>} : memref<5x64xf32, #tpu.memory_space<vmem>>, vector<1x64xf32>,
    %137 = vector.extract_strided_slice %127 {offsets = [0, 64], sizes = [1, 64], strides = [1, 1]} : vector<1x256xf32> to vector<1x64xf32>
    %c2_194 = arith.constant 2 : index
    %c0_195 = arith.constant 0 : index
    %138 = vector.load %arg20[%c2_194, %c0_195] : memref<5x64xf32, #tpu.memory_space<vmem>>, vector<1x64xf32>
    tpu.vector_store %arg20[%c2_194, %c0_195], %137 {strides = array<i32>} : memref<5x64xf32, #tpu.memory_space<vmem>>, vector<1x64xf32>,
    %139 = vector.extract_strided_slice %127 {offsets = [0, 128], sizes = [1, 64], strides = [1, 1]} : vector<1x256xf32> to vector<1x64xf32>
    %c3_196 = arith.constant 3 : index
    %c0_197 = arith.constant 0 : index
    %140 = vector.load %arg20[%c3_196, %c0_197] : memref<5x64xf32, #tpu.memory_space<vmem>>, vector<1x64xf32>
    tpu.vector_store %arg20[%c3_196, %c0_197], %139 {strides = array<i32>} : memref<5x64xf32, #tpu.memory_space<vmem>>, vector<1x64xf32>,
    %141 = vector.extract_strided_slice %127 {offsets = [0, 192], sizes = [1, 64], strides = [1, 1]} : vector<1x256xf32> to vector<1x64xf32>
    %c4_198 = arith.constant 4 : index
    %c0_199 = arith.constant 0 : index
    %142 = vector.load %arg20[%c4_198, %c0_199] : memref<5x64xf32, #tpu.memory_space<vmem>>, vector<1x64xf32>
    tpu.vector_store %arg20[%c4_198, %c0_199], %141 {strides = array<i32>} : memref<5x64xf32, #tpu.memory_space<vmem>>, vector<1x64xf32>,
    %c0_200 = arith.constant 0 : index
    %c0_201 = arith.constant 0 : index
    %143 = vector.load %arg20[%c0_200, %c0_201] : memref<5x64xf32, #tpu.memory_space<vmem>>, vector<1x64xf32>
    %c0_202 = arith.constant 0 : index
    %c0_203 = arith.constant 0 : index
    %144 = vector.load %arg22[%c0_202, %c0_203] : memref<16x192xf32, #tpu.memory_space<vmem>>, vector<1x64xf32>
    tpu.vector_store %arg22[%c0_202, %c0_203], %143 {strides = array<i32>} : memref<16x192xf32, #tpu.memory_space<vmem>>, vector<1x64xf32>,
    %c1_204 = arith.constant 1 : index
    %c0_205 = arith.constant 0 : index
    %145 = vector.load %arg20[%c1_204, %c0_205] : memref<5x64xf32, #tpu.memory_space<vmem>>, vector<1x64xf32>
    %c0_206 = arith.constant 0 : index
    %c64_207 = arith.constant 64 : index
    %146 = vector.load %arg22[%c0_206, %c64_207] : memref<16x192xf32, #tpu.memory_space<vmem>>, vector<1x64xf32>
    tpu.vector_store %arg22[%c0_206, %c64_207], %145 {strides = array<i32>} : memref<16x192xf32, #tpu.memory_space<vmem>>, vector<1x64xf32>,
    %c1_208 = arith.constant 1 : index
    %c0_209 = arith.constant 0 : index
    %147 = vector.load %arg20[%c1_208, %c0_209] : memref<5x64xf32, #tpu.memory_space<vmem>>, vector<1x64xf32>
    %c0_210 = arith.constant 0 : index
    %c128_211 = arith.constant 128 : index
    %148 = vector.load %arg22[%c0_210, %c128_211] : memref<16x192xf32, #tpu.memory_space<vmem>>, vector<1x64xf32>
    tpu.vector_store %arg22[%c0_210, %c128_211], %147 {strides = array<i32>} : memref<16x192xf32, #tpu.memory_space<vmem>>, vector<1x64xf32>,
    %c1_212 = arith.constant 1 : index
    %c0_213 = arith.constant 0 : index
    %149 = vector.load %arg20[%c1_212, %c0_213] : memref<5x64xf32, #tpu.memory_space<vmem>>, vector<1x64xf32>
    %c1_214 = arith.constant 1 : index
    %c0_215 = arith.constant 0 : index
    %150 = vector.load %arg22[%c1_214, %c0_215] : memref<16x192xf32, #tpu.memory_space<vmem>>, vector<1x64xf32>
    tpu.vector_store %arg22[%c1_214, %c0_215], %149 {strides = array<i32>} : memref<16x192xf32, #tpu.memory_space<vmem>>, vector<1x64xf32>,
    %c1_216 = arith.constant 1 : index
    %c0_217 = arith.constant 0 : index
    %151 = vector.load %arg20[%c1_216, %c0_217] : memref<5x64xf32, #tpu.memory_space<vmem>>, vector<1x64xf32>
    %c1_218 = arith.constant 1 : index
    %c64_219 = arith.constant 64 : index
    %152 = vector.load %arg22[%c1_218, %c64_219] : memref<16x192xf32, #tpu.memory_space<vmem>>, vector<1x64xf32>
    tpu.vector_store %arg22[%c1_218, %c64_219], %151 {strides = array<i32>} : memref<16x192xf32, #tpu.memory_space<vmem>>, vector<1x64xf32>,
    %c2_220 = arith.constant 2 : index
    %c0_221 = arith.constant 0 : index
    %153 = vector.load %arg20[%c2_220, %c0_221] : memref<5x64xf32, #tpu.memory_space<vmem>>, vector<1x64xf32>
    %c1_222 = arith.constant 1 : index
    %c128_223 = arith.constant 128 : index
    %154 = vector.load %arg22[%c1_222, %c128_223] : memref<16x192xf32, #tpu.memory_space<vmem>>, vector<1x64xf32>
    tpu.vector_store %arg22[%c1_222, %c128_223], %153 {strides = array<i32>} : memref<16x192xf32, #tpu.memory_space<vmem>>, vector<1x64xf32>,
    %c1_224 = arith.constant 1 : index
    %c0_225 = arith.constant 0 : index
    %155 = vector.load %arg20[%c1_224, %c0_225] : memref<5x64xf32, #tpu.memory_space<vmem>>, vector<1x64xf32>
    %c2_226 = arith.constant 2 : index
    %c0_227 = arith.constant 0 : index
    %156 = vector.load %arg22[%c2_226, %c0_227] : memref<16x192xf32, #tpu.memory_space<vmem>>, vector<1x64xf32>
    tpu.vector_store %arg22[%c2_226, %c0_227], %155 {strides = array<i32>} : memref<16x192xf32, #tpu.memory_space<vmem>>, vector<1x64xf32>,
    %c2_228 = arith.constant 2 : index
    %c0_229 = arith.constant 0 : index
    %157 = vector.load %arg20[%c2_228, %c0_229] : memref<5x64xf32, #tpu.memory_space<vmem>>, vector<1x64xf32>
    %c2_230 = arith.constant 2 : index
    %c64_231 = arith.constant 64 : index
    %158 = vector.load %arg22[%c2_230, %c64_231] : memref<16x192xf32, #tpu.memory_space<vmem>>, vector<1x64xf32>
    tpu.vector_store %arg22[%c2_230, %c64_231], %157 {strides = array<i32>} : memref<16x192xf32, #tpu.memory_space<vmem>>, vector<1x64xf32>,
    %c2_232 = arith.constant 2 : index
    %c0_233 = arith.constant 0 : index
    %159 = vector.load %arg20[%c2_232, %c0_233] : memref<5x64xf32, #tpu.memory_space<vmem>>, vector<1x64xf32>
    %c2_234 = arith.constant 2 : index
    %c128_235 = arith.constant 128 : index
    %160 = vector.load %arg22[%c2_234, %c128_235] : memref<16x192xf32, #tpu.memory_space<vmem>>, vector<1x64xf32>
    tpu.vector_store %arg22[%c2_234, %c128_235], %159 {strides = array<i32>} : memref<16x192xf32, #tpu.memory_space<vmem>>, vector<1x64xf32>,
    %c2_236 = arith.constant 2 : index
    %c0_237 = arith.constant 0 : index
    %161 = vector.load %arg20[%c2_236, %c0_237] : memref<5x64xf32, #tpu.memory_space<vmem>>, vector<1x64xf32>
    %c3_238 = arith.constant 3 : index
    %c0_239 = arith.constant 0 : index
    %162 = vector.load %arg22[%c3_238, %c0_239] : memref<16x192xf32, #tpu.memory_space<vmem>>, vector<1x64xf32>
    tpu.vector_store %arg22[%c3_238, %c0_239], %161 {strides = array<i32>} : memref<16x192xf32, #tpu.memory_space<vmem>>, vector<1x64xf32>,
    %c2_240 = arith.constant 2 : index
    %c0_241 = arith.constant 0 : index
    %163 = vector.load %arg20[%c2_240, %c0_241] : memref<5x64xf32, #tpu.memory_space<vmem>>, vector<1x64xf32>
    %c3_242 = arith.constant 3 : index
    %c64_243 = arith.constant 64 : index
    %164 = vector.load %arg22[%c3_242, %c64_243] : memref<16x192xf32, #tpu.memory_space<vmem>>, vector<1x64xf32>
    tpu.vector_store %arg22[%c3_242, %c64_243], %163 {strides = array<i32>} : memref<16x192xf32, #tpu.memory_space<vmem>>, vector<1x64xf32>,
    %c3_244 = arith.constant 3 : index
    %c0_245 = arith.constant 0 : index
    %165 = vector.load %arg20[%c3_244, %c0_245] : memref<5x64xf32, #tpu.memory_space<vmem>>, vector<1x64xf32>
    %c3_246 = arith.constant 3 : index
    %c128_247 = arith.constant 128 : index
    %166 = vector.load %arg22[%c3_246, %c128_247] : memref<16x192xf32, #tpu.memory_space<vmem>>, vector<1x64xf32>
    tpu.vector_store %arg22[%c3_246, %c128_247], %165 {strides = array<i32>} : memref<16x192xf32, #tpu.memory_space<vmem>>, vector<1x64xf32>,
    %c2_248 = arith.constant 2 : index
    %c0_249 = arith.constant 0 : index
    %167 = vector.load %arg20[%c2_248, %c0_249] : memref<5x64xf32, #tpu.memory_space<vmem>>, vector<1x64xf32>
    %c4_250 = arith.constant 4 : index
    %c0_251 = arith.constant 0 : index
    %168 = vector.load %arg22[%c4_250, %c0_251] : memref<16x192xf32, #tpu.memory_space<vmem>>, vector<1x64xf32>
    tpu.vector_store %arg22[%c4_250, %c0_251], %167 {strides = array<i32>} : memref<16x192xf32, #tpu.memory_space<vmem>>, vector<1x64xf32>,
    %c3_252 = arith.constant 3 : index
    %c0_253 = arith.constant 0 : index
    %169 = vector.load %arg20[%c3_252, %c0_253] : memref<5x64xf32, #tpu.memory_space<vmem>>, vector<1x64xf32>
    %c4_254 = arith.constant 4 : index
    %c64_255 = arith.constant 64 : index
    %170 = vector.load %arg22[%c4_254, %c64_255] : memref<16x192xf32, #tpu.memory_space<vmem>>, vector<1x64xf32>
    tpu.vector_store %arg22[%c4_254, %c64_255], %169 {strides = array<i32>} : memref<16x192xf32, #tpu.memory_space<vmem>>, vector<1x64xf32>,
    %c3_256 = arith.constant 3 : index
    %c0_257 = arith.constant 0 : index
    %171 = vector.load %arg20[%c3_256, %c0_257] : memref<5x64xf32, #tpu.memory_space<vmem>>, vector<1x64xf32>
    %c4_258 = arith.constant 4 : index
    %c128_259 = arith.constant 128 : index
    %172 = vector.load %arg22[%c4_258, %c128_259] : memref<16x192xf32, #tpu.memory_space<vmem>>, vector<1x64xf32>
    tpu.vector_store %arg22[%c4_258, %c128_259], %171 {strides = array<i32>} : memref<16x192xf32, #tpu.memory_space<vmem>>, vector<1x64xf32>,
    %c3_260 = arith.constant 3 : index
    %c0_261 = arith.constant 0 : index
    %173 = vector.load %arg20[%c3_260, %c0_261] : memref<5x64xf32, #tpu.memory_space<vmem>>, vector<1x64xf32>
    %c5_262 = arith.constant 5 : index
    %c0_263 = arith.constant 0 : index
    %174 = vector.load %arg22[%c5_262, %c0_263] : memref<16x192xf32, #tpu.memory_space<vmem>>, vector<1x64xf32>
    tpu.vector_store %arg22[%c5_262, %c0_263], %173 {strides = array<i32>} : memref<16x192xf32, #tpu.memory_space<vmem>>, vector<1x64xf32>,
    %c3_264 = arith.constant 3 : index
    %c0_265 = arith.constant 0 : index
    %175 = vector.load %arg20[%c3_264, %c0_265] : memref<5x64xf32, #tpu.memory_space<vmem>>, vector<1x64xf32>
    %c5_266 = arith.constant 5 : index
    %c64_267 = arith.constant 64 : index
    %176 = vector.load %arg22[%c5_266, %c64_267] : memref<16x192xf32, #tpu.memory_space<vmem>>, vector<1x64xf32>
    tpu.vector_store %arg22[%c5_266, %c64_267], %175 {strides = array<i32>} : memref<16x192xf32, #tpu.memory_space<vmem>>, vector<1x64xf32>,
    %c4_268 = arith.constant 4 : index
    %c0_269 = arith.constant 0 : index
    %177 = vector.load %arg20[%c4_268, %c0_269] : memref<5x64xf32, #tpu.memory_space<vmem>>, vector<1x64xf32>
    %c5_270 = arith.constant 5 : index
    %c128_271 = arith.constant 128 : index
    %178 = vector.load %arg22[%c5_270, %c128_271] : memref<16x192xf32, #tpu.memory_space<vmem>>, vector<1x64xf32>
    tpu.vector_store %arg22[%c5_270, %c128_271], %177 {strides = array<i32>} : memref<16x192xf32, #tpu.memory_space<vmem>>, vector<1x64xf32>,
    %c3_272 = arith.constant 3 : index
    %c0_273 = arith.constant 0 : index
    %179 = vector.load %arg20[%c3_272, %c0_273] : memref<5x64xf32, #tpu.memory_space<vmem>>, vector<1x64xf32>
    %c6_274 = arith.constant 6 : index
    %c0_275 = arith.constant 0 : index
    %180 = vector.load %arg22[%c6_274, %c0_275] : memref<16x192xf32, #tpu.memory_space<vmem>>, vector<1x64xf32>
    tpu.vector_store %arg22[%c6_274, %c0_275], %179 {strides = array<i32>} : memref<16x192xf32, #tpu.memory_space<vmem>>, vector<1x64xf32>,
    %c4_276 = arith.constant 4 : index
    %c0_277 = arith.constant 0 : index
    %181 = vector.load %arg20[%c4_276, %c0_277] : memref<5x64xf32, #tpu.memory_space<vmem>>, vector<1x64xf32>
    %c6_278 = arith.constant 6 : index
    %c64_279 = arith.constant 64 : index
    %182 = vector.load %arg22[%c6_278, %c64_279] : memref<16x192xf32, #tpu.memory_space<vmem>>, vector<1x64xf32>
    tpu.vector_store %arg22[%c6_278, %c64_279], %181 {strides = array<i32>} : memref<16x192xf32, #tpu.memory_space<vmem>>, vector<1x64xf32>,
    %c4_280 = arith.constant 4 : index
    %c0_281 = arith.constant 0 : index
    %183 = vector.load %arg20[%c4_280, %c0_281] : memref<5x64xf32, #tpu.memory_space<vmem>>, vector<1x64xf32>
    %c6_282 = arith.constant 6 : index
    %c128_283 = arith.constant 128 : index
    %184 = vector.load %arg22[%c6_282, %c128_283] : memref<16x192xf32, #tpu.memory_space<vmem>>, vector<1x64xf32>
    tpu.vector_store %arg22[%c6_282, %c128_283], %183 {strides = array<i32>} : memref<16x192xf32, #tpu.memory_space<vmem>>, vector<1x64xf32>,
    %c4_284 = arith.constant 4 : index
    %c0_285 = arith.constant 0 : index
    %185 = vector.load %arg20[%c4_284, %c0_285] : memref<5x64xf32, #tpu.memory_space<vmem>>, vector<1x64xf32>
    %c7_286 = arith.constant 7 : index
    %c0_287 = arith.constant 0 : index
    %186 = vector.load %arg22[%c7_286, %c0_287] : memref<16x192xf32, #tpu.memory_space<vmem>>, vector<1x64xf32>
    tpu.vector_store %arg22[%c7_286, %c0_287], %185 {strides = array<i32>} : memref<16x192xf32, #tpu.memory_space<vmem>>, vector<1x64xf32>,
    %c4_288 = arith.constant 4 : index
    %c0_289 = arith.constant 0 : index
    %187 = vector.load %arg20[%c4_288, %c0_289] : memref<5x64xf32, #tpu.memory_space<vmem>>, vector<1x64xf32>
    %c7_290 = arith.constant 7 : index
    %c64_291 = arith.constant 64 : index
    %188 = vector.load %arg22[%c7_290, %c64_291] : memref<16x192xf32, #tpu.memory_space<vmem>>, vector<1x64xf32>
    tpu.vector_store %arg22[%c7_290, %c64_291], %187 {strides = array<i32>} : memref<16x192xf32, #tpu.memory_space<vmem>>, vector<1x64xf32>,
    %c0_292 = arith.constant 0 : index
    %c0_293 = arith.constant 0 : index
    %189 = vector.load %arg20[%c0_292, %c0_293] : memref<5x64xf32, #tpu.memory_space<vmem>>, vector<1x64xf32>
    %c7_294 = arith.constant 7 : index
    %c128_295 = arith.constant 128 : index
    %190 = vector.load %arg22[%c7_294, %c128_295] : memref<16x192xf32, #tpu.memory_space<vmem>>, vector<1x64xf32>
    tpu.vector_store %arg22[%c7_294, %c128_295], %189 {strides = array<i32>} : memref<16x192xf32, #tpu.memory_space<vmem>>, vector<1x64xf32>,
    %c0_296 = arith.constant 0 : index
    %c0_297 = arith.constant 0 : index
    %191 = vector.load %arg22[%c0_296, %c0_297] : memref<16x192xf32, #tpu.memory_space<vmem>>, vector<8x192xf32>
    %c0_298 = arith.constant 0 : index
    %c0_299 = arith.constant 0 : index
    %192 = vector.load %arg11[%c0_298, %c0_299] : memref<192x64xf32, #tpu.memory_space<vmem>>, vector<192x64xf32>
    %cst_300 = arith.constant dense<0.000000e+00> : vector<8x64xf32>
    %193 = tpu.matmul %191, %192, %cst_300 {dimension_numbers = #tpu.dot_dimension_numbers<[1], [0], [0], [1], [0, 0, 1, 1], [], []>} : vector<8x192xf32>, vector<192x64xf32>, vector<8x64xf32> -> vector<8x64xf32>
    %c0_301 = arith.constant 0 : index
    %c0_302 = arith.constant 0 : index
    %194 = vector.load %arg12[%c0_301, %c0_302] : memref<1x64xf32, #tpu.memory_space<vmem>>, vector<1x64xf32>
    %195 = vector.broadcast %194 : vector<1x64xf32> to vector<8x64xf32>
    %196 = arith.addf %193, %195 : vector<8x64xf32>
    %cst_303 = arith.constant 0.000000e+00 : f32
    %197 = vector.broadcast %cst_303 : f32 to vector<8x64xf32>
    %198 = arith.maximumf %196, %197 : vector<8x64xf32>
    %c0_304 = arith.constant 0 : index
    %c0_305 = arith.constant 0 : index
    %199 = vector.load %arg21[%c0_304, %c0_305] : memref<9x64xf32, #tpu.memory_space<vmem>>, vector<1x64xf32>
    tpu.vector_store %arg21[%c0_304, %c0_305], %0 {strides = array<i32>} : memref<9x64xf32, #tpu.memory_space<vmem>>, vector<1x64xf32>,
    %c1_306 = arith.constant 1 : index
    %c0_307 = arith.constant 0 : index
    %200 = vector.load %arg21[%c1_306, %c0_307] : memref<9x64xf32, #tpu.memory_space<vmem>>, vector<8x64xf32>
    tpu.vector_store %arg21[%c1_306, %c0_307], %198 {strides = array<i32>} : memref<9x64xf32, #tpu.memory_space<vmem>>, vector<8x64xf32>,
    %c0_308 = arith.constant 0 : index
    %c0_309 = arith.constant 0 : index
    %201 = vector.load %arg21[%c0_308, %c0_309] : memref<9x64xf32, #tpu.memory_space<vmem>>, vector<1x64xf32>
    %c0_310 = arith.constant 0 : index
    %c0_311 = arith.constant 0 : index
    %202 = vector.load %arg22[%c0_310, %c0_311] : memref<16x192xf32, #tpu.memory_space<vmem>>, vector<1x64xf32>
    tpu.vector_store %arg22[%c0_310, %c0_311], %201 {strides = array<i32>} : memref<16x192xf32, #tpu.memory_space<vmem>>, vector<1x64xf32>,
    %c1_312 = arith.constant 1 : index
    %c0_313 = arith.constant 0 : index
    %203 = vector.load %arg21[%c1_312, %c0_313] : memref<9x64xf32, #tpu.memory_space<vmem>>, vector<1x64xf32>
    %c0_314 = arith.constant 0 : index
    %c64_315 = arith.constant 64 : index
    %204 = vector.load %arg22[%c0_314, %c64_315] : memref<16x192xf32, #tpu.memory_space<vmem>>, vector<1x64xf32>
    tpu.vector_store %arg22[%c0_314, %c64_315], %203 {strides = array<i32>} : memref<16x192xf32, #tpu.memory_space<vmem>>, vector<1x64xf32>,
    %c1_316 = arith.constant 1 : index
    %c0_317 = arith.constant 0 : index
    %205 = vector.load %arg21[%c1_316, %c0_317] : memref<9x64xf32, #tpu.memory_space<vmem>>, vector<1x64xf32>
    %c0_318 = arith.constant 0 : index
    %c128_319 = arith.constant 128 : index
    %206 = vector.load %arg22[%c0_318, %c128_319] : memref<16x192xf32, #tpu.memory_space<vmem>>, vector<1x64xf32>
    tpu.vector_store %arg22[%c0_318, %c128_319], %205 {strides = array<i32>} : memref<16x192xf32, #tpu.memory_space<vmem>>, vector<1x64xf32>,
    %c1_320 = arith.constant 1 : index
    %c0_321 = arith.constant 0 : index
    %207 = vector.load %arg21[%c1_320, %c0_321] : memref<9x64xf32, #tpu.memory_space<vmem>>, vector<1x64xf32>
    %c1_322 = arith.constant 1 : index
    %c0_323 = arith.constant 0 : index
    %208 = vector.load %arg22[%c1_322, %c0_323] : memref<16x192xf32, #tpu.memory_space<vmem>>, vector<1x64xf32>
    tpu.vector_store %arg22[%c1_322, %c0_323], %207 {strides = array<i32>} : memref<16x192xf32, #tpu.memory_space<vmem>>, vector<1x64xf32>,
    %c1_324 = arith.constant 1 : index
    %c0_325 = arith.constant 0 : index
    %209 = vector.load %arg21[%c1_324, %c0_325] : memref<9x64xf32, #tpu.memory_space<vmem>>, vector<1x64xf32>
    %c1_326 = arith.constant 1 : index
    %c64_327 = arith.constant 64 : index
    %210 = vector.load %arg22[%c1_326, %c64_327] : memref<16x192xf32, #tpu.memory_space<vmem>>, vector<1x64xf32>
    tpu.vector_store %arg22[%c1_326, %c64_327], %209 {strides = array<i32>} : memref<16x192xf32, #tpu.memory_space<vmem>>, vector<1x64xf32>,
    %c2_328 = arith.constant 2 : index
    %c0_329 = arith.constant 0 : index
    %211 = vector.load %arg21[%c2_328, %c0_329] : memref<9x64xf32, #tpu.memory_space<vmem>>, vector<1x64xf32>
    %c1_330 = arith.constant 1 : index
    %c128_331 = arith.constant 128 : index
    %212 = vector.load %arg22[%c1_330, %c128_331] : memref<16x192xf32, #tpu.memory_space<vmem>>, vector<1x64xf32>
    tpu.vector_store %arg22[%c1_330, %c128_331], %211 {strides = array<i32>} : memref<16x192xf32, #tpu.memory_space<vmem>>, vector<1x64xf32>,
    %c1_332 = arith.constant 1 : index
    %c0_333 = arith.constant 0 : index
    %213 = vector.load %arg21[%c1_332, %c0_333] : memref<9x64xf32, #tpu.memory_space<vmem>>, vector<1x64xf32>
    %c2_334 = arith.constant 2 : index
    %c0_335 = arith.constant 0 : index
    %214 = vector.load %arg22[%c2_334, %c0_335] : memref<16x192xf32, #tpu.memory_space<vmem>>, vector<1x64xf32>
    tpu.vector_store %arg22[%c2_334, %c0_335], %213 {strides = array<i32>} : memref<16x192xf32, #tpu.memory_space<vmem>>, vector<1x64xf32>,
    %c2_336 = arith.constant 2 : index
    %c0_337 = arith.constant 0 : index
    %215 = vector.load %arg21[%c2_336, %c0_337] : memref<9x64xf32, #tpu.memory_space<vmem>>, vector<1x64xf32>
    %c2_338 = arith.constant 2 : index
    %c64_339 = arith.constant 64 : index
    %216 = vector.load %arg22[%c2_338, %c64_339] : memref<16x192xf32, #tpu.memory_space<vmem>>, vector<1x64xf32>
    tpu.vector_store %arg22[%c2_338, %c64_339], %215 {strides = array<i32>} : memref<16x192xf32, #tpu.memory_space<vmem>>, vector<1x64xf32>,
    %c2_340 = arith.constant 2 : index
    %c0_341 = arith.constant 0 : index
    %217 = vector.load %arg21[%c2_340, %c0_341] : memref<9x64xf32, #tpu.memory_space<vmem>>, vector<1x64xf32>
    %c2_342 = arith.constant 2 : index
    %c128_343 = arith.constant 128 : index
    %218 = vector.load %arg22[%c2_342, %c128_343] : memref<16x192xf32, #tpu.memory_space<vmem>>, vector<1x64xf32>
    tpu.vector_store %arg22[%c2_342, %c128_343], %217 {strides = array<i32>} : memref<16x192xf32, #tpu.memory_space<vmem>>, vector<1x64xf32>,
    %c2_344 = arith.constant 2 : index
    %c0_345 = arith.constant 0 : index
    %219 = vector.load %arg21[%c2_344, %c0_345] : memref<9x64xf32, #tpu.memory_space<vmem>>, vector<1x64xf32>
    %c3_346 = arith.constant 3 : index
    %c0_347 = arith.constant 0 : index
    %220 = vector.load %arg22[%c3_346, %c0_347] : memref<16x192xf32, #tpu.memory_space<vmem>>, vector<1x64xf32>
    tpu.vector_store %arg22[%c3_346, %c0_347], %219 {strides = array<i32>} : memref<16x192xf32, #tpu.memory_space<vmem>>, vector<1x64xf32>,
    %c2_348 = arith.constant 2 : index
    %c0_349 = arith.constant 0 : index
    %221 = vector.load %arg21[%c2_348, %c0_349] : memref<9x64xf32, #tpu.memory_space<vmem>>, vector<1x64xf32>
    %c3_350 = arith.constant 3 : index
    %c64_351 = arith.constant 64 : index
    %222 = vector.load %arg22[%c3_350, %c64_351] : memref<16x192xf32, #tpu.memory_space<vmem>>, vector<1x64xf32>
    tpu.vector_store %arg22[%c3_350, %c64_351], %221 {strides = array<i32>} : memref<16x192xf32, #tpu.memory_space<vmem>>, vector<1x64xf32>,
    %c3_352 = arith.constant 3 : index
    %c0_353 = arith.constant 0 : index
    %223 = vector.load %arg21[%c3_352, %c0_353] : memref<9x64xf32, #tpu.memory_space<vmem>>, vector<1x64xf32>
    %c3_354 = arith.constant 3 : index
    %c128_355 = arith.constant 128 : index
    %224 = vector.load %arg22[%c3_354, %c128_355] : memref<16x192xf32, #tpu.memory_space<vmem>>, vector<1x64xf32>
    tpu.vector_store %arg22[%c3_354, %c128_355], %223 {strides = array<i32>} : memref<16x192xf32, #tpu.memory_space<vmem>>, vector<1x64xf32>,
    %c2_356 = arith.constant 2 : index
    %c0_357 = arith.constant 0 : index
    %225 = vector.load %arg21[%c2_356, %c0_357] : memref<9x64xf32, #tpu.memory_space<vmem>>, vector<1x64xf32>
    %c4_358 = arith.constant 4 : index
    %c0_359 = arith.constant 0 : index
    %226 = vector.load %arg22[%c4_358, %c0_359] : memref<16x192xf32, #tpu.memory_space<vmem>>, vector<1x64xf32>
    tpu.vector_store %arg22[%c4_358, %c0_359], %225 {strides = array<i32>} : memref<16x192xf32, #tpu.memory_space<vmem>>, vector<1x64xf32>,
    %c3_360 = arith.constant 3 : index
    %c0_361 = arith.constant 0 : index
    %227 = vector.load %arg21[%c3_360, %c0_361] : memref<9x64xf32, #tpu.memory_space<vmem>>, vector<1x64xf32>
    %c4_362 = arith.constant 4 : index
    %c64_363 = arith.constant 64 : index
    %228 = vector.load %arg22[%c4_362, %c64_363] : memref<16x192xf32, #tpu.memory_space<vmem>>, vector<1x64xf32>
    tpu.vector_store %arg22[%c4_362, %c64_363], %227 {strides = array<i32>} : memref<16x192xf32, #tpu.memory_space<vmem>>, vector<1x64xf32>,
    %c3_364 = arith.constant 3 : index
    %c0_365 = arith.constant 0 : index
    %229 = vector.load %arg21[%c3_364, %c0_365] : memref<9x64xf32, #tpu.memory_space<vmem>>, vector<1x64xf32>
    %c4_366 = arith.constant 4 : index
    %c128_367 = arith.constant 128 : index
    %230 = vector.load %arg22[%c4_366, %c128_367] : memref<16x192xf32, #tpu.memory_space<vmem>>, vector<1x64xf32>
    tpu.vector_store %arg22[%c4_366, %c128_367], %229 {strides = array<i32>} : memref<16x192xf32, #tpu.memory_space<vmem>>, vector<1x64xf32>,
    %c3_368 = arith.constant 3 : index
    %c0_369 = arith.constant 0 : index
    %231 = vector.load %arg21[%c3_368, %c0_369] : memref<9x64xf32, #tpu.memory_space<vmem>>, vector<1x64xf32>
    %c5_370 = arith.constant 5 : index
    %c0_371 = arith.constant 0 : index
    %232 = vector.load %arg22[%c5_370, %c0_371] : memref<16x192xf32, #tpu.memory_space<vmem>>, vector<1x64xf32>
    tpu.vector_store %arg22[%c5_370, %c0_371], %231 {strides = array<i32>} : memref<16x192xf32, #tpu.memory_space<vmem>>, vector<1x64xf32>,
    %c3_372 = arith.constant 3 : index
    %c0_373 = arith.constant 0 : index
    %233 = vector.load %arg21[%c3_372, %c0_373] : memref<9x64xf32, #tpu.memory_space<vmem>>, vector<1x64xf32>
    %c5_374 = arith.constant 5 : index
    %c64_375 = arith.constant 64 : index
    %234 = vector.load %arg22[%c5_374, %c64_375] : memref<16x192xf32, #tpu.memory_space<vmem>>, vector<1x64xf32>
    tpu.vector_store %arg22[%c5_374, %c64_375], %233 {strides = array<i32>} : memref<16x192xf32, #tpu.memory_space<vmem>>, vector<1x64xf32>,
    %c4_376 = arith.constant 4 : index
    %c0_377 = arith.constant 0 : index
    %235 = vector.load %arg21[%c4_376, %c0_377] : memref<9x64xf32, #tpu.memory_space<vmem>>, vector<1x64xf32>
    %c5_378 = arith.constant 5 : index
    %c128_379 = arith.constant 128 : index
    %236 = vector.load %arg22[%c5_378, %c128_379] : memref<16x192xf32, #tpu.memory_space<vmem>>, vector<1x64xf32>
    tpu.vector_store %arg22[%c5_378, %c128_379], %235 {strides = array<i32>} : memref<16x192xf32, #tpu.memory_space<vmem>>, vector<1x64xf32>,
    %c3_380 = arith.constant 3 : index
    %c0_381 = arith.constant 0 : index
    %237 = vector.load %arg21[%c3_380, %c0_381] : memref<9x64xf32, #tpu.memory_space<vmem>>, vector<1x64xf32>
    %c6_382 = arith.constant 6 : index
    %c0_383 = arith.constant 0 : index
    %238 = vector.load %arg22[%c6_382, %c0_383] : memref<16x192xf32, #tpu.memory_space<vmem>>, vector<1x64xf32>
    tpu.vector_store %arg22[%c6_382, %c0_383], %237 {strides = array<i32>} : memref<16x192xf32, #tpu.memory_space<vmem>>, vector<1x64xf32>,
    %c4_384 = arith.constant 4 : index
    %c0_385 = arith.constant 0 : index
    %239 = vector.load %arg21[%c4_384, %c0_385] : memref<9x64xf32, #tpu.memory_space<vmem>>, vector<1x64xf32>
    %c6_386 = arith.constant 6 : index
    %c64_387 = arith.constant 64 : index
    %240 = vector.load %arg22[%c6_386, %c64_387] : memref<16x192xf32, #tpu.memory_space<vmem>>, vector<1x64xf32>
    tpu.vector_store %arg22[%c6_386, %c64_387], %239 {strides = array<i32>} : memref<16x192xf32, #tpu.memory_space<vmem>>, vector<1x64xf32>,
    %c4_388 = arith.constant 4 : index
    %c0_389 = arith.constant 0 : index
    %241 = vector.load %arg21[%c4_388, %c0_389] : memref<9x64xf32, #tpu.memory_space<vmem>>, vector<1x64xf32>
    %c6_390 = arith.constant 6 : index
    %c128_391 = arith.constant 128 : index
    %242 = vector.load %arg22[%c6_390, %c128_391] : memref<16x192xf32, #tpu.memory_space<vmem>>, vector<1x64xf32>
    tpu.vector_store %arg22[%c6_390, %c128_391], %241 {strides = array<i32>} : memref<16x192xf32, #tpu.memory_space<vmem>>, vector<1x64xf32>,
    %c4_392 = arith.constant 4 : index
    %c0_393 = arith.constant 0 : index
    %243 = vector.load %arg21[%c4_392, %c0_393] : memref<9x64xf32, #tpu.memory_space<vmem>>, vector<1x64xf32>
    %c7_394 = arith.constant 7 : index
    %c0_395 = arith.constant 0 : index
    %244 = vector.load %arg22[%c7_394, %c0_395] : memref<16x192xf32, #tpu.memory_space<vmem>>, vector<1x64xf32>
    tpu.vector_store %arg22[%c7_394, %c0_395], %243 {strides = array<i32>} : memref<16x192xf32, #tpu.memory_space<vmem>>, vector<1x64xf32>,
    %c4_396 = arith.constant 4 : index
    %c0_397 = arith.constant 0 : index
    %245 = vector.load %arg21[%c4_396, %c0_397] : memref<9x64xf32, #tpu.memory_space<vmem>>, vector<1x64xf32>
    %c7_398 = arith.constant 7 : index
    %c64_399 = arith.constant 64 : index
    %246 = vector.load %arg22[%c7_398, %c64_399] : memref<16x192xf32, #tpu.memory_space<vmem>>, vector<1x64xf32>
    tpu.vector_store %arg22[%c7_398, %c64_399], %245 {strides = array<i32>} : memref<16x192xf32, #tpu.memory_space<vmem>>, vector<1x64xf32>,
    %c5_400 = arith.constant 5 : index
    %c0_401 = arith.constant 0 : index
    %247 = vector.load %arg21[%c5_400, %c0_401] : memref<9x64xf32, #tpu.memory_space<vmem>>, vector<1x64xf32>
    %c7_402 = arith.constant 7 : index
    %c128_403 = arith.constant 128 : index
    %248 = vector.load %arg22[%c7_402, %c128_403] : memref<16x192xf32, #tpu.memory_space<vmem>>, vector<1x64xf32>
    tpu.vector_store %arg22[%c7_402, %c128_403], %247 {strides = array<i32>} : memref<16x192xf32, #tpu.memory_space<vmem>>, vector<1x64xf32>,
    %c4_404 = arith.constant 4 : index
    %c0_405 = arith.constant 0 : index
    %249 = vector.load %arg21[%c4_404, %c0_405] : memref<9x64xf32, #tpu.memory_space<vmem>>, vector<1x64xf32>
    %c8_406 = arith.constant 8 : index
    %c0_407 = arith.constant 0 : index
    %250 = vector.load %arg22[%c8_406, %c0_407] : memref<16x192xf32, #tpu.memory_space<vmem>>, vector<1x64xf32>
    tpu.vector_store %arg22[%c8_406, %c0_407], %249 {strides = array<i32>} : memref<16x192xf32, #tpu.memory_space<vmem>>, vector<1x64xf32>,
    %c5_408 = arith.constant 5 : index
    %c0_409 = arith.constant 0 : index
    %251 = vector.load %arg21[%c5_408, %c0_409] : memref<9x64xf32, #tpu.memory_space<vmem>>, vector<1x64xf32>
    %c8_410 = arith.constant 8 : index
    %c64_411 = arith.constant 64 : index
    %252 = vector.load %arg22[%c8_410, %c64_411] : memref<16x192xf32, #tpu.memory_space<vmem>>, vector<1x64xf32>
    tpu.vector_store %arg22[%c8_410, %c64_411], %251 {strides = array<i32>} : memref<16x192xf32, #tpu.memory_space<vmem>>, vector<1x64xf32>,
    %c5_412 = arith.constant 5 : index
    %c0_413 = arith.constant 0 : index
    %253 = vector.load %arg21[%c5_412, %c0_413] : memref<9x64xf32, #tpu.memory_space<vmem>>, vector<1x64xf32>
    %c8_414 = arith.constant 8 : index
    %c128_415 = arith.constant 128 : index
    %254 = vector.load %arg22[%c8_414, %c128_415] : memref<16x192xf32, #tpu.memory_space<vmem>>, vector<1x64xf32>
    tpu.vector_store %arg22[%c8_414, %c128_415], %253 {strides = array<i32>} : memref<16x192xf32, #tpu.memory_space<vmem>>, vector<1x64xf32>,
    %c5_416 = arith.constant 5 : index
    %c0_417 = arith.constant 0 : index
    %255 = vector.load %arg21[%c5_416, %c0_417] : memref<9x64xf32, #tpu.memory_space<vmem>>, vector<1x64xf32>
    %c9_418 = arith.constant 9 : index
    %c0_419 = arith.constant 0 : index
    %256 = vector.load %arg22[%c9_418, %c0_419] : memref<16x192xf32, #tpu.memory_space<vmem>>, vector<1x64xf32>
    tpu.vector_store %arg22[%c9_418, %c0_419], %255 {strides = array<i32>} : memref<16x192xf32, #tpu.memory_space<vmem>>, vector<1x64xf32>,
    %c5_420 = arith.constant 5 : index
    %c0_421 = arith.constant 0 : index
    %257 = vector.load %arg21[%c5_420, %c0_421] : memref<9x64xf32, #tpu.memory_space<vmem>>, vector<1x64xf32>
    %c9_422 = arith.constant 9 : index
    %c64_423 = arith.constant 64 : index
    %258 = vector.load %arg22[%c9_422, %c64_423] : memref<16x192xf32, #tpu.memory_space<vmem>>, vector<1x64xf32>
    tpu.vector_store %arg22[%c9_422, %c64_423], %257 {strides = array<i32>} : memref<16x192xf32, #tpu.memory_space<vmem>>, vector<1x64xf32>,
    %c6_424 = arith.constant 6 : index
    %c0_425 = arith.constant 0 : index
    %259 = vector.load %arg21[%c6_424, %c0_425] : memref<9x64xf32, #tpu.memory_space<vmem>>, vector<1x64xf32>
    %c9_426 = arith.constant 9 : index
    %c128_427 = arith.constant 128 : index
    %260 = vector.load %arg22[%c9_426, %c128_427] : memref<16x192xf32, #tpu.memory_space<vmem>>, vector<1x64xf32>
    tpu.vector_store %arg22[%c9_426, %c128_427], %259 {strides = array<i32>} : memref<16x192xf32, #tpu.memory_space<vmem>>, vector<1x64xf32>,
    %c5_428 = arith.constant 5 : index
    %c0_429 = arith.constant 0 : index
    %261 = vector.load %arg21[%c5_428, %c0_429] : memref<9x64xf32, #tpu.memory_space<vmem>>, vector<1x64xf32>
    %c10_430 = arith.constant 10 : index
    %c0_431 = arith.constant 0 : index
    %262 = vector.load %arg22[%c10_430, %c0_431] : memref<16x192xf32, #tpu.memory_space<vmem>>, vector<1x64xf32>
    tpu.vector_store %arg22[%c10_430, %c0_431], %261 {strides = array<i32>} : memref<16x192xf32, #tpu.memory_space<vmem>>, vector<1x64xf32>,
    %c6_432 = arith.constant 6 : index
    %c0_433 = arith.constant 0 : index
    %263 = vector.load %arg21[%c6_432, %c0_433] : memref<9x64xf32, #tpu.memory_space<vmem>>, vector<1x64xf32>
    %c10_434 = arith.constant 10 : index
    %c64_435 = arith.constant 64 : index
    %264 = vector.load %arg22[%c10_434, %c64_435] : memref<16x192xf32, #tpu.memory_space<vmem>>, vector<1x64xf32>
    tpu.vector_store %arg22[%c10_434, %c64_435], %263 {strides = array<i32>} : memref<16x192xf32, #tpu.memory_space<vmem>>, vector<1x64xf32>,
    %c6_436 = arith.constant 6 : index
    %c0_437 = arith.constant 0 : index
    %265 = vector.load %arg21[%c6_436, %c0_437] : memref<9x64xf32, #tpu.memory_space<vmem>>, vector<1x64xf32>
    %c10_438 = arith.constant 10 : index
    %c128_439 = arith.constant 128 : index
    %266 = vector.load %arg22[%c10_438, %c128_439] : memref<16x192xf32, #tpu.memory_space<vmem>>, vector<1x64xf32>
    tpu.vector_store %arg22[%c10_438, %c128_439], %265 {strides = array<i32>} : memref<16x192xf32, #tpu.memory_space<vmem>>, vector<1x64xf32>,
    %c6_440 = arith.constant 6 : index
    %c0_441 = arith.constant 0 : index
    %267 = vector.load %arg21[%c6_440, %c0_441] : memref<9x64xf32, #tpu.memory_space<vmem>>, vector<1x64xf32>
    %c11_442 = arith.constant 11 : index
    %c0_443 = arith.constant 0 : index
    %268 = vector.load %arg22[%c11_442, %c0_443] : memref<16x192xf32, #tpu.memory_space<vmem>>, vector<1x64xf32>
    tpu.vector_store %arg22[%c11_442, %c0_443], %267 {strides = array<i32>} : memref<16x192xf32, #tpu.memory_space<vmem>>, vector<1x64xf32>,
    %c6_444 = arith.constant 6 : index
    %c0_445 = arith.constant 0 : index
    %269 = vector.load %arg21[%c6_444, %c0_445] : memref<9x64xf32, #tpu.memory_space<vmem>>, vector<1x64xf32>
    %c11_446 = arith.constant 11 : index
    %c64_447 = arith.constant 64 : index
    %270 = vector.load %arg22[%c11_446, %c64_447] : memref<16x192xf32, #tpu.memory_space<vmem>>, vector<1x64xf32>
    tpu.vector_store %arg22[%c11_446, %c64_447], %269 {strides = array<i32>} : memref<16x192xf32, #tpu.memory_space<vmem>>, vector<1x64xf32>,
    %c7_448 = arith.constant 7 : index
    %c0_449 = arith.constant 0 : index
    %271 = vector.load %arg21[%c7_448, %c0_449] : memref<9x64xf32, #tpu.memory_space<vmem>>, vector<1x64xf32>
    %c11_450 = arith.constant 11 : index
    %c128_451 = arith.constant 128 : index
    %272 = vector.load %arg22[%c11_450, %c128_451] : memref<16x192xf32, #tpu.memory_space<vmem>>, vector<1x64xf32>
    tpu.vector_store %arg22[%c11_450, %c128_451], %271 {strides = array<i32>} : memref<16x192xf32, #tpu.memory_space<vmem>>, vector<1x64xf32>,
    %c6_452 = arith.constant 6 : index
    %c0_453 = arith.constant 0 : index
    %273 = vector.load %arg21[%c6_452, %c0_453] : memref<9x64xf32, #tpu.memory_space<vmem>>, vector<1x64xf32>
    %c12_454 = arith.constant 12 : index
    %c0_455 = arith.constant 0 : index
    %274 = vector.load %arg22[%c12_454, %c0_455] : memref<16x192xf32, #tpu.memory_space<vmem>>, vector<1x64xf32>
    tpu.vector_store %arg22[%c12_454, %c0_455], %273 {strides = array<i32>} : memref<16x192xf32, #tpu.memory_space<vmem>>, vector<1x64xf32>,
    %c7_456 = arith.constant 7 : index
    %c0_457 = arith.constant 0 : index
    %275 = vector.load %arg21[%c7_456, %c0_457] : memref<9x64xf32, #tpu.memory_space<vmem>>, vector<1x64xf32>
    %c12_458 = arith.constant 12 : index
    %c64_459 = arith.constant 64 : index
    %276 = vector.load %arg22[%c12_458, %c64_459] : memref<16x192xf32, #tpu.memory_space<vmem>>, vector<1x64xf32>
    tpu.vector_store %arg22[%c12_458, %c64_459], %275 {strides = array<i32>} : memref<16x192xf32, #tpu.memory_space<vmem>>, vector<1x64xf32>,
    %c7_460 = arith.constant 7 : index
    %c0_461 = arith.constant 0 : index
    %277 = vector.load %arg21[%c7_460, %c0_461] : memref<9x64xf32, #tpu.memory_space<vmem>>, vector<1x64xf32>
    %c12_462 = arith.constant 12 : index
    %c128_463 = arith.constant 128 : index
    %278 = vector.load %arg22[%c12_462, %c128_463] : memref<16x192xf32, #tpu.memory_space<vmem>>, vector<1x64xf32>
    tpu.vector_store %arg22[%c12_462, %c128_463], %277 {strides = array<i32>} : memref<16x192xf32, #tpu.memory_space<vmem>>, vector<1x64xf32>,
    %c7_464 = arith.constant 7 : index
    %c0_465 = arith.constant 0 : index
    %279 = vector.load %arg21[%c7_464, %c0_465] : memref<9x64xf32, #tpu.memory_space<vmem>>, vector<1x64xf32>
    %c13_466 = arith.constant 13 : index
    %c0_467 = arith.constant 0 : index
    %280 = vector.load %arg22[%c13_466, %c0_467] : memref<16x192xf32, #tpu.memory_space<vmem>>, vector<1x64xf32>
    tpu.vector_store %arg22[%c13_466, %c0_467], %279 {strides = array<i32>} : memref<16x192xf32, #tpu.memory_space<vmem>>, vector<1x64xf32>,
    %c7_468 = arith.constant 7 : index
    %c0_469 = arith.constant 0 : index
    %281 = vector.load %arg21[%c7_468, %c0_469] : memref<9x64xf32, #tpu.memory_space<vmem>>, vector<1x64xf32>
    %c13_470 = arith.constant 13 : index
    %c64_471 = arith.constant 64 : index
    %282 = vector.load %arg22[%c13_470, %c64_471] : memref<16x192xf32, #tpu.memory_space<vmem>>, vector<1x64xf32>
    tpu.vector_store %arg22[%c13_470, %c64_471], %281 {strides = array<i32>} : memref<16x192xf32, #tpu.memory_space<vmem>>, vector<1x64xf32>,
    %c8_472 = arith.constant 8 : index
    %c0_473 = arith.constant 0 : index
    %283 = vector.load %arg21[%c8_472, %c0_473] : memref<9x64xf32, #tpu.memory_space<vmem>>, vector<1x64xf32>
    %c13_474 = arith.constant 13 : index
    %c128_475 = arith.constant 128 : index
    %284 = vector.load %arg22[%c13_474, %c128_475] : memref<16x192xf32, #tpu.memory_space<vmem>>, vector<1x64xf32>
    tpu.vector_store %arg22[%c13_474, %c128_475], %283 {strides = array<i32>} : memref<16x192xf32, #tpu.memory_space<vmem>>, vector<1x64xf32>,
    %c7_476 = arith.constant 7 : index
    %c0_477 = arith.constant 0 : index
    %285 = vector.load %arg21[%c7_476, %c0_477] : memref<9x64xf32, #tpu.memory_space<vmem>>, vector<1x64xf32>
    %c14_478 = arith.constant 14 : index
    %c0_479 = arith.constant 0 : index
    %286 = vector.load %arg22[%c14_478, %c0_479] : memref<16x192xf32, #tpu.memory_space<vmem>>, vector<1x64xf32>
    tpu.vector_store %arg22[%c14_478, %c0_479], %285 {strides = array<i32>} : memref<16x192xf32, #tpu.memory_space<vmem>>, vector<1x64xf32>,
    %c8_480 = arith.constant 8 : index
    %c0_481 = arith.constant 0 : index
    %287 = vector.load %arg21[%c8_480, %c0_481] : memref<9x64xf32, #tpu.memory_space<vmem>>, vector<1x64xf32>
    %c14_482 = arith.constant 14 : index
    %c64_483 = arith.constant 64 : index
    %288 = vector.load %arg22[%c14_482, %c64_483] : memref<16x192xf32, #tpu.memory_space<vmem>>, vector<1x64xf32>
    tpu.vector_store %arg22[%c14_482, %c64_483], %287 {strides = array<i32>} : memref<16x192xf32, #tpu.memory_space<vmem>>, vector<1x64xf32>,
    %c8_484 = arith.constant 8 : index
    %c0_485 = arith.constant 0 : index
    %289 = vector.load %arg21[%c8_484, %c0_485] : memref<9x64xf32, #tpu.memory_space<vmem>>, vector<1x64xf32>
    %c14_486 = arith.constant 14 : index
    %c128_487 = arith.constant 128 : index
    %290 = vector.load %arg22[%c14_486, %c128_487] : memref<16x192xf32, #tpu.memory_space<vmem>>, vector<1x64xf32>
    tpu.vector_store %arg22[%c14_486, %c128_487], %289 {strides = array<i32>} : memref<16x192xf32, #tpu.memory_space<vmem>>, vector<1x64xf32>,
    %c8_488 = arith.constant 8 : index
    %c0_489 = arith.constant 0 : index
    %291 = vector.load %arg21[%c8_488, %c0_489] : memref<9x64xf32, #tpu.memory_space<vmem>>, vector<1x64xf32>
    %c15_490 = arith.constant 15 : index
    %c0_491 = arith.constant 0 : index
    %292 = vector.load %arg22[%c15_490, %c0_491] : memref<16x192xf32, #tpu.memory_space<vmem>>, vector<1x64xf32>
    tpu.vector_store %arg22[%c15_490, %c0_491], %291 {strides = array<i32>} : memref<16x192xf32, #tpu.memory_space<vmem>>, vector<1x64xf32>,
    %c8_492 = arith.constant 8 : index
    %c0_493 = arith.constant 0 : index
    %293 = vector.load %arg21[%c8_492, %c0_493] : memref<9x64xf32, #tpu.memory_space<vmem>>, vector<1x64xf32>
    %c15_494 = arith.constant 15 : index
    %c64_495 = arith.constant 64 : index
    %294 = vector.load %arg22[%c15_494, %c64_495] : memref<16x192xf32, #tpu.memory_space<vmem>>, vector<1x64xf32>
    tpu.vector_store %arg22[%c15_494, %c64_495], %293 {strides = array<i32>} : memref<16x192xf32, #tpu.memory_space<vmem>>, vector<1x64xf32>,
    %c0_496 = arith.constant 0 : index
    %c0_497 = arith.constant 0 : index
    %295 = vector.load %arg21[%c0_496, %c0_497] : memref<9x64xf32, #tpu.memory_space<vmem>>, vector<1x64xf32>
    %c15_498 = arith.constant 15 : index
    %c128_499 = arith.constant 128 : index
    %296 = vector.load %arg22[%c15_498, %c128_499] : memref<16x192xf32, #tpu.memory_space<vmem>>, vector<1x64xf32>
    tpu.vector_store %arg22[%c15_498, %c128_499], %295 {strides = array<i32>} : memref<16x192xf32, #tpu.memory_space<vmem>>, vector<1x64xf32>,
    %c0_500 = arith.constant 0 : index
    %c0_501 = arith.constant 0 : index
    %297 = vector.load %arg22[%c0_500, %c0_501] : memref<16x192xf32, #tpu.memory_space<vmem>>, vector<16x192xf32>
    %c0_502 = arith.constant 0 : index
    %c0_503 = arith.constant 0 : index
    %298 = vector.load %arg13[%c0_502, %c0_503] : memref<192x64xf32, #tpu.memory_space<vmem>>, vector<192x64xf32>
    %cst_504 = arith.constant dense<0.000000e+00> : vector<16x64xf32>
    %299 = tpu.matmul %297, %298, %cst_504 {dimension_numbers = #tpu.dot_dimension_numbers<[1], [0], [0], [1], [0, 0, 1, 1], [], []>} : vector<16x192xf32>, vector<192x64xf32>, vector<16x64xf32> -> vector<16x64xf32>
    %c0_505 = arith.constant 0 : index
    %c0_506 = arith.constant 0 : index
    %300 = vector.load %arg14[%c0_505, %c0_506] : memref<1x64xf32, #tpu.memory_space<vmem>>, vector<1x64xf32>
    %301 = vector.broadcast %300 : vector<1x64xf32> to vector<16x64xf32>
    %302 = arith.addf %299, %301 : vector<16x64xf32>
    %cst_507 = arith.constant 5.000000e-01 : f32
    %303 = vector.broadcast %cst_507 : f32 to vector<16x64xf32>
    %304 = arith.mulf %303, %302 : vector<16x64xf32>
    %305 = math.tanh %304 : vector<16x64xf32>
    %cst_508 = arith.constant 1.000000e+00 : f32
    %306 = vector.broadcast %cst_508 : f32 to vector<16x64xf32>
    %307 = arith.addf %305, %306 : vector<16x64xf32>
    %cst_509 = arith.constant 5.000000e-01 : f32
    %308 = vector.broadcast %cst_509 : f32 to vector<16x64xf32>
    %309 = arith.mulf %308, %307 : vector<16x64xf32>
    %310 = vector.extract_strided_slice %309 {offsets = [0, 0], sizes = [16, 16], strides = [1, 1]} : vector<16x64xf32> to vector<16x16xf32>
    %c0_510 = arith.constant 0 : index
    %c0_511 = arith.constant 0 : index
    %c0_512 = arith.constant 0 : index
    %c0_513 = arith.constant 0 : index
    %311 = vector.load %arg17[%c0_510, %c0_511, %c0_512, %c0_513] : memref<1x4x16x16xf32, #tpu.memory_space<vmem>>, vector<1x1x16x16xf32>
    %312 = vector.shape_cast %311 : vector<1x1x16x16xf32> to vector<16x16xf32>
    %313 = vector.shape_cast %310 : vector<16x16xf32> to vector<1x1x16x16xf32>
    tpu.vector_store %arg17[%c0_510, %c0_511, %c0_512, %c0_513], %313 {strides = array<i32>} : memref<1x4x16x16xf32, #tpu.memory_space<vmem>>, vector<1x1x16x16xf32>,
    %314 = vector.extract_strided_slice %309 {offsets = [0, 16], sizes = [16, 16], strides = [1, 1]} : vector<16x64xf32> to vector<16x16xf32>
    %c0_514 = arith.constant 0 : index
    %c1_515 = arith.constant 1 : index
    %c0_516 = arith.constant 0 : index
    %c0_517 = arith.constant 0 : index
    %315 = vector.load %arg17[%c0_514, %c1_515, %c0_516, %c0_517] : memref<1x4x16x16xf32, #tpu.memory_space<vmem>>, vector<1x1x16x16xf32>
    %316 = vector.shape_cast %315 : vector<1x1x16x16xf32> to vector<16x16xf32>
    %317 = vector.shape_cast %314 : vector<16x16xf32> to vector<1x1x16x16xf32>
    tpu.vector_store %arg17[%c0_514, %c1_515, %c0_516, %c0_517], %317 {strides = array<i32>} : memref<1x4x16x16xf32, #tpu.memory_space<vmem>>, vector<1x1x16x16xf32>,
    %318 = vector.extract_strided_slice %309 {offsets = [0, 32], sizes = [16, 16], strides = [1, 1]} : vector<16x64xf32> to vector<16x16xf32>
    %c0_518 = arith.constant 0 : index
    %c2_519 = arith.constant 2 : index
    %c0_520 = arith.constant 0 : index
    %c0_521 = arith.constant 0 : index
    %319 = vector.load %arg17[%c0_518, %c2_519, %c0_520, %c0_521] : memref<1x4x16x16xf32, #tpu.memory_space<vmem>>, vector<1x1x16x16xf32>
    %320 = vector.shape_cast %319 : vector<1x1x16x16xf32> to vector<16x16xf32>
    %321 = vector.shape_cast %318 : vector<16x16xf32> to vector<1x1x16x16xf32>
    tpu.vector_store %arg17[%c0_518, %c2_519, %c0_520, %c0_521], %321 {strides = array<i32>} : memref<1x4x16x16xf32, #tpu.memory_space<vmem>>, vector<1x1x16x16xf32>,
    %322 = vector.extract_strided_slice %309 {offsets = [0, 48], sizes = [16, 16], strides = [1, 1]} : vector<16x64xf32> to vector<16x16xf32>
    %c0_522 = arith.constant 0 : index
    %c3_523 = arith.constant 3 : index
    %c0_524 = arith.constant 0 : index
    %c0_525 = arith.constant 0 : index
    %323 = vector.load %arg17[%c0_522, %c3_523, %c0_524, %c0_525] : memref<1x4x16x16xf32, #tpu.memory_space<vmem>>, vector<1x1x16x16xf32>
    %324 = vector.shape_cast %323 : vector<1x1x16x16xf32> to vector<16x16xf32>
    %325 = vector.shape_cast %322 : vector<16x16xf32> to vector<1x1x16x16xf32>
    tpu.vector_store %arg17[%c0_522, %c3_523, %c0_524, %c0_525], %325 {strides = array<i32>} : memref<1x4x16x16xf32, #tpu.memory_space<vmem>>, vector<1x1x16x16xf32>,
    return
  }
  func.func @transform_0(%arg0: i32) -> (i32, i32, i32, i32) {
    %c0_i32 = arith.constant 0 : i32
    %c0_i32_0 = arith.constant 0 : i32
    %c0_i32_1 = arith.constant 0 : i32
    %c0_i32_2 = arith.constant 0 : i32
    return %arg0, %c0_i32, %c0_i32_0, %c0_i32_1 : i32, i32, i32, i32
  }
  func.func @transform_1(%arg0: i32) -> (i32, i32, i32) {
    %c0_i32 = arith.constant 0 : i32
    %c0_i32_0 = arith.constant 0 : i32
    %c0_i32_1 = arith.constant 0 : i32
    return %arg0, %c0_i32, %c0_i32_0 : i32, i32, i32
  }
  func.func @transform_2(%arg0: i32) -> (i32, i32) {
    %c0_i32 = arith.constant 0 : i32
    %c0_i32_0 = arith.constant 0 : i32
    %c0_i32_1 = arith.constant 0 : i32
    return %c0_i32, %c0_i32_0 : i32, i32
  }
  func.func @transform_3(%arg0: i32) -> (i32, i32) {
    %c0_i32 = arith.constant 0 : i32
    %c0_i32_0 = arith.constant 0 : i32
    %c0_i32_1 = arith.constant 0 : i32
    return %c0_i32, %c0_i32_0 : i32, i32
  }
  func.func @transform_4(%arg0: i32) -> (i32, i32) {
    %c0_i32 = arith.constant 0 : i32
    %c0_i32_0 = arith.constant 0 : i32
    %c0_i32_1 = arith.constant 0 : i32
    return %c0_i32, %c0_i32_0 : i32, i32
  }
  func.func @transform_5(%arg0: i32) -> (i32, i32) {
    %c0_i32 = arith.constant 0 : i32
    %c0_i32_0 = arith.constant 0 : i32
    %c0_i32_1 = arith.constant 0 : i32
    return %c0_i32, %c0_i32_0 : i32, i32
  }
  func.func @transform_6(%arg0: i32) -> (i32, i32) {
    %c0_i32 = arith.constant 0 : i32
    %c0_i32_0 = arith.constant 0 : i32
    %c0_i32_1 = arith.constant 0 : i32
    return %c0_i32, %c0_i32_0 : i32, i32
  }
  func.func @transform_7(%arg0: i32) -> (i32, i32) {
    %c0_i32 = arith.constant 0 : i32
    %c0_i32_0 = arith.constant 0 : i32
    %c0_i32_1 = arith.constant 0 : i32
    return %c0_i32, %c0_i32_0 : i32, i32
  }
  func.func @transform_8(%arg0: i32) -> (i32, i32) {
    %c0_i32 = arith.constant 0 : i32
    %c0_i32_0 = arith.constant 0 : i32
    %c0_i32_1 = arith.constant 0 : i32
    return %c0_i32, %c0_i32_0 : i32, i32
  }
  func.func @transform_9(%arg0: i32) -> (i32, i32) {
    %c0_i32 = arith.constant 0 : i32
    %c0_i32_0 = arith.constant 0 : i32
    %c0_i32_1 = arith.constant 0 : i32
    return %c0_i32, %c0_i32_0 : i32, i32
  }
  func.func @transform_10(%arg0: i32) -> (i32, i32) {
    %c0_i32 = arith.constant 0 : i32
    %c0_i32_0 = arith.constant 0 : i32
    %c0_i32_1 = arith.constant 0 : i32
    return %c0_i32, %c0_i32_0 : i32, i32
  }
  func.func @transform_11(%arg0: i32) -> (i32, i32) {
    %c0_i32 = arith.constant 0 : i32
    %c0_i32_0 = arith.constant 0 : i32
    %c0_i32_1 = arith.constant 0 : i32
    return %c0_i32, %c0_i32_0 : i32, i32
  }
  func.func @transform_12(%arg0: i32) -> (i32, i32) {
    %c0_i32 = arith.constant 0 : i32
    %c0_i32_0 = arith.constant 0 : i32
    %c0_i32_1 = arith.constant 0 : i32
    return %c0_i32, %c0_i32_0 : i32, i32
  }
  func.func @transform_13(%arg0: i32) -> (i32, i32) {
    %c0_i32 = arith.constant 0 : i32
    %c0_i32_0 = arith.constant 0 : i32
    %c0_i32_1 = arith.constant 0 : i32
    return %c0_i32, %c0_i32_0 : i32, i32
  }
  func.func @transform_14(%arg0: i32) -> (i32, i32, i32) {
    %c0_i32 = arith.constant 0 : i32
    %c0_i32_0 = arith.constant 0 : i32
    %c0_i32_1 = arith.constant 0 : i32
    return %arg0, %c0_i32, %c0_i32_0 : i32, i32, i32
  }
  func.func @transform_15(%arg0: i32) -> (i32, i32, i32) {
    %c0_i32 = arith.constant 0 : i32
    %c0_i32_0 = arith.constant 0 : i32
    %c0_i32_1 = arith.constant 0 : i32
    return %arg0, %c0_i32, %c0_i32_0 : i32, i32, i32
  }
  func.func @transform_16(%arg0: i32) -> (i32, i32, i32, i32) {
    %c0_i32 = arith.constant 0 : i32
    %c0_i32_0 = arith.constant 0 : i32
    %c0_i32_1 = arith.constant 0 : i32
    %c0_i32_2 = arith.constant 0 : i32
    return %arg0, %c0_i32, %c0_i32_0, %c0_i32_1 : i32, i32, i32, i32
  }
}

</mosaic_0001>

<llo_original>
// kernel: vae_forward.1
$region0: #{vae_forward.1}
  #allocation0 [shape = 'u32[]', space=smem, size = 0x4, offset = 0x4, fixed_abs, tag = 'smem constant byte address 0x4 - core index']
  #allocation1 [shape = 'u32[72,128]{1,0:T(1,128)}', space=vmem, size = 0x9000, scoped, tag = 'internal scratch']
  #allocation2 [shape = 'f32[17,64]{1,0:T(8,128)}', space=vmem, size = 0x3000, scoped, tag = 'scratch operand']
  #allocation3 [shape = 'f32[9,64]{1,0:T(8,128)}', space=vmem, size = 0x2000, scoped, tag = 'scratch operand']
  #allocation4 [shape = 'f32[5,64]{1,0:T(8,128)}', space=vmem, size = 0x1000, scoped, tag = 'scratch operand']
  #allocation5 [shape = 'f32[9,64]{1,0:T(8,128)}', space=vmem, size = 0x2000, scoped, tag = 'scratch operand']
  #allocation6 [shape = 'f32[16,192]{1,0:T(8,128)}', space=vmem, size = 0x4000, scoped, tag = 'scratch operand']
  %s0 = inlined_call_operand.vmem [shape: f32[2,4,16,16], index: 0, kind: input, shape index: {}]
  %s1 = inlined_call_operand.vmem [shape: f32[2,1,32], index: 1, kind: input, shape index: {}]
  %s2 = inlined_call_operand.vmem [shape: f32[192,64], index: 2, kind: input, shape index: {}]
  %s3 = inlined_call_operand.vmem [shape: f32[1,64], index: 3, kind: input, shape index: {}]
  %s4 = inlined_call_operand.vmem [shape: f32[192,64], index: 4, kind: input, shape index: {}]
  %s5 = inlined_call_operand.vmem [shape: f32[1,64], index: 5, kind: input, shape index: {}]
  %s6 = inlined_call_operand.vmem [shape: f32[256,64], index: 6, kind: input, shape index: {}]
  %s7 = inlined_call_operand.vmem [shape: f32[1,64], index: 7, kind: input, shape index: {}]
  %s8 = inlined_call_operand.vmem [shape: f32[32,256], index: 8, kind: input, shape index: {}]
  %s9 = inlined_call_operand.vmem [shape: f32[1,256], index: 9, kind: input, shape index: {}]
  %s10 = inlined_call_operand.vmem [shape: f32[192,64], index: 10, kind: input, shape index: {}]
  %s11 = inlined_call_operand.vmem [shape: f32[1,64], index: 11, kind: input, shape index: {}]
  %s12 = inlined_call_operand.vmem [shape: f32[192,64], index: 12, kind: input, shape index: {}]
  %s13 = inlined_call_operand.vmem [shape: f32[1,64], index: 13, kind: input, shape index: {}]
  %s14 = inlined_call_operand.hbm [shape: f32[2,1,32], index: 14, kind: output, shape index: {0}]
  %s15 = inlined_call_operand.hbm [shape: f32[2,1,32], index: 15, kind: output, shape index: {1}]
  %s16 = inlined_call_operand.hbm [shape: f32[2,4,16,16], index: 16, kind: output, shape index: {2}]
  %17 = xla_tuple %s14, %s15, %s16
  %s18 = sld [smem:[#allocation0]]
  $region105: #{vae_forward.1} parent=0
    _
  %s20 = ssub.s32 1, %s18
  %s21 = scalar_select 0, %s20, %s18
  $region1: #{vae_forward.1} parent=0
    #allocation7 [shape = 'u8[1024]{0}', space=vmem, size = 0x400, scoped, tag = 'output window, operand 0']
    #allocation8 [shape = 's32[2]{0}', space=sflag, size = 0x8, scoped, tag = 'scoped memory for vae_forward.1']
    #allocation9 [shape = 'u8[1024]{0}', space=vmem, size = 0x400, scoped, tag = 'output window, operand 1']
    #allocation10 [shape = 's32[2]{0}', space=sflag, size = 0x8, scoped, tag = 'scoped memory for vae_forward.1']
    #allocation11 [shape = 'u8[65536]{0}', space=vmem, size = 0x10000, scoped, tag = 'output window, operand 2']
    %22 = vsyncpa [#allocation8], 0
    %s23 = scalar_lea.sflag [#allocation8], 1
    %24 = vsyncpa %s23, 0
    %25 = vsyncpa [#allocation10], 0
    %s26 = scalar_lea.sflag [#allocation10], 1
    %27 = vsyncpa %s26, 0
    loop: start=0, step=1, limit=4
    $region2: #{vae_forward.1} parent=1 // loop_pre_header
      _
    $region3: #{vae_forward.1} parent=1 // loop_header
      %s29 = sphi 0, %s33
      %p30 = scmp.ge.s32.totalorder %s29, 4
      %s39 = sphi 0, %s41
      %s42 = sphi 0, %s39
      %s43 = sphi 0, %s42
      %s59 = sphi 0, %s43
      %s65 = sphi 0, %s67
      %s68 = sphi 0, %s65
      %s69 = sphi 0, %s68
      %s85 = sphi 0, %s69
      %s89 = sphi 0, %s89
      %s91 = sphi 0, %s89
      %s92 = sphi 0, %s91
      %s106 = sphi 0, %s92
      %s110 = sphi 0, %s110
      %s112 = sphi 0, %s110
      %s113 = sphi 0, %s112
      %s127 = sphi 0, %s113
      %s131 = sphi 0, %s131
      %s133 = sphi 0, %s131
      %s134 = sphi 0, %s133
      %s148 = sphi 0, %s134
      %s152 = sphi 0, %s152
      %s154 = sphi 0, %s152
      %s155 = sphi 0, %s154
      %s169 = sphi 0, %s155
      %s173 = sphi 0, %s173
      %s175 = sphi 0, %s173
      %s176 = sphi 0, %s175
      %s190 = sphi 0, %s176
      %s194 = sphi 0, %s194
      %s196 = sphi 0, %s194
      %s197 = sphi 0, %s196
      %s211 = sphi 0, %s197
      %s215 = sphi 0, %s215
      %s217 = sphi 0, %s215
      %s218 = sphi 0, %s217
      %s232 = sphi 0, %s218
      %s236 = sphi 0, %s236
      %s238 = sphi 0, %s236
      %s239 = sphi 0, %s238
      %s253 = sphi 0, %s239
      %s257 = sphi 0, %s257
      %s259 = sphi 0, %s257
      %s260 = sphi 0, %s259
      %s274 = sphi 0, %s260
      %s278 = sphi 0, %s278
      %s280 = sphi 0, %s278
      %s281 = sphi 0, %s280
      %s295 = sphi 0, %s281
      %s299 = sphi 0, %s299
      %s301 = sphi 0, %s299
      %s302 = sphi 0, %s301
      %s316 = sphi 0, %s302
      %s320 = sphi 0, %s320
      %s322 = sphi 0, %s320
      %s323 = sphi 0, %s322
      %s337 = sphi 0, %s323
      %s343 = sphi 0, %s345
      %s346 = sphi 0, %s343
      %s347 = sphi 0, %s346
      %s363 = sphi 0, %s347
      %s369 = sphi 0, %s371
      %s372 = sphi 0, %s369
      %s373 = sphi 0, %s372
      %s389 = sphi 0, %s373
      %s395 = sphi 0, %s397
      %s398 = sphi 0, %s395
      %s399 = sphi 0, %s398
      %s415 = sphi 0, %s399
    $region4: #{vae_forward.1} parent=1 // loop_header_branch
      %32 = sbr.rel (%p30) target = $region8
    $region5: #{vae_forward.1} parent=1 // loop_body
      %s34 = ssub.s32 %s29, 1
      %s35 = ssub.s32 %s29, 2
      %s36 = sadd.s32 %s29, 1
      %s37 = ssub.s32 %s29, %s36
      %p38 = scmp.eq.s32.totalorder %s37, 0
      %s40 = sadd.s32 %s39, 1
      %s41 = scalar_select %p38, %s39, %s40
      %p44 = pneg %p38
      %p45 = scmp.eq.s32.totalorder %s29, 1
      %p46 = por %p44, %p45
      %p47 = scmp.ne.s32.totalorder %s39, %s42
      %p48 = scmp.eq.s32.totalorder %s29, 0
      %p49 = por %p47, %p48
      %p50 = scmp.ne.s32.totalorder %s39, %s42
      %p51 = scmp.eq.s32.totalorder %s34, 1
      %p52 = por %p50, %p51
      %p53 = scmp.ne.s32.totalorder %s42, %s43
      %p54 = scmp.eq.s32.totalorder %s34, 0
      %p55 = por %p53, %p54
      %p56 = scmp.ne.s32.totalorder %s42, %s43
      %p57 = scmp.eq.s32.totalorder %s35, 1
      %p58 = por %p56, %p57
      %p60 = scmp.ne.s32.totalorder %s43, %s59
      %p61 = scmp.eq.s32.totalorder %s35, 0
      %p62 = por %p60, %p61
      %s63 = ssub.s32 %s29, %s36
      %p64 = scmp.eq.s32.totalorder %s63, 0
      %s66 = sadd.s32 %s65, 1
      %s67 = scalar_select %p64, %s65, %s66
      %p70 = pneg %p64
      %p71 = scmp.eq.s32.totalorder %s29, 1
      %p72 = por %p70, %p71
      %p73 = scmp.ne.s32.totalorder %s65, %s68
      %p74 = scmp.eq.s32.totalorder %s29, 0
      %p75 = por %p73, %p74
      %p76 = scmp.ne.s32.totalorder %s65, %s68
      %p77 = scmp.eq.s32.totalorder %s34, 1
      %p78 = por %p76, %p77
      %p79 = scmp.ne.s32.totalorder %s68, %s69
      %p80 = scmp.eq.s32.totalorder %s34, 0
      %p81 = por %p79, %p80
      %p82 = scmp.ne.s32.totalorder %s68, %s69
      %p83 = scmp.eq.s32.totalorder %s35, 1
      %p84 = por %p82, %p83
      %p86 = scmp.ne.s32.totalorder %s69, %s85
      %p87 = scmp.eq.s32.totalorder %s35, 0
      %p88 = por %p86, %p87
      %s90 = sadd.s32 %s89, 1
      %p93 = scmp.eq.s32.totalorder %s29, 1
      %p94 = scmp.ne.s32.totalorder %s89, %s91
      %p95 = scmp.eq.s32.totalorder %s29, 0
      %p96 = por %p94, %p95
      %p97 = scmp.ne.s32.totalorder %s89, %s91
      %p98 = scmp.eq.s32.totalorder %s34, 1
      %p99 = por %p97, %p98
      %p100 = scmp.ne.s32.totalorder %s91, %s92
      %p101 = scmp.eq.s32.totalorder %s34, 0
      %p102 = por %p100, %p101
      %p103 = scmp.ne.s32.totalorder %s91, %s92
      %p104 = scmp.eq.s32.totalorder %s35, 1
      %p105 = por %p103, %p104
      %p107 = scmp.ne.s32.totalorder %s92, %s106
      %p108 = scmp.eq.s32.totalorder %s35, 0
      %p109 = por %p107, %p108
      %s111 = sadd.s32 %s110, 1
      %p114 = scmp.eq.s32.totalorder %s29, 1
      %p115 = scmp.ne.s32.totalorder %s110, %s112
      %p116 = scmp.eq.s32.totalorder %s29, 0
      %p117 = por %p115, %p116
      %p118 = scmp.ne.s32.totalorder %s110, %s112
      %p119 = scmp.eq.s32.totalorder %s34, 1
      %p120 = por %p118, %p119
      %p121 = scmp.ne.s32.totalorder %s112, %s113
      %p122 = scmp.eq.s32.totalorder %s34, 0
      %p123 = por %p121, %p122
      %p124 = scmp.ne.s32.totalorder %s112, %s113
      %p125 = scmp.eq.s32.totalorder %s35, 1
      %p126 = por %p124, %p125
      %p128 = scmp.ne.s32.totalorder %s113, %s127
      %p129 = scmp.eq.s32.totalorder %s35, 0
      %p130 = por %p128, %p129
      %s132 = sadd.s32 %s131, 1
      %p135 = scmp.eq.s32.totalorder %s29, 1
      %p136 = scmp.ne.s32.totalorder %s131, %s133
      %p137 = scmp.eq.s32.totalorder %s29, 0
      %p138 = por %p136, %p137
      %p139 = scmp.ne.s32.totalorder %s131, %s133
      %p140 = scmp.eq.s32.totalorder %s34, 1
      %p141 = por %p139, %p140
      %p142 = scmp.ne.s32.totalorder %s133, %s134
      %p143 = scmp.eq.s32.totalorder %s34, 0
      %p144 = por %p142, %p143
      %p145 = scmp.ne.s32.totalorder %s133, %s134
      %p146 = scmp.eq.s32.totalorder %s35, 1
      %p147 = por %p145, %p146
      %p149 = scmp.ne.s32.totalorder %s134, %s148
      %p150 = scmp.eq.s32.totalorder %s35, 0
      %p151 = por %p149, %p150
      %s153 = sadd.s32 %s152, 1
      %p156 = scmp.eq.s32.totalorder %s29, 1
      %p157 = scmp.ne.s32.totalorder %s152, %s154
      %p158 = scmp.eq.s32.totalorder %s29, 0
      %p159 = por %p157, %p158
      %p160 = scmp.ne.s32.totalorder %s152, %s154
      %p161 = scmp.eq.s32.totalorder %s34, 1
      %p162 = por %p160, %p161
      %p163 = scmp.ne.s32.totalorder %s154, %s155
      %p164 = scmp.eq.s32.totalorder %s34, 0
      %p165 = por %p163, %p164
      %p166 = scmp.ne.s32.totalorder %s154, %s155
      %p167 = scmp.eq.s32.totalorder %s35, 1
      %p168 = por %p166, %p167
      %p170 = scmp.ne.s32.totalorder %s155, %s169
      %p171 = scmp.eq.s32.totalorder %s35, 0
      %p172 = por %p170, %p171
      %s174 = sadd.s32 %s173, 1
      %p177 = scmp.eq.s32.totalorder %s29, 1
      %p178 = scmp.ne.s32.totalorder %s173, %s175
      %p179 = scmp.eq.s32.totalorder %s29, 0
      %p180 = por %p178, %p179
      %p181 = scmp.ne.s32.totalorder %s173, %s175
      %p182 = scmp.eq.s32.totalorder %s34, 1
      %p183 = por %p181, %p182
      %p184 = scmp.ne.s32.totalorder %s175, %s176
      %p185 = scmp.eq.s32.totalorder %s34, 0
      %p186 = por %p184, %p185
      %p187 = scmp.ne.s32.totalorder %s175, %s176
      %p188 = scmp.eq.s32.totalorder %s35, 1
      %p189 = por %p187, %p188
      %p191 = scmp.ne.s32.totalorder %s176, %s190
      %p192 = scmp.eq.s32.totalorder %s35, 0
      %p193 = por %p191, %p192
      %s195 = sadd.s32 %s194, 1
      %p198 = scmp.eq.s32.totalorder %s29, 1
      %p199 = scmp.ne.s32.totalorder %s194, %s196
      %p200 = scmp.eq.s32.totalorder %s29, 0
      %p201 = por %p199, %p200
      %p202 = scmp.ne.s32.totalorder %s194, %s196
      %p203 = scmp.eq.s32.totalorder %s34, 1
      %p204 = por %p202, %p203
      %p205 = scmp.ne.s32.totalorder %s196, %s197
      %p206 = scmp.eq.s32.totalorder %s34, 0
      %p207 = por %p205, %p206
      %p208 = scmp.ne.s32.totalorder %s196, %s197
      %p209 = scmp.eq.s32.totalorder %s35, 1
      %p210 = por %p208, %p209
      %p212 = scmp.ne.s32.totalorder %s197, %s211
      %p213 = scmp.eq.s32.totalorder %s35, 0
      %p214 = por %p212, %p213
      %s216 = sadd.s32 %s215, 1
      %p219 = scmp.eq.s32.totalorder %s29, 1
      %p220 = scmp.ne.s32.totalorder %s215, %s217
      %p221 = scmp.eq.s32.totalorder %s29, 0
      %p222 = por %p220, %p221
      %p223 = scmp.ne.s32.totalorder %s215, %s217
      %p224 = scmp.eq.s32.totalorder %s34, 1
      %p225 = por %p223, %p224
      %p226 = scmp.ne.s32.totalorder %s217, %s218
      %p227 = scmp.eq.s32.totalorder %s34, 0
      %p228 = por %p226, %p227
      %p229 = scmp.ne.s32.totalorder %s217, %s218
      %p230 = scmp.eq.s32.totalorder %s35, 1
      %p231 = por %p229, %p230
      %p233 = scmp.ne.s32.totalorder %s218, %s232
      %p234 = scmp.eq.s32.totalorder %s35, 0
      %p235 = por %p233, %p234
      %s237 = sadd.s32 %s236, 1
      %p240 = scmp.eq.s32.totalorder %s29, 1
      %p241 = scmp.ne.s32.totalorder %s236, %s238
      %p242 = scmp.eq.s32.totalorder %s29, 0
      %p243 = por %p241, %p242
      %p244 = scmp.ne.s32.totalorder %s236, %s238
      %p245 = scmp.eq.s32.totalorder %s34, 1
      %p246 = por %p244, %p245
      %p247 = scmp.ne.s32.totalorder %s238, %s239
      %p248 = scmp.eq.s32.totalorder %s34, 0
      %p249 = por %p247, %p248
      %p250 = scmp.ne.s32.totalorder %s238, %s239
      %p251 = scmp.eq.s32.totalorder %s35, 1
      %p252 = por %p250, %p251
      %p254 = scmp.ne.s32.totalorder %s239, %s253
      %p255 = scmp.eq.s32.totalorder %s35, 0
      %p256 = por %p254, %p255
      %s258 = sadd.s32 %s257, 1
      %p261 = scmp.eq.s32.totalorder %s29, 1
      %p262 = scmp.ne.s32.totalorder %s257, %s259
      %p263 = scmp.eq.s32.totalorder %s29, 0
      %p264 = por %p262, %p263
      %p265 = scmp.ne.s32.totalorder %s257, %s259
      %p266 = scmp.eq.s32.totalorder %s34, 1
      %p267 = por %p265, %p266
      %p268 = scmp.ne.s32.totalorder %s259, %s260
      %p269 = scmp.eq.s32.totalorder %s34, 0
      %p270 = por %p268, %p269
      %p271 = scmp.ne.s32.totalorder %s259, %s260
      %p272 = scmp.eq.s32.totalorder %s35, 1
      %p273 = por %p271, %p272
      %p275 = scmp.ne.s32.totalorder %s260, %s274
      %p276 = scmp.eq.s32.totalorder %s35, 0
      %p277 = por %p275, %p276
      %s279 = sadd.s32 %s278, 1
      %p282 = scmp.eq.s32.totalorder %s29, 1
      %p283 = scmp.ne.s32.totalorder %s278, %s280
      %p284 = scmp.eq.s32.totalorder %s29, 0
      %p285 = por %p283, %p284
      %p286 = scmp.ne.s32.totalorder %s278, %s280
      %p287 = scmp.eq.s32.totalorder %s34, 1
      %p288 = por %p286, %p287
      %p289 = scmp.ne.s32.totalorder %s280, %s281
      %p290 = scmp.eq.s32.totalorder %s34, 0
      %p291 = por %p289, %p290
      %p292 = scmp.ne.s32.totalorder %s280, %s281
      %p293 = scmp.eq.s32.totalorder %s35, 1
      %p294 = por %p292, %p293
      %p296 = scmp.ne.s32.totalorder %s281, %s295
      %p297 = scmp.eq.s32.totalorder %s35, 0
      %p298 = por %p296, %p297
      %s300 = sadd.s32 %s299, 1
      %p303 = scmp.eq.s32.totalorder %s29, 1
      %p304 = scmp.ne.s32.totalorder %s299, %s301
      %p305 = scmp.eq.s32.totalorder %s29, 0
      %p306 = por %p304, %p305
      %p307 = scmp.ne.s32.totalorder %s299, %s301
      %p308 = scmp.eq.s32.totalorder %s34, 1
      %p309 = por %p307, %p308
      %p310 = scmp.ne.s32.totalorder %s301, %s302
      %p311 = scmp.eq.s32.totalorder %s34, 0
      %p312 = por %p310, %p311
      %p313 = scmp.ne.s32.totalorder %s301, %s302
      %p314 = scmp.eq.s32.totalorder %s35, 1
      %p315 = por %p313, %p314
      %p317 = scmp.ne.s32.totalorder %s302, %s316
      %p318 = scmp.eq.s32.totalorder %s35, 0
      %p319 = por %p317, %p318
      %s321 = sadd.s32 %s320, 1
      %p324 = scmp.eq.s32.totalorder %s29, 1
      %p325 = scmp.ne.s32.totalorder %s320, %s322
      %p326 = scmp.eq.s32.totalorder %s29, 0
      %p327 = por %p325, %p326
      %p328 = scmp.ne.s32.totalorder %s320, %s322
      %p329 = scmp.eq.s32.totalorder %s34, 1
      %p330 = por %p328, %p329
      %p331 = scmp.ne.s32.totalorder %s322, %s323
      %p332 = scmp.eq.s32.totalorder %s34, 0
      %p333 = por %p331, %p332
      %p334 = scmp.ne.s32.totalorder %s322, %s323
      %p335 = scmp.eq.s32.totalorder %s35, 1
      %p336 = por %p334, %p335
      %p338 = scmp.ne.s32.totalorder %s323, %s337
      %p339 = scmp.eq.s32.totalorder %s35, 0
      %p340 = por %p338, %p339
      %s341 = ssub.s32 %s29, %s36
      %p342 = scmp.eq.s32.totalorder %s341, 0
      %s344 = sadd.s32 %s343, 1
      %s345 = scalar_select %p342, %s343, %s344
      %p348 = pneg %p342
      %p349 = scmp.eq.s32.totalorder %s29, 1
      %p350 = por %p348, %p349
      %p351 = scmp.ne.s32.totalorder %s343, %s346
      %p352 = scmp.eq.s32.totalorder %s29, 0
      %p353 = por %p351, %p352
      %p354 = scmp.ne.s32.totalorder %s343, %s346
      %p355 = scmp.eq.s32.totalorder %s34, 1
      %p356 = por %p354, %p355
      %p357 = scmp.ne.s32.totalorder %s346, %s347
      %p358 = scmp.eq.s32.totalorder %s34, 0
      %p359 = por %p357, %p358
      %p360 = scmp.ne.s32.totalorder %s346, %s347
      %p361 = scmp.eq.s32.totalorder %s35, 1
      %p362 = por %p360, %p361
      %p364 = scmp.ne.s32.totalorder %s347, %s363
      %p365 = scmp.eq.s32.totalorder %s35, 0
      %p366 = por %p364, %p365
      %s367 = ssub.s32 %s29, %s36
      %p368 = scmp.eq.s32.totalorder %s367, 0
      %s370 = sadd.s32 %s369, 1
      %s371 = scalar_select %p368, %s369, %s370
      %p374 = pneg %p368
      %p375 = scmp.eq.s32.totalorder %s29, 1
      %p376 = por %p374, %p375
      %p377 = scmp.ne.s32.totalorder %s369, %s372
      %p378 = scmp.eq.s32.totalorder %s29, 0
      %p379 = por %p377, %p378
      %p380 = scmp.ne.s32.totalorder %s369, %s372
      %p381 = scmp.eq.s32.totalorder %s34, 1
      %p382 = por %p380, %p381
      %p383 = scmp.ne.s32.totalorder %s372, %s373
      %p384 = scmp.eq.s32.totalorder %s34, 0
      %p385 = por %p383, %p384
      %p386 = scmp.ne.s32.totalorder %s372, %s373
      %p387 = scmp.eq.s32.totalorder %s35, 1
      %p388 = por %p386, %p387
      %p390 = scmp.ne.s32.totalorder %s373, %s389
      %p391 = scmp.eq.s32.totalorder %s35, 0
      %p392 = por %p390, %p391
      %s393 = ssub.s32 %s29, %s36
      %p394 = scmp.eq.s32.totalorder %s393, 0
      %s396 = sadd.s32 %s395, 1
      %s397 = scalar_select %p394, %s395, %s396
      %p400 = pneg %p394
      %p401 = scmp.eq.s32.totalorder %s29, 1
      %p402 = por %p400, %p401
      %p403 = scmp.ne.s32.totalorder %s395, %s398
      %p404 = scmp.eq.s32.totalorder %s29, 0
      %p405 = por %p403, %p404
      %p406 = scmp.ne.s32.totalorder %s395, %s398
      %p407 = scmp.eq.s32.totalorder %s34, 1
      %p408 = por %p406, %p407
      %p409 = scmp.ne.s32.totalorder %s398, %s399
      %p410 = scmp.eq.s32.totalorder %s34, 0
      %p411 = por %p409, %p410
      %p412 = scmp.ne.s32.totalorder %s398, %s399
      %p413 = scmp.eq.s32.totalorder %s35, 1
      %p414 = por %p412, %p413
      %p416 = scmp.ne.s32.totalorder %s399, %s415
      %p417 = scmp.eq.s32.totalorder %s35, 0
      %p418 = por %p416, %p417
      %p419 = scmp.le.s32.totalorder 1, %s29
      %p420 = scmp.lt.s32.totalorder %s29, 3
      %p421 = pnand %p419, %p420
      %p422 = pneg %p421
      // Predicated region
      $region9: #{vae_forward.1} parent=5 // pred_check
        _
      $region10: #{vae_forward.1} parent=5 // pred_check_branch
        %424 = sbr.rel (%p421) target = $region12
      $region11: #{vae_forward.1} parent=5 // pred_region
        %s425 = ssub.s32 %s29, 1
        // Predicated region
        $region13: #{vae_forward.1} parent=11 // pred_check
          %p426 = pneg %p102
        $region14: #{vae_forward.1} parent=11 // pred_check_branch
          %428 = sbr.rel (%p426) target = $region16
        $region15: #{vae_forward.1} parent=11 // pred_region
          _
        $region16: #{vae_forward.1} parent=11 // pred_fallthru
          _
        // Predicated region
        $region17: #{vae_forward.1} parent=11 // pred_check
          %p429 = pneg %p123
        $region18: #{vae_forward.1} parent=11 // pred_check_branch
          %431 = sbr.rel (%p429) target = $region20
        $region19: #{vae_forward.1} parent=11 // pred_region
          _
        $region20: #{vae_forward.1} parent=11 // pred_fallthru
          _
        // Predicated region
        $region21: #{vae_forward.1} parent=11 // pred_check
          %p432 = pneg %p144
        $region22: #{vae_forward.1} parent=11 // pred_check_branch
          %434 = sbr.rel (%p432) target = $region24
        $region23: #{vae_forward.1} parent=11 // pred_region
          _
        $region24: #{vae_forward.1} parent=11 // pred_fallthru
          _
        // Predicated region
        $region25: #{vae_forward.1} parent=11 // pred_check
          %p435 = pneg %p165
        $region26: #{vae_forward.1} parent=11 // pred_check_branch
          %437 = sbr.rel (%p435) target = $region28
        $region27: #{vae_forward.1} parent=11 // pred_region
          _
        $region28: #{vae_forward.1} parent=11 // pred_fallthru
          _
        // Predicated region
        $region29: #{vae_forward.1} parent=11 // pred_check
          %p438 = pneg %p186
        $region30: #{vae_forward.1} parent=11 // pred_check_branch
          %440 = sbr.rel (%p438) target = $region32
        $region31: #{vae_forward.1} parent=11 // pred_region
          _
        $region32: #{vae_forward.1} parent=11 // pred_fallthru
          _
        // Predicated region
        $region33: #{vae_forward.1} parent=11 // pred_check
          %p441 = pneg %p207
        $region34: #{vae_forward.1} parent=11 // pred_check_branch
          %443 = sbr.rel (%p441) target = $region36
        $region35: #{vae_forward.1} parent=11 // pred_region
          _
        $region36: #{vae_forward.1} parent=11 // pred_fallthru
          _
        // Predicated region
        $region37: #{vae_forward.1} parent=11 // pred_check
          %p444 = pneg %p228
        $region38: #{vae_forward.1} parent=11 // pred_check_branch
          %446 = sbr.rel (%p444) target = $region40
        $region39: #{vae_forward.1} parent=11 // pred_region
          _
        $region40: #{vae_forward.1} parent=11 // pred_fallthru
          _
        // Predicated region
        $region41: #{vae_forward.1} parent=11 // pred_check
          %p447 = pneg %p249
        $region42: #{vae_forward.1} parent=11 // pred_check_branch
          %449 = sbr.rel (%p447) target = $region44
        $region43: #{vae_forward.1} parent=11 // pred_region
          _
        $region44: #{vae_forward.1} parent=11 // pred_fallthru
          _
        // Predicated region
        $region45: #{vae_forward.1} parent=11 // pred_check
          %p450 = pneg %p270
        $region46: #{vae_forward.1} parent=11 // pred_check_branch
          %452 = sbr.rel (%p450) target = $region48
        $region47: #{vae_forward.1} parent=11 // pred_region
          _
        $region48: #{vae_forward.1} parent=11 // pred_fallthru
          _
        // Predicated region
        $region49: #{vae_forward.1} parent=11 // pred_check
          %p453 = pneg %p291
        $region50: #{vae_forward.1} parent=11 // pred_check_branch
          %455 = sbr.rel (%p453) target = $region52
        $region51: #{vae_forward.1} parent=11 // pred_region
          _
        $region52: #{vae_forward.1} parent=11 // pred_fallthru
          _
        // Predicated region
        $region53: #{vae_forward.1} parent=11 // pred_check
          %p456 = pneg %p312
        $region54: #{vae_forward.1} parent=11 // pred_check_branch
          %458 = sbr.rel (%p456) target = $region56
        $region55: #{vae_forward.1} parent=11 // pred_region
          _
        $region56: #{vae_forward.1} parent=11 // pred_fallthru
          _
        // Predicated region
        $region57: #{vae_forward.1} parent=11 // pred_check
          %p459 = pneg %p333
        $region58: #{vae_forward.1} parent=11 // pred_check_branch
          %461 = sbr.rel (%p459) target = $region60
        $region59: #{vae_forward.1} parent=11 // pred_region
          _
        $region60: #{vae_forward.1} parent=11 // pred_fallthru
          _
      $region12: #{vae_forward.1} parent=5 // pred_fallthru
        _
      %p462 = scmp.lt.s32.totalorder %s29, 2
      // Predicated region
      $region61: #{vae_forward.1} parent=5 // pred_check
        %p463 = pneg %p462
      $region62: #{vae_forward.1} parent=5 // pred_check_branch
        %465 = sbr.rel (%p463) target = $region64
      $region63: #{vae_forward.1} parent=5 // pred_region
        // Predicated region
        $region65: #{vae_forward.1} parent=63 // pred_check
          %p466 = pneg %p49
        $region66: #{vae_forward.1} parent=63 // pred_check_branch
          %468 = sbr.rel (%p466) target = $region68
        $region67: #{vae_forward.1} parent=63 // pred_region
          %p469 = scmp.lt.s32.totalorder %s29, 1
          %s470 = scalar_select %p469, %s29, 1
          %s471 = smul.addr %s470, 8
          %s472 = smul.addr %s471, 8
          %s473 = scalar_lea.vmem %s0, %s472
        $region68: #{vae_forward.1} parent=63 // pred_fallthru
          _
        // Predicated region
        $region69: #{vae_forward.1} parent=63 // pred_check
          %p474 = pneg %p75
        $region70: #{vae_forward.1} parent=63 // pred_check_branch
          %476 = sbr.rel (%p474) target = $region72
        $region71: #{vae_forward.1} parent=63 // pred_region
          %p477 = scmp.lt.s32.totalorder %s29, 1
          %s478 = scalar_select %p477, %s29, 1
          %s479 = scalar_lea.vmem %s1, %s478
        $region72: #{vae_forward.1} parent=63 // pred_fallthru
          _
      $region64: #{vae_forward.1} parent=5 // pred_fallthru
        _
      %p480 = scmp.le.s32.totalorder 1, %s29
      %p481 = scmp.lt.s32.totalorder %s29, 3
      %p482 = pnand %p480, %p481
      %p483 = pneg %p482
      // Predicated region
      $region73: #{vae_forward.1} parent=5 // pred_check
        _
      $region74: #{vae_forward.1} parent=5 // pred_check_branch
        %485 = sbr.rel (%p482) target = $region76
      $region75: #{vae_forward.1} parent=5 // pred_region
        %s486 = ssub.s32 %s29, 1
        %p487 = scmp.lt.s32.totalorder %s34, 1
        %s488 = scalar_select %p487, %s34, 1
        %s489 = smul.addr %s488, 8
        %s490 = smul.addr %s489, 8
        %s491 = scalar_lea.vmem %s0, %s490
        %p492 = pneg %p55
        %p493 = pneg %p52
        %p494 = scmp.lt.s32.totalorder %s34, 1
        %s495 = scalar_select %p494, %s34, 1
        %s496 = scalar_lea.vmem %s1, %s495
        %p497 = pneg %p81
        %p498 = pneg %p78
        %p499 = pneg %p102
        %p500 = pneg %p99
        %p501 = pneg %p123
        %p502 = pneg %p120
        %p503 = pneg %p144
        %p504 = pneg %p141
        %p505 = pneg %p165
        %p506 = pneg %p162
        %p507 = pneg %p186
        %p508 = pneg %p183
        %p509 = pneg %p207
        %p510 = pneg %p204
        %p511 = pneg %p228
        %p512 = pneg %p225
        %p513 = pneg %p249
        %p514 = pneg %p246
        %p515 = pneg %p270
        %p516 = pneg %p267
        %p517 = pneg %p291
        %p518 = pneg %p288
        %p519 = pneg %p312
        %p520 = pneg %p309
        %p521 = pneg %p333
        %p522 = pneg %p330
        %p523 = pneg %p359
        %p524 = pneg %p356
        %s525 = sand.u32 %s346, 1
        %s526 = scalar_lea.sflag [#allocation8], %s525
        %s527 = sand.u32 %s346, 1
        %s528 = scalar_lea.vmem [#allocation7], %s527
        %p529 = pneg %p385
        %p530 = pneg %p382
        %s531 = sand.u32 %s34, 1
        %s532 = scalar_lea.sflag [#allocation10], %s531
        %s533 = sand.u32 %s372, 1
        %s534 = scalar_lea.vmem [#allocation9], %s533
        %p535 = pneg %p411
        %p536 = pneg %p408
        %s537 = sand.u32 %s34, 1
        %s538 = scalar_lea.sflag [#allocation10], %s537
        %s539 = sand.u32 %s398, 1
        %s540 = smul.addr %s539, 64
        %s541 = scalar_lea.vmem [#allocation11], %s540
        %p542 = scmp.lt.s32.totalorder %s34, 1
        %s543 = scalar_select %p542, %s34, 1
        %s544 = smul.addr %s543, 8
        %s545 = smul.addr %s544, 8
        %s546 = scalar_lea.vmem %s0, %s545
        %p547 = scmp.lt.s32.totalorder %s34, 1
        %s548 = scalar_select %p547, %s34, 1
        %s549 = scalar_lea.vmem %s1, %s548
        %vm550 = vcmask 516096
        %551 = vst.msk [vmem:[#allocation2] sm:$0x1] %vm550, 0.0
        %v552 = vld [vmem:[%s546] sm:$0xff]
        %v553 = vld [vmem:[%s546 + $0x8] sm:$0xff]
        %vm554 = vcmask 130048
        %555 = vst.msk [vmem:[#allocation2 + $0x1] sm:$0xff] %vm554, %v552
        %556 = vst.msk [vmem:[#allocation2 + $0x9] sm:$0xff] %vm554, %v553
        %s557 = scalar_lea.vmem %s546, 16
        %v558 = vld [vmem:[%s557] sm:$0xff]
        %v559 = vld [vmem:[%s557 + $0x8] sm:$0xff]
        %562 = vrot.lane.b32.xlu0 %v558, 16
        %v563 = vpop.permute.xlu0 %562
        %564 = vrot.lane.b32.xlu0 %v559, 16
        %v565 = vpop.permute.xlu0 %564
        %vm568 = vcmask 261248
        %569 = vst.msk [vmem:[#allocation2 + $0x1] sm:$0xff] %vm568, %v563
        %570 = vst.msk [vmem:[#allocation2 + $0x9] sm:$0xff] %vm568, %v565
        %s571 = scalar_lea.vmem %s546, 32
        %v572 = vld [vmem:[%s571] sm:$0xff]
        %v573 = vld [vmem:[%s571 + $0x8] sm:$0xff]
        %576 = vrot.lane.b32.xlu0 %v572, 32
        %v577 = vpop.permute.xlu0 %576
        %578 = vrot.lane.b32.xlu0 %v573, 32
        %v579 = vpop.permute.xlu0 %578
        %vm582 = vcmask 392448
        %583 = vst.msk [vmem:[#allocation2 + $0x1] sm:$0xff] %vm582, %v577
        %584 = vst.msk [vmem:[#allocation2 + $0x9] sm:$0xff] %vm582, %v579
        %s585 = scalar_lea.vmem %s546, 48
        %v586 = vld [vmem:[%s585] sm:$0xff]
        %v587 = vld [vmem:[%s585 + $0x8] sm:$0xff]
        %590 = vrot.lane.b32.xlu0 %v586, 48
        %v591 = vpop.permute.xlu0 %590
        %592 = vrot.lane.b32.xlu0 %v587, 48
        %v593 = vpop.permute.xlu0 %592
        %vm596 = vcmask 523648
        %597 = vst.msk [vmem:[#allocation2 + $0x1] sm:$0xff] %vm596, %v591
        %598 = vst.msk [vmem:[#allocation2 + $0x9] sm:$0xff] %vm596, %v593
        %v599 = vld [vmem:[#allocation2] sm:$0x1]
        %600 = vst.msk [vmem:[#allocation6] sm:$0x1] %vm550, %v599
        %v601 = vld [vmem:[#allocation2 + $0x1] sm:$0x1]
        %603 = vrot.lane.b32.xlu0 %v601, 64
        %v604 = vpop.permute.xlu0 %603
        %vm606 = vcmask 1040896
        %607 = vst.msk [vmem:[#allocation6] sm:$0x1] %vm606, %v604
        %v608 = vld [vmem:[#allocation2 + $0x2] sm:$0x1]
        %609 = vst.msk [vmem:[#allocation6 + $0x8] sm:$0x1] %vm550, %v608
        %v610 = vld [vmem:[#allocation2 + $0x2] sm:$0x1]
        %611 = vst.msk [vmem:[#allocation6 + $0x1] sm:$0x1] %vm550, %v610
        %v612 = vld [vmem:[#allocation2 + $0x3] sm:$0x1]
        %614 = vrot.lane.b32.xlu0 %v612, 64
        %v615 = vpop.permute.xlu0 %614
        %617 = vst.msk [vmem:[#allocation6 + $0x1] sm:$0x1] %vm606, %v615
        %v618 = vld [vmem:[#allocation2 + $0x4] sm:$0x1]
        %619 = vst.msk [vmem:[#allocation6 + $0x9] sm:$0x1] %vm550, %v618
        %v620 = vld [vmem:[#allocation2 + $0x4] sm:$0x1]
        %621 = vst.msk [vmem:[#allocation6 + $0x2] sm:$0x1] %vm550, %v620
        %v622 = vld [vmem:[#allocation2 + $0x5] sm:$0x1]
        %624 = vrot.lane.b32.xlu0 %v622, 64
        %v625 = vpop.permute.xlu0 %624
        %627 = vst.msk [vmem:[#allocation6 + $0x2] sm:$0x1] %vm606, %v625
        %v628 = vld [vmem:[#allocation2 + $0x6] sm:$0x1]
        %629 = vst.msk [vmem:[#allocation6 + $0xa] sm:$0x1] %vm550, %v628
        %v630 = vld [vmem:[#allocation2 + $0x6] sm:$0x1]
        %631 = vst.msk [vmem:[#allocation6 + $0x3] sm:$0x1] %vm550, %v630
        %v632 = vld [vmem:[#allocation2 + $0x7] sm:$0x1]
        %634 = vrot.lane.b32.xlu0 %v632, 64
        %v635 = vpop.permute.xlu0 %634
        %637 = vst.msk [vmem:[#allocation6 + $0x3] sm:$0x1] %vm606, %v635
        %v638 = vld [vmem:[#allocation2 + $0x8] sm:$0x1]
        %639 = vst.msk [vmem:[#allocation6 + $0xb] sm:$0x1] %vm550, %v638
        %v640 = vld [vmem:[#allocation2 + $0x8] sm:$0x1]
        %641 = vst.msk [vmem:[#allocation6 + $0x4] sm:$0x1] %vm550, %v640
        %v642 = vld [vmem:[#allocation2 + $0x9] sm:$0x1]
        %644 = vrot.lane.b32.xlu0 %v642, 64
        %v645 = vpop.permute.xlu0 %644
        %647 = vst.msk [vmem:[#allocation6 + $0x4] sm:$0x1] %vm606, %v645
        %v648 = vld [vmem:[#allocation2 + $0xa] sm:$0x1]
        %649 = vst.msk [vmem:[#allocation6 + $0xc] sm:$0x1] %vm550, %v648
        %v650 = vld [vmem:[#allocation2 + $0xa] sm:$0x1]
        %651 = vst.msk [vmem:[#allocation6 + $0x5] sm:$0x1] %vm550, %v650
        %v652 = vld [vmem:[#allocation2 + $0xb] sm:$0x1]
        %654 = vrot.lane.b32.xlu0 %v652, 64
        %v655 = vpop.permute.xlu0 %654
        %657 = vst.msk [vmem:[#allocation6 + $0x5] sm:$0x1] %vm606, %v655
        %v658 = vld [vmem:[#allocation2 + $0xc] sm:$0x1]
        %659 = vst.msk [vmem:[#allocation6 + $0xd] sm:$0x1] %vm550, %v658
        %v660 = vld [vmem:[#allocation2 + $0xc] sm:$0x1]
        %661 = vst.msk [vmem:[#allocation6 + $0x6] sm:$0x1] %vm550, %v660
        %v662 = vld [vmem:[#allocation2 + $0xd] sm:$0x1]
        %664 = vrot.lane.b32.xlu0 %v662, 64
        %v665 = vpop.permute.xlu0 %664
        %667 = vst.msk [vmem:[#allocation6 + $0x6] sm:$0x1] %vm606, %v665
        %v668 = vld [vmem:[#allocation2 + $0xe] sm:$0x1]
        %669 = vst.msk [vmem:[#allocation6 + $0xe] sm:$0x1] %vm550, %v668
        %v670 = vld [vmem:[#allocation2 + $0xe] sm:$0x1]
        %671 = vst.msk [vmem:[#allocation6 + $0x7] sm:$0x1] %vm550, %v670
        %v672 = vld [vmem:[#allocation2 + $0xf] sm:$0x1]
        %674 = vrot.lane.b32.xlu0 %v672, 64
        %v675 = vpop.permute.xlu0 %674
        %677 = vst.msk [vmem:[#allocation6 + $0x7] sm:$0x1] %vm606, %v675
        %v678 = vld [vmem:[#allocation2 + $0x10] sm:$0x1]
        %679 = vst.msk [vmem:[#allocation6 + $0xf] sm:$0x1] %vm550, %v678
        %v680 = vld [vmem:[#allocation6] sm:$0xff]
        %v681 = vld [vmem:[#allocation6 + $0x8] sm:$0xff]
        %v682 = vld [vmem:[%s2] sm:$0xff]
        %v683 = vld [vmem:[%s2 + $0x8] sm:$0xff]
        %v684 = vld [vmem:[%s2 + $0x10] sm:$0xff]
        %v685 = vld [vmem:[%s2 + $0x18] sm:$0xff]
        %v686 = vld [vmem:[%s2 + $0x20] sm:$0xff]
        %v687 = vld [vmem:[%s2 + $0x28] sm:$0xff]
        %v688 = vld [vmem:[%s2 + $0x30] sm:$0xff]
        %v689 = vld [vmem:[%s2 + $0x38] sm:$0xff]
        %v690 = vld [vmem:[%s2 + $0x40] sm:$0xff]
        %v691 = vld [vmem:[%s2 + $0x48] sm:$0xff]
        %v692 = vld [vmem:[%s2 + $0x50] sm:$0xff]
        %v693 = vld [vmem:[%s2 + $0x58] sm:$0xff]
        %v694 = vld [vmem:[%s2 + $0x60] sm:$0xff]
        %v695 = vld [vmem:[%s2 + $0x68] sm:$0xff]
        %v696 = vld [vmem:[%s2 + $0x70] sm:$0xff]
        %v697 = vld [vmem:[%s2 + $0x78] sm:$0xff]
        %v698 = vld [vmem:[%s2 + $0x80] sm:$0xff]
        %v699 = vld [vmem:[%s2 + $0x88] sm:$0xff]
        %v700 = vld [vmem:[%s2 + $0x90] sm:$0xff]
        %v701 = vld [vmem:[%s2 + $0x98] sm:$0xff]
        %v702 = vld [vmem:[%s2 + $0xa0] sm:$0xff]
        %v703 = vld [vmem:[%s2 + $0xa8] sm:$0xff]
        %v704 = vld [vmem:[%s2 + $0xb0] sm:$0xff]
        %v705 = vld [vmem:[%s2 + $0xb8] sm:$0xff]
        %v706 = vld [vmem:[%s3] sm:$0x1]
        %v708 = vperm.slane %v706, 0
        %vm710 = vcmask 523264
        %v712 = vsel %vm710, %v681, 0
        %714 = vmatpush.msra.mxu0 %v697
        %715 = vmatpush.msra.mxu0 %v696
        %716 = vmatpush.msra.mxu0 %v695
        %717 = vmatpush.msra.mxu0 %v694
        %718 = vmatpush.msra.mxu0 %v693
        %719 = vmatpush.msra.mxu0 %v692
        %720 = vmatpush.msra.mxu0 %v691
        %721 = vmatpush.msra.mxu0 %v690
        %722 = vmatpush.msra.mxu0 %v689
        %723 = vmatpush.msra.mxu0 %v688
        %724 = vmatpush.msra.mxu0 %v687
        %725 = vmatpush.msra.mxu0 %v686
        %726 = vmatpush.msra.mxu0 %v685
        %727 = vmatpush.msra.mxu0 %v684
        %728 = vmatpush.msra.mxu0 %v683
        %729 = vmatpush.msra.mxu0 %v682
        %730 = vmatmul.f32.gmra.mxu0 %v680
        %v731 = vpop.f32.mrf.mxu0
        %v732 = vadd.f32 %v708, %v731
        %733 = vdwg.mxu0
        %734 = vmatpush.msra.mxu0 0.0
        %735 = vmatpush.msra.mxu0 0.0
        %736 = vmatpush.msra.mxu0 0.0
        %737 = vmatpush.msra.mxu0 0.0
        %738 = vmatpush.msra.mxu0 0.0
        %739 = vmatpush.msra.mxu0 0.0
        %740 = vmatpush.msra.mxu0 0.0
        %741 = vmatpush.msra.mxu0 0.0
        %742 = vmatpush.msra.mxu0 %v705
        %743 = vmatpush.msra.mxu0 %v704
        %744 = vmatpush.msra.mxu0 %v703
        %745 = vmatpush.msra.mxu0 %v702
        %746 = vmatpush.msra.mxu0 %v701
        %747 = vmatpush.msra.mxu0 %v700
        %748 = vmatpush.msra.mxu0 %v699
        %749 = vmatpush.msra.mxu0 %v698
        %750 = vmatmul.f32.gmra.mxu0 %v712
        %v751 = vpop.f32.mrf.mxu0
        %v752 = vadd.f32 %v732, %v751
        %753 = vdwg.mxu0
        %v754 = vmax.f32 %v752, 0.0
        %755 = vst.msk [vmem:[#allocation3] sm:$0x1] %vm550, 0.0
        %756 = vst.msk [vmem:[#allocation3 + $0x1] sm:$0xff] %vm710, %v754
        %v757 = vld [vmem:[#allocation3] sm:$0x1]
        %758 = vst.msk [vmem:[#allocation6] sm:$0x1] %vm550, %v757
        %v759 = vld [vmem:[#allocation3 + $0x1] sm:$0x1]
        %761 = vrot.lane.b32.xlu0 %v759, 64
        %v762 = vpop.permute.xlu0 %761
        %764 = vst.msk [vmem:[#allocation6] sm:$0x1] %vm606, %v762
        %v765 = vld [vmem:[#allocation3 + $0x2] sm:$0x1]
        %766 = vst.msk [vmem:[#allocation6 + $0x8] sm:$0x1] %vm550, %v765
        %v767 = vld [vmem:[#allocation3 + $0x2] sm:$0x1]
        %768 = vst.msk [vmem:[#allocation6 + $0x1] sm:$0x1] %vm550, %v767
        %v769 = vld [vmem:[#allocation3 + $0x3] sm:$0x1]
        %771 = vrot.lane.b32.xlu0 %v769, 64
        %v772 = vpop.permute.xlu0 %771
        %774 = vst.msk [vmem:[#allocation6 + $0x1] sm:$0x1] %vm606, %v772
        %v775 = vld [vmem:[#allocation3 + $0x4] sm:$0x1]
        %776 = vst.msk [vmem:[#allocation6 + $0x9] sm:$0x1] %vm550, %v775
        %v777 = vld [vmem:[#allocation3 + $0x4] sm:$0x1]
        %778 = vst.msk [vmem:[#allocation6 + $0x2] sm:$0x1] %vm550, %v777
        %v779 = vld [vmem:[#allocation3 + $0x5] sm:$0x1]
        %781 = vrot.lane.b32.xlu0 %v779, 64
        %v782 = vpop.permute.xlu0 %781
        %784 = vst.msk [vmem:[#allocation6 + $0x2] sm:$0x1] %vm606, %v782
        %v785 = vld [vmem:[#allocation3 + $0x6] sm:$0x1]
        %786 = vst.msk [vmem:[#allocation6 + $0xa] sm:$0x1] %vm550, %v785
        %v787 = vld [vmem:[#allocation3 + $0x6] sm:$0x1]
        %788 = vst.msk [vmem:[#allocation6 + $0x3] sm:$0x1] %vm550, %v787
        %v789 = vld [vmem:[#allocation3 + $0x7] sm:$0x1]
        %791 = vrot.lane.b32.xlu0 %v789, 64
        %v792 = vpop.permute.xlu0 %791
        %794 = vst.msk [vmem:[#allocation6 + $0x3] sm:$0x1] %vm606, %v792
        %v795 = vld [vmem:[#allocation3 + $0x8] sm:$0x1]
        %796 = vst.msk [vmem:[#allocation6 + $0xb] sm:$0x1] %vm550, %v795
        %v797 = vld [vmem:[#allocation6] sm:$0xf]
        %v798 = vld [vmem:[#allocation6 + $0x8] sm:$0xf]
        %v799 = vld [vmem:[%s4] sm:$0xff]
        %v800 = vld [vmem:[%s4 + $0x8] sm:$0xff]
        %v801 = vld [vmem:[%s4 + $0x10] sm:$0xff]
        %v802 = vld [vmem:[%s4 + $0x18] sm:$0xff]
        %v803 = vld [vmem:[%s4 + $0x20] sm:$0xff]
        %v804 = vld [vmem:[%s4 + $0x28] sm:$0xff]
        %v805 = vld [vmem:[%s4 + $0x30] sm:$0xff]
        %v806 = vld [vmem:[%s4 + $0x38] sm:$0xff]
        %v807 = vld [vmem:[%s4 + $0x40] sm:$0xff]
        %v808 = vld [vmem:[%s4 + $0x48] sm:$0xff]
        %v809 = vld [vmem:[%s4 + $0x50] sm:$0xff]
        %v810 = vld [vmem:[%s4 + $0x58] sm:$0xff]
        %v811 = vld [vmem:[%s4 + $0x60] sm:$0xff]
        %v812 = vld [vmem:[%s4 + $0x68] sm:$0xff]
        %v813 = vld [vmem:[%s4 + $0x70] sm:$0xff]
        %v814 = vld [vmem:[%s4 + $0x78] sm:$0xff]
        %v815 = vld [vmem:[%s4 + $0x80] sm:$0xff]
        %v816 = vld [vmem:[%s4 + $0x88] sm:$0xff]
        %v817 = vld [vmem:[%s4 + $0x90] sm:$0xff]
        %v818 = vld [vmem:[%s4 + $0x98] sm:$0xff]
        %v819 = vld [vmem:[%s4 + $0xa0] sm:$0xff]
        %v820 = vld [vmem:[%s4 + $0xa8] sm:$0xff]
        %v821 = vld [vmem:[%s4 + $0xb0] sm:$0xff]
        %v822 = vld [vmem:[%s4 + $0xb8] sm:$0xff]
        %v823 = vld [vmem:[%s5] sm:$0x1]
        %v825 = vperm.slane %v823, 0
        %v828 = vsel %vm710, %v798, 0
        %830 = vmatpush.msra.mxu0 %v814
        %831 = vmatpush.msra.mxu0 %v813
        %832 = vmatpush.msra.mxu0 %v812
        %833 = vmatpush.msra.mxu0 %v811
        %834 = vmatpush.msra.mxu0 %v810
        %835 = vmatpush.msra.mxu0 %v809
        %836 = vmatpush.msra.mxu0 %v808
        %837 = vmatpush.msra.mxu0 %v807
        %838 = vmatpush.msra.mxu0 %v806
        %839 = vmatpush.msra.mxu0 %v805
        %840 = vmatpush.msra.mxu0 %v804
        %841 = vmatpush.msra.mxu0 %v803
        %842 = vmatpush.msra.mxu0 %v802
        %843 = vmatpush.msra.mxu0 %v801
        %844 = vmatpush.msra.mxu0 %v800
        %845 = vmatpush.msra.mxu0 %v799
        %846 = vmatmul.f32.gmra.mxu0 %v797
        %v847 = vpop.f32.mrf.mxu0
        %v848 = vadd.f32 %v825, %v847
        %849 = vdwg.mxu0
        %850 = vmatpush.msra.mxu0 0.0
        %851 = vmatpush.msra.mxu0 0.0
        %852 = vmatpush.msra.mxu0 0.0
        %853 = vmatpush.msra.mxu0 0.0
        %854 = vmatpush.msra.mxu0 0.0
        %855 = vmatpush.msra.mxu0 0.0
        %856 = vmatpush.msra.mxu0 0.0
        %857 = vmatpush.msra.mxu0 0.0
        %858 = vmatpush.msra.mxu0 %v822
        %859 = vmatpush.msra.mxu0 %v821
        %860 = vmatpush.msra.mxu0 %v820
        %861 = vmatpush.msra.mxu0 %v819
        %862 = vmatpush.msra.mxu0 %v818
        %863 = vmatpush.msra.mxu0 %v817
        %864 = vmatpush.msra.mxu0 %v816
        %865 = vmatpush.msra.mxu0 %v815
        %866 = vmatmul.f32.gmra.mxu0 %v828
        %v867 = vpop.f32.mrf.mxu0
        %v868 = vadd.f32 %v848, %v867
        %869 = vdwg.mxu0
        %v870 = vmax.f32 %v868, 0.0
        %v872 = vrot.slane %v870, 1
        %873 = vrot.lane.b32.xlu0 %v872, 64
        %v874 = vpop.permute.xlu0 %873
        %v876 = vrot.slane %v870, 2
        %v878 = vrot.slane %v870, 3
        %879 = vrot.lane.b32.xlu0 %v878, 64
        %v880 = vpop.permute.xlu0 %879
        %v882 = vsel %vm710, %v870, %v874
        %v883 = vsel %vm710, %v876, %v880
        %v884 = vld [vmem:[%s6] sm:$0xff]
        %v885 = vld [vmem:[%s6 + $0x8] sm:$0xff]
        %v886 = vld [vmem:[%s6 + $0x10] sm:$0xff]
        %v887 = vld [vmem:[%s6 + $0x18] sm:$0xff]
        %v888 = vld [vmem:[%s6 + $0x20] sm:$0xff]
        %v889 = vld [vmem:[%s6 + $0x28] sm:$0xff]
        %v890 = vld [vmem:[%s6 + $0x30] sm:$0xff]
        %v891 = vld [vmem:[%s6 + $0x38] sm:$0xff]
        %v892 = vld [vmem:[%s6 + $0x40] sm:$0xff]
        %v893 = vld [vmem:[%s6 + $0x48] sm:$0xff]
        %v894 = vld [vmem:[%s6 + $0x50] sm:$0xff]
        %v895 = vld [vmem:[%s6 + $0x58] sm:$0xff]
        %v896 = vld [vmem:[%s6 + $0x60] sm:$0xff]
        %v897 = vld [vmem:[%s6 + $0x68] sm:$0xff]
        %v898 = vld [vmem:[%s6 + $0x70] sm:$0xff]
        %v899 = vld [vmem:[%s6 + $0x78] sm:$0xff]
        %v900 = vld [vmem:[%s6 + $0x80] sm:$0xff]
        %v901 = vld [vmem:[%s6 + $0x88] sm:$0xff]
        %v902 = vld [vmem:[%s6 + $0x90] sm:$0xff]
        %v903 = vld [vmem:[%s6 + $0x98] sm:$0xff]
        %v904 = vld [vmem:[%s6 + $0xa0] sm:$0xff]
        %v905 = vld [vmem:[%s6 + $0xa8] sm:$0xff]
        %v906 = vld [vmem:[%s6 + $0xb0] sm:$0xff]
        %v907 = vld [vmem:[%s6 + $0xb8] sm:$0xff]
        %v908 = vld [vmem:[%s6 + $0xc0] sm:$0xff]
        %v909 = vld [vmem:[%s6 + $0xc8] sm:$0xff]
        %v910 = vld [vmem:[%s6 + $0xd0] sm:$0xff]
        %v911 = vld [vmem:[%s6 + $0xd8] sm:$0xff]
        %v912 = vld [vmem:[%s6 + $0xe0] sm:$0xff]
        %v913 = vld [vmem:[%s6 + $0xe8] sm:$0xff]
        %v914 = vld [vmem:[%s6 + $0xf0] sm:$0xff]
        %v915 = vld [vmem:[%s6 + $0xf8] sm:$0xff]
        %v916 = vld [vmem:[%s7] sm:$0x1]
        %917 = vmatpush.msra.mxu0 %v899
        %918 = vmatpush.msra.mxu0 %v898
        %919 = vmatpush.msra.mxu0 %v897
        %920 = vmatpush.msra.mxu0 %v896
        %921 = vmatpush.msra.mxu0 %v895
        %922 = vmatpush.msra.mxu0 %v894
        %923 = vmatpush.msra.mxu0 %v893
        %924 = vmatpush.msra.mxu0 %v892
        %925 = vmatpush.msra.mxu0 %v891
        %926 = vmatpush.msra.mxu0 %v890
        %927 = vmatpush.msra.mxu0 %v889
        %928 = vmatpush.msra.mxu0 %v888
        %929 = vmatpush.msra.mxu0 %v887
        %930 = vmatpush.msra.mxu0 %v886
        %931 = vmatpush.msra.mxu0 %v885
        %932 = vmatpush.msra.mxu0 %v884
        %933 = vmatmul.f32.gmra.mxu0 %v882
        %v934 = vpop.f32.mrf.mxu0
        %v935 = vadd.f32 %v916, %v934
        %936 = vdwg.mxu0
        %937 = vmatpush.msra.mxu0 %v915
        %938 = vmatpush.msra.mxu0 %v914
        %939 = vmatpush.msra.mxu0 %v913
        %940 = vmatpush.msra.mxu0 %v912
        %941 = vmatpush.msra.mxu0 %v911
        %942 = vmatpush.msra.mxu0 %v910
        %943 = vmatpush.msra.mxu0 %v909
        %944 = vmatpush.msra.mxu0 %v908
        %945 = vmatpush.msra.mxu0 %v907
        %946 = vmatpush.msra.mxu0 %v906
        %947 = vmatpush.msra.mxu0 %v905
        %948 = vmatpush.msra.mxu0 %v904
        %949 = vmatpush.msra.mxu0 %v903
        %950 = vmatpush.msra.mxu0 %v902
        %951 = vmatpush.msra.mxu0 %v901
        %952 = vmatpush.msra.mxu0 %v900
        %953 = vmatmul.f32.gmra.mxu0 %v883
        %v954 = vpop.f32.mrf.mxu0
        %v955 = vadd.f32 %v935, %v954
        %956 = vdwg.mxu0
        %v957 = vmul.f32 %v955, 0.5
        %v958 = vmul.f32 %v957, 1.442695
        %v959 = vpow.pop %v958
        %v960 = vld [vmem:[%s549] sm:$0x1]
        %v962 = vperm.slane %v960, 0
        %963 = vrot.lane.b32.xlu0 %v962, 32
        %v964 = vpop.permute.xlu0 %963
        %v966 = vmul.f32 %v959, %v964
        %968 = vrot.lane.b32.xlu0 %v966, 96
        %v969 = vpop.permute.xlu0 %968
        %v971 = vadd.f32 %v955, %v969
        %v972 = vld [vmem:[%s8] sm:$0xff]
        %v973 = vld [vmem:[%s8 + $0x8] sm:$0xff]
        %v974 = vld [vmem:[%s8 + $0x10] sm:$0xff]
        %v975 = vld [vmem:[%s8 + $0x18] sm:$0xff]
        %v976 = vld [vmem:[%s8 + $0x20] sm:$0xff]
        %v977 = vld [vmem:[%s8 + $0x28] sm:$0xff]
        %v978 = vld [vmem:[%s8 + $0x30] sm:$0xff]
        %v979 = vld [vmem:[%s8 + $0x38] sm:$0xff]
        %v980 = vld [vmem:[%s9] sm:$0x3]
        %v982 = vperm.slane %v980, 0
        %v983 = vperm.slane %v980, 1
        %vm986 = vcmask 261120
        %v988 = vsel %vm986, %v971, 0
        %990 = vmatpush.msra.mxu0 0.0
        %991 = vmatpush.msra.mxu0 0.0
        %992 = vmatpush.msra.mxu0 0.0
        %993 = vmatpush.msra.mxu0 0.0
        %994 = vmatpush.msra.mxu0 0.0
        %995 = vmatpush.msra.mxu0 0.0
        %996 = vmatpush.msra.mxu0 0.0
        %997 = vmatpush.msra.mxu0 0.0
        %998 = vmatpush.msra.mxu0 0.0
        %999 = vmatpush.msra.mxu0 0.0
        %1000 = vmatpush.msra.mxu0 0.0
        %1001 = vmatpush.msra.mxu0 0.0
        %1002 = vmatpush.msra.mxu0 %v978
        %1003 = vmatpush.msra.mxu0 %v976
        %1004 = vmatpush.msra.mxu0 %v974
        %1005 = vmatpush.msra.mxu0 %v972
        %1006 = vmatmul.f32.gmra.mxu0 %v988
        %v1007 = vpop.f32.mrf.mxu0
        %v1008 = vadd.f32 %v982, %v1007
        %1009 = vdwg.mxu0
        %1010 = vmatpush.msra.mxu0 0.0
        %1011 = vmatpush.msra.mxu0 0.0
        %1012 = vmatpush.msra.mxu0 0.0
        %1013 = vmatpush.msra.mxu0 0.0
        %1014 = vmatpush.msra.mxu0 0.0
        %1015 = vmatpush.msra.mxu0 0.0
        %1016 = vmatpush.msra.mxu0 0.0
        %1017 = vmatpush.msra.mxu0 0.0
        %1018 = vmatpush.msra.mxu0 0.0
        %1019 = vmatpush.msra.mxu0 0.0
        %1020 = vmatpush.msra.mxu0 0.0
        %1021 = vmatpush.msra.mxu0 0.0
        %1022 = vmatpush.msra.mxu0 %v979
        %1023 = vmatpush.msra.mxu0 %v977
        %1024 = vmatpush.msra.mxu0 %v975
        %1025 = vmatpush.msra.mxu0 %v973
        %1026 = vmatmul.f32.gmra.mxu0 %v988
        %v1027 = vpop.f32.mrf.mxu0
        %v1028 = vadd.f32 %v983, %v1027
        %1029 = vdwg.mxu0
        %v1030 = vmax.f32 %v1008, 0.0
        %v1031 = vmax.f32 %v1028, 0.0
        %vm1032 = vcmask 253952
        %1033 = vst.msk [vmem:[%s528] sm:$0x1] %vm1032, %v955
        %1035 = vrot.lane.b32.xlu0 %v955, 96
        %v1036 = vpop.permute.xlu0 %1035
        %1038 = vst.msk [vmem:[%s534] sm:$0x1] %vm1032, %v1036
        %1039 = vst.msk [vmem:[#allocation4] sm:$0x1] %vm550, 0.0
        %1040 = vst.msk [vmem:[#allocation4 + $0x1] sm:$0x1] %vm550, %v1030
        %1042 = vrot.lane.b32.xlu0 %v1030, 64
        %v1043 = vpop.permute.xlu0 %1042
        %1045 = vst.msk [vmem:[#allocation4 + $0x2] sm:$0x1] %vm550, %v1043
        %1046 = vst.msk [vmem:[#allocation4 + $0x3] sm:$0x1] %vm550, %v1031
        %1048 = vrot.lane.b32.xlu0 %v1031, 64
        %v1049 = vpop.permute.xlu0 %1048
        %1051 = vst.msk [vmem:[#allocation4 + $0x4] sm:$0x1] %vm550, %v1049
        %v1052 = vld [vmem:[#allocation4] sm:$0x1]
        %1053 = vst.msk [vmem:[#allocation6] sm:$0x1] %vm550, %v1052
        %v1054 = vld [vmem:[#allocation4 + $0x1] sm:$0x1]
        %1056 = vrot.lane.b32.xlu0 %v1054, 64
        %v1057 = vpop.permute.xlu0 %1056
        %1059 = vst.msk [vmem:[#allocation6] sm:$0x1] %vm606, %v1057
        %v1060 = vld [vmem:[#allocation4 + $0x1] sm:$0x1]
        %1061 = vst.msk [vmem:[#allocation6 + $0x8] sm:$0x1] %vm550, %v1060
        %v1062 = vld [vmem:[#allocation4 + $0x1] sm:$0x1]
        %1063 = vst.msk [vmem:[#allocation6 + $0x1] sm:$0x1] %vm550, %v1062
        %v1064 = vld [vmem:[#allocation4 + $0x1] sm:$0x1]
        %1066 = vrot.lane.b32.xlu0 %v1064, 64
        %v1067 = vpop.permute.xlu0 %1066
        %1069 = vst.msk [vmem:[#allocation6 + $0x1] sm:$0x1] %vm606, %v1067
        %v1070 = vld [vmem:[#allocation4 + $0x2] sm:$0x1]
        %1071 = vst.msk [vmem:[#allocation6 + $0x9] sm:$0x1] %vm550, %v1070
        %v1072 = vld [vmem:[#allocation4 + $0x1] sm:$0x1]
        %1073 = vst.msk [vmem:[#allocation6 + $0x2] sm:$0x1] %vm550, %v1072
        %v1074 = vld [vmem:[#allocation4 + $0x2] sm:$0x1]
        %1076 = vrot.lane.b32.xlu0 %v1074, 64
        %v1077 = vpop.permute.xlu0 %1076
        %1079 = vst.msk [vmem:[#allocation6 + $0x2] sm:$0x1] %vm606, %v1077
        %v1080 = vld [vmem:[#allocation4 + $0x2] sm:$0x1]
        %1081 = vst.msk [vmem:[#allocation6 + $0xa] sm:$0x1] %vm550, %v1080
        %v1082 = vld [vmem:[#allocation4 + $0x2] sm:$0x1]
        %1083 = vst.msk [vmem:[#allocation6 + $0x3] sm:$0x1] %vm550, %v1082
        %v1084 = vld [vmem:[#allocation4 + $0x2] sm:$0x1]
        %1086 = vrot.lane.b32.xlu0 %v1084, 64
        %v1087 = vpop.permute.xlu0 %1086
        %1089 = vst.msk [vmem:[#allocation6 + $0x3] sm:$0x1] %vm606, %v1087
        %v1090 = vld [vmem:[#allocation4 + $0x3] sm:$0x1]
        %1091 = vst.msk [vmem:[#allocation6 + $0xb] sm:$0x1] %vm550, %v1090
        %v1092 = vld [vmem:[#allocation4 + $0x2] sm:$0x1]
        %1093 = vst.msk [vmem:[#allocation6 + $0x4] sm:$0x1] %vm550, %v1092
        %v1094 = vld [vmem:[#allocation4 + $0x3] sm:$0x1]
        %1096 = vrot.lane.b32.xlu0 %v1094, 64
        %v1097 = vpop.permute.xlu0 %1096
        %1099 = vst.msk [vmem:[#allocation6 + $0x4] sm:$0x1] %vm606, %v1097
        %v1100 = vld [vmem:[#allocation4 + $0x3] sm:$0x1]
        %1101 = vst.msk [vmem:[#allocation6 + $0xc] sm:$0x1] %vm550, %v1100
        %v1102 = vld [vmem:[#allocation4 + $0x3] sm:$0x1]
        %1103 = vst.msk [vmem:[#allocation6 + $0x5] sm:$0x1] %vm550, %v1102
        %v1104 = vld [vmem:[#allocation4 + $0x3] sm:$0x1]
        %1106 = vrot.lane.b32.xlu0 %v1104, 64
        %v1107 = vpop.permute.xlu0 %1106
        %1109 = vst.msk [vmem:[#allocation6 + $0x5] sm:$0x1] %vm606, %v1107
        %v1110 = vld [vmem:[#allocation4 + $0x4] sm:$0x1]
        %1111 = vst.msk [vmem:[#allocation6 + $0xd] sm:$0x1] %vm550, %v1110
        %v1112 = vld [vmem:[#allocation4 + $0x3] sm:$0x1]
        %1113 = vst.msk [vmem:[#allocation6 + $0x6] sm:$0x1] %vm550, %v1112
        %v1114 = vld [vmem:[#allocation4 + $0x4] sm:$0x1]
        %1116 = vrot.lane.b32.xlu0 %v1114, 64
        %v1117 = vpop.permute.xlu0 %1116
        %1119 = vst.msk [vmem:[#allocation6 + $0x6] sm:$0x1] %vm606, %v1117
        %v1120 = vld [vmem:[#allocation4 + $0x4] sm:$0x1]
        %1121 = vst.msk [vmem:[#allocation6 + $0xe] sm:$0x1] %vm550, %v1120
        %v1122 = vld [vmem:[#allocation4 + $0x4] sm:$0x1]
        %1123 = vst.msk [vmem:[#allocation6 + $0x7] sm:$0x1] %vm550, %v1122
        %v1124 = vld [vmem:[#allocation4 + $0x4] sm:$0x1]
        %1126 = vrot.lane.b32.xlu0 %v1124, 64
        %v1127 = vpop.permute.xlu0 %1126
        %1129 = vst.msk [vmem:[#allocation6 + $0x7] sm:$0x1] %vm606, %v1127
        %v1130 = vld [vmem:[#allocation4] sm:$0x1]
        %1131 = vst.msk [vmem:[#allocation6 + $0xf] sm:$0x1] %vm550, %v1130
        %v1132 = vld [vmem:[#allocation6] sm:$0xff]
        %v1133 = vld [vmem:[#allocation6 + $0x8] sm:$0xff]
        %v1134 = vld [vmem:[%s10] sm:$0xff]
        %v1135 = vld [vmem:[%s10 + $0x8] sm:$0xff]
        %v1136 = vld [vmem:[%s10 + $0x10] sm:$0xff]
        %v1137 = vld [vmem:[%s10 + $0x18] sm:$0xff]
        %v1138 = vld [vmem:[%s10 + $0x20] sm:$0xff]
        %v1139 = vld [vmem:[%s10 + $0x28] sm:$0xff]
        %v1140 = vld [vmem:[%s10 + $0x30] sm:$0xff]
        %v1141 = vld [vmem:[%s10 + $0x38] sm:$0xff]
        %v1142 = vld [vmem:[%s10 + $0x40] sm:$0xff]
        %v1143 = vld [vmem:[%s10 + $0x48] sm:$0xff]
        %v1144 = vld [vmem:[%s10 + $0x50] sm:$0xff]
        %v1145 = vld [vmem:[%s10 + $0x58] sm:$0xff]
        %v1146 = vld [vmem:[%s10 + $0x60] sm:$0xff]
        %v1147 = vld [vmem:[%s10 + $0x68] sm:$0xff]
        %v1148 = vld [vmem:[%s10 + $0x70] sm:$0xff]
        %v1149 = vld [vmem:[%s10 + $0x78] sm:$0xff]
        %v1150 = vld [vmem:[%s10 + $0x80] sm:$0xff]
        %v1151 = vld [vmem:[%s10 + $0x88] sm:$0xff]
        %v1152 = vld [vmem:[%s10 + $0x90] sm:$0xff]
        %v1153 = vld [vmem:[%s10 + $0x98] sm:$0xff]
        %v1154 = vld [vmem:[%s10 + $0xa0] sm:$0xff]
        %v1155 = vld [vmem:[%s10 + $0xa8] sm:$0xff]
        %v1156 = vld [vmem:[%s10 + $0xb0] sm:$0xff]
        %v1157 = vld [vmem:[%s10 + $0xb8] sm:$0xff]
        %v1158 = vld [vmem:[%s11] sm:$0x1]
        %v1160 = vperm.slane %v1158, 0
        %v1163 = vsel %vm710, %v1133, 0
        %1165 = vmatpush.msra.mxu0 %v1149
        %1166 = vmatpush.msra.mxu0 %v1148
        %1167 = vmatpush.msra.mxu0 %v1147
        %1168 = vmatpush.msra.mxu0 %v1146
        %1169 = vmatpush.msra.mxu0 %v1145
        %1170 = vmatpush.msra.mxu0 %v1144
        %1171 = vmatpush.msra.mxu0 %v1143
        %1172 = vmatpush.msra.mxu0 %v1142
        %1173 = vmatpush.msra.mxu0 %v1141
        %1174 = vmatpush.msra.mxu0 %v1140
        %1175 = vmatpush.msra.mxu0 %v1139
        %1176 = vmatpush.msra.mxu0 %v1138
        %1177 = vmatpush.msra.mxu0 %v1137
        %1178 = vmatpush.msra.mxu0 %v1136
        %1179 = vmatpush.msra.mxu0 %v1135
        %1180 = vmatpush.msra.mxu0 %v1134
        %1181 = vmatmul.f32.gmra.mxu0 %v1132
        %v1182 = vpop.f32.mrf.mxu0
        %v1183 = vadd.f32 %v1160, %v1182
        %1184 = vdwg.mxu0
        %1185 = vmatpush.msra.mxu0 0.0
        %1186 = vmatpush.msra.mxu0 0.0
        %1187 = vmatpush.msra.mxu0 0.0
        %1188 = vmatpush.msra.mxu0 0.0
        %1189 = vmatpush.msra.mxu0 0.0
        %1190 = vmatpush.msra.mxu0 0.0
        %1191 = vmatpush.msra.mxu0 0.0
        %1192 = vmatpush.msra.mxu0 0.0
        %1193 = vmatpush.msra.mxu0 %v1157
        %1194 = vmatpush.msra.mxu0 %v1156
        %1195 = vmatpush.msra.mxu0 %v1155
        %1196 = vmatpush.msra.mxu0 %v1154
        %1197 = vmatpush.msra.mxu0 %v1153
        %1198 = vmatpush.msra.mxu0 %v1152
        %1199 = vmatpush.msra.mxu0 %v1151
        %1200 = vmatpush.msra.mxu0 %v1150
        %1201 = vmatmul.f32.gmra.mxu0 %v1163
        %v1202 = vpop.f32.mrf.mxu0
        %v1203 = vadd.f32 %v1183, %v1202
        %1204 = vdwg.mxu0
        %v1205 = vmax.f32 %v1203, 0.0
        %1206 = vst.msk [vmem:[#allocation5] sm:$0x1] %vm550, 0.0
        %1207 = vst.msk [vmem:[#allocation5 + $0x1] sm:$0xff] %vm710, %v1205
        %v1208 = vld [vmem:[#allocation5] sm:$0x1]
        %1209 = vst.msk [vmem:[#allocation6] sm:$0x1] %vm550, %v1208
        %v1210 = vld [vmem:[#allocation5 + $0x1] sm:$0x1]
        %1212 = vrot.lane.b32.xlu0 %v1210, 64
        %v1213 = vpop.permute.xlu0 %1212
        %1215 = vst.msk [vmem:[#allocation6] sm:$0x1] %vm606, %v1213
        %v1216 = vld [vmem:[#allocation5 + $0x1] sm:$0x1]
        %1217 = vst.msk [vmem:[#allocation6 + $0x8] sm:$0x1] %vm550, %v1216
        %v1218 = vld [vmem:[#allocation5 + $0x1] sm:$0x1]
        %1219 = vst.msk [vmem:[#allocation6 + $0x1] sm:$0x1] %vm550, %v1218
        %v1220 = vld [vmem:[#allocation5 + $0x1] sm:$0x1]
        %1222 = vrot.lane.b32.xlu0 %v1220, 64
        %v1223 = vpop.permute.xlu0 %1222
        %1225 = vst.msk [vmem:[#allocation6 + $0x1] sm:$0x1] %vm606, %v1223
        %v1226 = vld [vmem:[#allocation5 + $0x2] sm:$0x1]
        %1227 = vst.msk [vmem:[#allocation6 + $0x9] sm:$0x1] %vm550, %v1226
        %v1228 = vld [vmem:[#allocation5 + $0x1] sm:$0x1]
        %1229 = vst.msk [vmem:[#allocation6 + $0x2] sm:$0x1] %vm550, %v1228
        %v1230 = vld [vmem:[#allocation5 + $0x2] sm:$0x1]
        %1232 = vrot.lane.b32.xlu0 %v1230, 64
        %v1233 = vpop.permute.xlu0 %1232
        %1235 = vst.msk [vmem:[#allocation6 + $0x2] sm:$0x1] %vm606, %v1233
        %v1236 = vld [vmem:[#allocation5 + $0x2] sm:$0x1]
        %1237 = vst.msk [vmem:[#allocation6 + $0xa] sm:$0x1] %vm550, %v1236
        %v1238 = vld [vmem:[#allocation5 + $0x2] sm:$0x1]
        %1239 = vst.msk [vmem:[#allocation6 + $0x3] sm:$0x1] %vm550, %v1238
        %v1240 = vld [vmem:[#allocation5 + $0x2] sm:$0x1]
        %1242 = vrot.lane.b32.xlu0 %v1240, 64
        %v1243 = vpop.permute.xlu0 %1242
        %1245 = vst.msk [vmem:[#allocation6 + $0x3] sm:$0x1] %vm606, %v1243
        %v1246 = vld [vmem:[#allocation5 + $0x3] sm:$0x1]
        %1247 = vst.msk [vmem:[#allocation6 + $0xb] sm:$0x1] %vm550, %v1246
        %v1248 = vld [vmem:[#allocation5 + $0x2] sm:$0x1]
        %1249 = vst.msk [vmem:[#allocation6 + $0x4] sm:$0x1] %vm550, %v1248
        %v1250 = vld [vmem:[#allocation5 + $0x3] sm:$0x1]
        %1252 = vrot.lane.b32.xlu0 %v1250, 64
        %v1253 = vpop.permute.xlu0 %1252
        %1255 = vst.msk [vmem:[#allocation6 + $0x4] sm:$0x1] %vm606, %v1253
        %v1256 = vld [vmem:[#allocation5 + $0x3] sm:$0x1]
        %1257 = vst.msk [vmem:[#allocation6 + $0xc] sm:$0x1] %vm550, %v1256
        %v1258 = vld [vmem:[#allocation5 + $0x3] sm:$0x1]
        %1259 = vst.msk [vmem:[#allocation6 + $0x5] sm:$0x1] %vm550, %v1258
        %v1260 = vld [vmem:[#allocation5 + $0x3] sm:$0x1]
        %1262 = vrot.lane.b32.xlu0 %v1260, 64
        %v1263 = vpop.permute.xlu0 %1262
        %1265 = vst.msk [vmem:[#allocation6 + $0x5] sm:$0x1] %vm606, %v1263
        %v1266 = vld [vmem:[#allocation5 + $0x4] sm:$0x1]
        %1267 = vst.msk [vmem:[#allocation6 + $0xd] sm:$0x1] %vm550, %v1266
        %v1268 = vld [vmem:[#allocation5 + $0x3] sm:$0x1]
        %1269 = vst.msk [vmem:[#allocation6 + $0x6] sm:$0x1] %vm550, %v1268
        %v1270 = vld [vmem:[#allocation5 + $0x4] sm:$0x1]
        %1272 = vrot.lane.b32.xlu0 %v1270, 64
        %v1273 = vpop.permute.xlu0 %1272
        %1275 = vst.msk [vmem:[#allocation6 + $0x6] sm:$0x1] %vm606, %v1273
        %v1276 = vld [vmem:[#allocation5 + $0x4] sm:$0x1]
        %1277 = vst.msk [vmem:[#allocation6 + $0xe] sm:$0x1] %vm550, %v1276
        %v1278 = vld [vmem:[#allocation5 + $0x4] sm:$0x1]
        %1279 = vst.msk [vmem:[#allocation6 + $0x7] sm:$0x1] %vm550, %v1278
        %v1280 = vld [vmem:[#allocation5 + $0x4] sm:$0x1]
        %1282 = vrot.lane.b32.xlu0 %v1280, 64
        %v1283 = vpop.permute.xlu0 %1282
        %1285 = vst.msk [vmem:[#allocation6 + $0x7] sm:$0x1] %vm606, %v1283
        %v1286 = vld [vmem:[#allocation5 + $0x5] sm:$0x1]
        %1287 = vst.msk [vmem:[#allocation6 + $0xf] sm:$0x1] %vm550, %v1286
        %v1288 = vld [vmem:[#allocation5 + $0x4] sm:$0x1]
        %1289 = vst.msk [vmem:[#allocation6 + $0x10] sm:$0x1] %vm550, %v1288
        %v1290 = vld [vmem:[#allocation5 + $0x5] sm:$0x1]
        %1292 = vrot.lane.b32.xlu0 %v1290, 64
        %v1293 = vpop.permute.xlu0 %1292
        %1295 = vst.msk [vmem:[#allocation6 + $0x10] sm:$0x1] %vm606, %v1293
        %v1296 = vld [vmem:[#allocation5 + $0x5] sm:$0x1]
        %1297 = vst.msk [vmem:[#allocation6 + $0x18] sm:$0x1] %vm550, %v1296
        %v1298 = vld [vmem:[#allocation5 + $0x5] sm:$0x1]
        %1299 = vst.msk [vmem:[#allocation6 + $0x11] sm:$0x1] %vm550, %v1298
        %v1300 = vld [vmem:[#allocation5 + $0x5] sm:$0x1]
        %1302 = vrot.lane.b32.xlu0 %v1300, 64
        %v1303 = vpop.permute.xlu0 %1302
        %1305 = vst.msk [vmem:[#allocation6 + $0x11] sm:$0x1] %vm606, %v1303
        %v1306 = vld [vmem:[#allocation5 + $0x6] sm:$0x1]
        %1307 = vst.msk [vmem:[#allocation6 + $0x19] sm:$0x1] %vm550, %v1306
        %v1308 = vld [vmem:[#allocation5 + $0x5] sm:$0x1]
        %1309 = vst.msk [vmem:[#allocation6 + $0x12] sm:$0x1] %vm550, %v1308
        %v1310 = vld [vmem:[#allocation5 + $0x6] sm:$0x1]
        %1312 = vrot.lane.b32.xlu0 %v1310, 64
        %v1313 = vpop.permute.xlu0 %1312
        %1315 = vst.msk [vmem:[#allocation6 + $0x12] sm:$0x1] %vm606, %v1313
        %v1316 = vld [vmem:[#allocation5 + $0x6] sm:$0x1]
        %1317 = vst.msk [vmem:[#allocation6 + $0x1a] sm:$0x1] %vm550, %v1316
        %v1318 = vld [vmem:[#allocation5 + $0x6] sm:$0x1]
        %1319 = vst.msk [vmem:[#allocation6 + $0x13] sm:$0x1] %vm550, %v1318
        %v1320 = vld [vmem:[#allocation5 + $0x6] sm:$0x1]
        %1322 = vrot.lane.b32.xlu0 %v1320, 64
        %v1323 = vpop.permute.xlu0 %1322
        %1325 = vst.msk [vmem:[#allocation6 + $0x13] sm:$0x1] %vm606, %v1323
        %v1326 = vld [vmem:[#allocation5 + $0x7] sm:$0x1]
        %1327 = vst.msk [vmem:[#allocation6 + $0x1b] sm:$0x1] %vm550, %v1326
        %v1328 = vld [vmem:[#allocation5 + $0x6] sm:$0x1]
        %1329 = vst.msk [vmem:[#allocation6 + $0x14] sm:$0x1] %vm550, %v1328
        %v1330 = vld [vmem:[#allocation5 + $0x7] sm:$0x1]
        %1332 = vrot.lane.b32.xlu0 %v1330, 64
        %v1333 = vpop.permute.xlu0 %1332
        %1335 = vst.msk [vmem:[#allocation6 + $0x14] sm:$0x1] %vm606, %v1333
        %v1336 = vld [vmem:[#allocation5 + $0x7] sm:$0x1]
        %1337 = vst.msk [vmem:[#allocation6 + $0x1c] sm:$0x1] %vm550, %v1336
        %v1338 = vld [vmem:[#allocation5 + $0x7] sm:$0x1]
        %1339 = vst.msk [vmem:[#allocation6 + $0x15] sm:$0x1] %vm550, %v1338
        %v1340 = vld [vmem:[#allocation5 + $0x7] sm:$0x1]
        %1342 = vrot.lane.b32.xlu0 %v1340, 64
        %v1343 = vpop.permute.xlu0 %1342
        %1345 = vst.msk [vmem:[#allocation6 + $0x15] sm:$0x1] %vm606, %v1343
        %v1346 = vld [vmem:[#allocation5 + $0x8] sm:$0x1]
        %1347 = vst.msk [vmem:[#allocation6 + $0x1d] sm:$0x1] %vm550, %v1346
        %v1348 = vld [vmem:[#allocation5 + $0x7] sm:$0x1]
        %1349 = vst.msk [vmem:[#allocation6 + $0x16] sm:$0x1] %vm550, %v1348
        %v1350 = vld [vmem:[#allocation5 + $0x8] sm:$0x1]
        %1352 = vrot.lane.b32.xlu0 %v1350, 64
        %v1353 = vpop.permute.xlu0 %1352
        %1355 = vst.msk [vmem:[#allocation6 + $0x16] sm:$0x1] %vm606, %v1353
        %v1356 = vld [vmem:[#allocation5 + $0x8] sm:$0x1]
        %1357 = vst.msk [vmem:[#allocation6 + $0x1e] sm:$0x1] %vm550, %v1356
        %v1358 = vld [vmem:[#allocation5 + $0x8] sm:$0x1]
        %1359 = vst.msk [vmem:[#allocation6 + $0x17] sm:$0x1] %vm550, %v1358
        %v1360 = vld [vmem:[#allocation5 + $0x8] sm:$0x1]
        %1362 = vrot.lane.b32.xlu0 %v1360, 64
        %v1363 = vpop.permute.xlu0 %1362
        %1365 = vst.msk [vmem:[#allocation6 + $0x17] sm:$0x1] %vm606, %v1363
        %v1366 = vld [vmem:[#allocation5] sm:$0x1]
        %1367 = vst.msk [vmem:[#allocation6 + $0x1f] sm:$0x1] %vm550, %v1366
        %v1368 = vld [vmem:[#allocation6] sm:$0xff]
        %v1369 = vld [vmem:[#allocation6 + $0x8] sm:$0xff]
        %v1370 = vld [vmem:[#allocation6 + $0x10] sm:$0xff]
        %v1371 = vld [vmem:[#allocation6 + $0x18] sm:$0xff]
        %v1372 = vld [vmem:[%s12] sm:$0xff]
        %v1373 = vld [vmem:[%s12 + $0x8] sm:$0xff]
        %v1374 = vld [vmem:[%s12 + $0x10] sm:$0xff]
        %v1375 = vld [vmem:[%s12 + $0x18] sm:$0xff]
        %v1376 = vld [vmem:[%s12 + $0x20] sm:$0xff]
        %v1377 = vld [vmem:[%s12 + $0x28] sm:$0xff]
        %v1378 = vld [vmem:[%s12 + $0x30] sm:$0xff]
        %v1379 = vld [vmem:[%s12 + $0x38] sm:$0xff]
        %v1380 = vld [vmem:[%s12 + $0x40] sm:$0xff]
        %v1381 = vld [vmem:[%s12 + $0x48] sm:$0xff]
        %v1382 = vld [vmem:[%s12 + $0x50] sm:$0xff]
        %v1383 = vld [vmem:[%s12 + $0x58] sm:$0xff]
        %v1384 = vld [vmem:[%s12 + $0x60] sm:$0xff]
        %v1385 = vld [vmem:[%s12 + $0x68] sm:$0xff]
        %v1386 = vld [vmem:[%s12 + $0x70] sm:$0xff]
        %v1387 = vld [vmem:[%s12 + $0x78] sm:$0xff]
        %v1388 = vld [vmem:[%s12 + $0x80] sm:$0xff]
        %v1389 = vld [vmem:[%s12 + $0x88] sm:$0xff]
        %v1390 = vld [vmem:[%s12 + $0x90] sm:$0xff]
        %v1391 = vld [vmem:[%s12 + $0x98] sm:$0xff]
        %v1392 = vld [vmem:[%s12 + $0xa0] sm:$0xff]
        %v1393 = vld [vmem:[%s12 + $0xa8] sm:$0xff]
        %v1394 = vld [vmem:[%s12 + $0xb0] sm:$0xff]
        %v1395 = vld [vmem:[%s12 + $0xb8] sm:$0xff]
        %v1396 = vld [vmem:[%s13] sm:$0x1]
        %v1398 = vperm.slane %v1396, 0
        %v1401 = vsel %vm710, %v1369, 0
        %v1404 = vsel %vm710, %v1371, 0
        %1406 = vmatpush.msra.mxu0 %v1387
        %1407 = vmatpush.msra.mxu0 %v1386
        %1408 = vmatpush.msra.mxu0 %v1385
        %1409 = vmatpush.msra.mxu0 %v1384
        %1410 = vmatpush.msra.mxu0 %v1383
        %1411 = vmatpush.msra.mxu0 %v1382
        %1412 = vmatpush.msra.mxu0 %v1381
        %1413 = vmatpush.msra.mxu0 %v1380
        %1414 = vmatpush.msra.mxu0 %v1379
        %1415 = vmatpush.msra.mxu0 %v1378
        %1416 = vmatpush.msra.mxu0 %v1377
        %1417 = vmatpush.msra.mxu0 %v1376
        %1418 = vmatpush.msra.mxu0 %v1375
        %1419 = vmatpush.msra.mxu0 %v1374
        %1420 = vmatpush.msra.mxu0 %v1373
        %1421 = vmatpush.msra.mxu0 %v1372
        %1422 = vmatmul.f32.gmra.mxu0 %v1368
        %v1423 = vpop.f32.mrf.mxu0
        %v1424 = vadd.f32 %v1398, %v1423
        %1425 = vmatmul.f32.gmra.mxu0 %v1370
        %v1426 = vpop.f32.mrf.mxu0
        %v1427 = vadd.f32 %v1398, %v1426
        %1428 = vdwg.mxu0
        %1429 = vmatpush.msra.mxu0 0.0
        %1430 = vmatpush.msra.mxu0 0.0
        %1431 = vmatpush.msra.mxu0 0.0
        %1432 = vmatpush.msra.mxu0 0.0
        %1433 = vmatpush.msra.mxu0 0.0
        %1434 = vmatpush.msra.mxu0 0.0
        %1435 = vmatpush.msra.mxu0 0.0
        %1436 = vmatpush.msra.mxu0 0.0
        %1437 = vmatpush.msra.mxu0 %v1395
        %1438 = vmatpush.msra.mxu0 %v1394
        %1439 = vmatpush.msra.mxu0 %v1393
        %1440 = vmatpush.msra.mxu0 %v1392
        %1441 = vmatpush.msra.mxu0 %v1391
        %1442 = vmatpush.msra.mxu0 %v1390
        %1443 = vmatpush.msra.mxu0 %v1389
        %1444 = vmatpush.msra.mxu0 %v1388
        %1445 = vmatmul.f32.gmra.mxu0 %v1401
        %v1446 = vpop.f32.mrf.mxu0
        %v1447 = vadd.f32 %v1424, %v1446
        %1448 = vmatmul.f32.gmra.mxu0 %v1404
        %v1449 = vpop.f32.mrf.mxu0
        %v1450 = vadd.f32 %v1427, %v1449
        %1451 = vdwg.mxu0
        %v1452 = vmul.f32 %v1447, 0.5
        %v1453 = vmul.f32 %v1450, 0.5
        %v1454 = vtanh.pop %v1452
        %v1455 = vtanh.pop %v1453
        %v1456 = vadd.f32 %v1454, 1.0
        %v1457 = vadd.f32 %v1455, 1.0
        %v1458 = vmul.f32 %v1456, 0.5
        %v1459 = vmul.f32 %v1457, 0.5
        %1460 = vst.msk [vmem:[%s541] sm:$0xff] %vm554, %v1458
        %1461 = vst.msk [vmem:[%s541 + $0x8] sm:$0xff] %vm554, %v1459
        %1464 = vrot.lane.b32.xlu0 %v1458, 112
        %v1465 = vpop.permute.xlu0 %1464
        %1466 = vrot.lane.b32.xlu0 %v1459, 112
        %v1467 = vpop.permute.xlu0 %1466
        %s1470 = scalar_lea.vmem %s541, 16 [#allocation11]
        %1471 = vst.msk [vmem:[%s1470] sm:$0xff] %vm554, %v1465
        %1472 = vst.msk [vmem:[%s1470 + $0x8] sm:$0xff] %vm554, %v1467
        %1473 = vrot.lane.b32.xlu0 %v1458, 96
        %v1474 = vpop.permute.xlu0 %1473
        %1475 = vrot.lane.b32.xlu0 %v1459, 96
        %v1476 = vpop.permute.xlu0 %1475
        %s1479 = scalar_lea.vmem %s541, 32 [#allocation11]
        %1480 = vst.msk [vmem:[%s1479] sm:$0xff] %vm554, %v1474
        %1481 = vst.msk [vmem:[%s1479 + $0x8] sm:$0xff] %vm554, %v1476
        %1482 = vrot.lane.b32.xlu0 %v1458, 80
        %v1483 = vpop.permute.xlu0 %1482
        %1484 = vrot.lane.b32.xlu0 %v1459, 80
        %v1485 = vpop.permute.xlu0 %1484
        %s1488 = scalar_lea.vmem %s541, 48 [#allocation11]
        %1489 = vst.msk [vmem:[%s1488] sm:$0xff] %vm554, %v1483
        %1490 = vst.msk [vmem:[%s1488 + $0x8] sm:$0xff] %vm554, %v1485
        %s1491 = sand.u32 %s346, 1
        %s1492 = scalar_lea.sflag [#allocation8], %s1491
        %s1493 = sand.u32 %s346, 1
        %s1494 = scalar_lea.vmem [#allocation7], %s1493
        %s1495 = sand.u32 %s34, 1
        %s1496 = scalar_lea.sflag [#allocation10], %s1495
        %s1497 = sand.u32 %s372, 1
        %s1498 = scalar_lea.vmem [#allocation9], %s1497
        %s1499 = sand.u32 %s34, 1
        %s1500 = scalar_lea.sflag [#allocation10], %s1499
        %s1501 = sand.u32 %s398, 1
        %s1502 = smul.addr %s1501, 64
        %s1503 = scalar_lea.vmem [#allocation11], %s1502
        // Predicated region
        $region77: #{vae_forward.1} parent=75 // pred_check
          %p1504 = pneg %p356
        $region78: #{vae_forward.1} parent=75 // pred_check_branch
          %1506 = sbr.rel (%p1504) target = $region80
        $region79: #{vae_forward.1} parent=75 // pred_region
          %1508 = vsyncadd %s1492, 0
          %s1509 = scalar_lea.hbm %s14, %s34
          %s1511 = sshll.u32 %s1494, 4
          %s1512 = int_to_ptr.vmem [resolvable:$true] %s1511
          %s1513 = sshll.u32 %s1509, 4
          %s1514 = int_to_ptr.hbm [resolvable:$true] %s1513
          %1516 = dma.vmem_to_hbm [thread:$0]  %s1512, 16, %s1514, %s1492
        $region80: #{vae_forward.1} parent=75 // pred_fallthru
          _
        // Predicated region
        $region81: #{vae_forward.1} parent=75 // pred_check
          %p1517 = pneg %p382
        $region82: #{vae_forward.1} parent=75 // pred_check_branch
          %1519 = sbr.rel (%p1517) target = $region84
        $region83: #{vae_forward.1} parent=75 // pred_region
          %1521 = vsyncadd %s1496, 0
          %s1522 = scalar_lea.hbm %s15, %s34
          %s1524 = sshll.u32 %s1498, 4
          %s1525 = int_to_ptr.vmem [resolvable:$true] %s1524
          %s1526 = sshll.u32 %s1522, 4
          %s1527 = int_to_ptr.hbm [resolvable:$true] %s1526
          %1529 = dma.vmem_to_hbm [thread:$0]  %s1525, 16, %s1527, %s1496
        $region84: #{vae_forward.1} parent=75 // pred_fallthru
          _
        // Predicated region
        $region85: #{vae_forward.1} parent=75 // pred_check
          %p1530 = pneg %p408
        $region86: #{vae_forward.1} parent=75 // pred_check_branch
          %1532 = sbr.rel (%p1530) target = $region88
        $region87: #{vae_forward.1} parent=75 // pred_region
          %1534 = vsyncadd %s1500, 0
          %s1535 = smul.addr %s34, 8
          %s1536 = smul.addr %s1535, 8
          %s1537 = scalar_lea.hbm %s16, %s1536
          %s1538 = sshll.u32 %s1503, 4
          %s1539 = int_to_ptr.vmem [resolvable:$true] %s1538
          %s1540 = sshll.u32 %s1537, 4
          %s1541 = int_to_ptr.hbm [resolvable:$true] %s1540
          %1546 = dma.vmem_to_hbm [thread:$0]  %s1539, 1024, %s1541, %s1500, 128, 128, 8
        $region88: #{vae_forward.1} parent=75 // pred_fallthru
          _
      $region76: #{vae_forward.1} parent=5 // pred_fallthru
        _
      %p1547 = scmp.le.s32.totalorder 2, %s29
      // Predicated region
      $region89: #{vae_forward.1} parent=5 // pred_check
        %p1548 = pneg %p1547
      $region90: #{vae_forward.1} parent=5 // pred_check_branch
        %1550 = sbr.rel (%p1548) target = $region92
      $region91: #{vae_forward.1} parent=5 // pred_region
        %s1551 = ssub.s32 %s29, 2
        // Predicated region
        $region93: #{vae_forward.1} parent=91 // pred_check
          %p1552 = pneg %p362
        $region94: #{vae_forward.1} parent=91 // pred_check_branch
          %1554 = sbr.rel (%p1552) target = $region96
        $region95: #{vae_forward.1} parent=91 // pred_region
          %s1555 = sand.u32 %s347, 1
          %s1556 = scalar_lea.sflag [#allocation8], %s1555
          %s1557 = sand.u32 %s347, 1
          %s1558 = scalar_lea.vmem [#allocation7], %s1557
          %1560 = dma.done %s1556, 16
        $region96: #{vae_forward.1} parent=91 // pred_fallthru
          _
        // Predicated region
        $region97: #{vae_forward.1} parent=91 // pred_check
          %p1561 = pneg %p388
        $region98: #{vae_forward.1} parent=91 // pred_check_branch
          %1563 = sbr.rel (%p1561) target = $region100
        $region99: #{vae_forward.1} parent=91 // pred_region
          %s1564 = sand.u32 %s35, 1
          %s1565 = scalar_lea.sflag [#allocation10], %s1564
          %s1566 = sand.u32 %s373, 1
          %s1567 = scalar_lea.vmem [#allocation9], %s1566
          %1569 = dma.done %s1565, 16
        $region100: #{vae_forward.1} parent=91 // pred_fallthru
          _
        // Predicated region
        $region101: #{vae_forward.1} parent=91 // pred_check
          %p1570 = pneg %p414
        $region102: #{vae_forward.1} parent=91 // pred_check_branch
          %1572 = sbr.rel (%p1570) target = $region104
        $region103: #{vae_forward.1} parent=91 // pred_region
          %s1573 = sand.u32 %s35, 1
          %s1574 = scalar_lea.sflag [#allocation10], %s1573
          %s1575 = sand.u32 %s399, 1
          %s1576 = smul.addr %s1575, 64
          %s1577 = scalar_lea.vmem [#allocation11], %s1576
          %1579 = dma.done %s1574, 1024
        $region104: #{vae_forward.1} parent=91 // pred_fallthru
          _
      $region92: #{vae_forward.1} parent=5 // pred_fallthru
        _
    $region6: #{vae_forward.1} parent=1 // loop_footer
      %s33 = sadd.s32 1, %s29
    $region7: #{vae_forward.1} parent=1 // loop_footer_branch
      %28 = sbr.rel target = $region3
    $region8: #{vae_forward.1} parent=1 // loop_exit
      _
    %1580 = vsyncpa [#allocation8], 1
    %s1581 = scalar_lea.sflag [#allocation8], 1
    %1582 = vsyncpa %s1581, 1
    %1583 = vsyncpa [#allocation10], 1
    %s1584 = scalar_lea.sflag [#allocation10], 1
    %1585 = vsyncpa %s1584, 1

</llo_original>
